<compile_context>
chip_gen: v5e
topology: v5e:2x2
jax: 0.10.0
libtpu: 0.0.40
codegen_flags: <defaults>
</compile_context>

<pallas_src>
import functools

import jax
import jax.numpy as jnp
from jax.experimental import pallas as pl
from jax.experimental.pallas import tpu as pltpu


def _round_up(v, m):
    return ((v + m - 1) // m) * m


# ----------------------------------------------------------------------------
# Fused CNNConvBlock kernel (B images per grid step)
# ----------------------------------------------------------------------------
def _block_kernel(xp_ref, w1_ref, b1_ref, w2_ref, b2_ref, o_ref, y1_ref,
                  *, wp, m1, m2):
    # xp_ref: (B, R_in, C)  bf16 -- per-image row-major flattened (H+2, W+2, C)
    #                              zero-halo padded image + trailing zero rows.
    # w1_ref: (9*C, C)      bf16,  b1_ref: (1, C)    f32
    # w2_ref: (9*C, Cout)   bf16,  b2_ref: (1, Cout) f32
    # o_ref : (B, M2, Cout) f32  -- conv2 output at flat index oy2*Wp + ox2
    #                              (wrapper extracts the valid (H-2, W-2) box).
    # y1_ref: (B, M1, C)    bf16 -- conv1 output staged in VMEM, never hits HBM.
    b = xp_ref.shape[0]
    c = xp_ref.shape[-1]
    cout = o_ref.shape[-1]
    offs = [dy * wp + dx for dy in range(3) for dx in range(3)]

    # ---- conv1 (pad=1): 9 taps folded into K -> ONE MXU matmul, K = 9*C ----
    # Each tap is a static row-offset window of the flat buffer; C is a full
    # lane multiple (128) so the concat is free vreg placement.
    cols1 = [xp_ref[:, o:o + m1, :].reshape(b * m1, c) for o in offs]
    p1 = jnp.concatenate(cols1, axis=-1)                        # (B*M1, 9C) bf16
    acc1 = jnp.dot(p1, w1_ref[...], preferred_element_type=jnp.float32)
    # Residual: center tap (dy=1, dx=1) IS the original pixel x[oy, ox].
    # (Taken from the bf16-cast input: one extra rounding vs. torch, accepted
    #  under the bf16 DMA policy.)
    identity = cols1[4].astype(jnp.float32)
    y1 = jnp.maximum(acc1 + b1_ref[...] + identity, 0.0)        # f32 epilogue
    # No zero-fill of y1_ref needed: every row conv2 reads is written here, and
    # valid conv2 outputs only read valid conv1 outputs (same Wp row stride).
    y1_ref[...] = y1.reshape(b, m1, c).astype(y1_ref.dtype)

    # ---- conv2 (pad=0): same folded-K single matmul ----
    cols2 = [y1_ref[:, o:o + m2, :].reshape(b * m2, c) for o in offs]
    p2 = jnp.concatenate(cols2, axis=-1)                        # (B*M2, 9C) bf16
    acc2 = jnp.dot(p2, w2_ref[...], preferred_element_type=jnp.float32)
    o_ref[...] = jnp.maximum(acc2 + b2_ref[...], 0.0).reshape(b, m2, cout)


# ----------------------------------------------------------------------------
# Wrapper: layout glue (NCHW<->flat NHWC rows, halo pad, lane pad, weight fold)
# ----------------------------------------------------------------------------
def cnn_conv_block(x_nchw, w1, b1, w2, b2, *, images_per_step=None):
    """Fused CNNConvBlock forward.

    x_nchw: (N, Cin, H, W) f32 (PyTorch layout)
    w1: (3, 3, Cin, Cin) HWIO, b1: (Cin,)
    w2: (3, 3, Cin, Cout) HWIO, b2: (Cout,)
    Returns (N, Cout, H-2, W-2) f32, matching the torch module.
    """
    n, cin, h, w = x_nchw.shape
    cout = w2.shape[-1]
    assert h >= 3 and w >= 3
    ho, wo = h - 2, w - 2

    # Lane-pad channels to full lane width (multiples of 128).  Zero channels
    # are mathematically inert through both convs, bias, residual and ReLU.
    cin_p = _round_up(max(cin, 1), 128)
    cout_p = _round_up(max(cout, 1), 128)

    x = jnp.transpose(x_nchw, (0, 2, 3, 1)).astype(jnp.float32)       # NHWC
    if cin_p != cin:
        pc = cin_p - cin
        x = jnp.pad(x, ((0, 0), (0, 0), (0, 0), (0, pc)))
        w1 = jnp.pad(w1, ((0, 0), (0, 0), (0, pc), (0, pc)))
        b1 = jnp.pad(b1, ((0, pc),))
        w2 = jnp.pad(w2, ((0, 0), (0, 0), (0, pc), (0, 0)))
    if cout_p != cout:
        po = cout_p - cout
        w2 = jnp.pad(w2, ((0, 0), (0, 0), (0, 0), (0, po)))
        b2 = jnp.pad(b2, ((0, po),))

    # Flat row-major spatial layout; row stride Wp = W + 2 (conv1 halo).
    wp, hp = w + 2, h + 2
    m2 = _round_up(ho * wp, 8)            # conv2 output rows per image
    m1 = _round_up(m2 + 2 * wp + 2, 8)    # conv1 output rows (covers conv2 taps)
    r_in = _round_up(m1 + 2 * wp + 2, 8)  # xp rows (covers conv1 taps) >= Hp*Wp

    xp = jnp.pad(x, ((0, 0), (1, 1), (1, 1), (0, 0)))                 # zero halo
    xp = xp.reshape(n, hp * wp, cin_p)
    xp = jnp.pad(xp, ((0, 0), (0, r_in - hp * wp), (0, 0)))           # overreach pad
    xp = xp.astype(jnp.bfloat16)

    # Fold the 3x3 taps into the contraction dim; ordering (dy, dx, ci) matches
    # the kernel's tap enumeration.
    w1f = w1.reshape(9 * cin_p, cin_p).astype(jnp.bfloat16)
    w2f = w2.reshape(9 * cin_p, cout_p).astype(jnp.bfloat16)
    b1r = b1.reshape(1, cin_p).astype(jnp.float32)
    b2r = b2.reshape(1, cout_p).astype(jnp.float32)

    # Images per grid step: fold several images into the matmul M to amortize
    # per-step pipeline overhead, but keep >= 2 grid steps so both v7x
    # TensorCores get work, and cap B so the step fits VMEM on v5e/v7x.
    if images_per_step is None:
        images_per_step = 1
        for cand in (4, 2):
            if n % cand == 0 and n // cand >= 2:
                images_per_step = cand
                break
    bsz = images_per_step
    assert n % bsz == 0
    grid = (n // bsz,)

    kernel = functools.partial(_block_kernel, wp=wp, m1=m1, m2=m2)
    out = pl.pallas_call(
        kernel,
        out_shape=jax.ShapeDtypeStruct((n, m2, cout_p), jnp.float32),
        grid=grid,
        in_specs=[
            pl.BlockSpec((bsz, r_in, cin_p), lambda i: (i, 0, 0)),
            pl.BlockSpec((9 * cin_p, cin_p), lambda i: (0, 0)),
            pl.BlockSpec((1, cin_p), lambda i: (0, 0)),
            pl.BlockSpec((9 * cin_p, cout_p), lambda i: (0, 0)),
            pl.BlockSpec((1, cout_p), lambda i: (0, 0)),
        ],
        out_specs=pl.BlockSpec((bsz, m2, cout_p), lambda i: (i, 0, 0)),
        scratch_shapes=[pltpu.VMEM((bsz, m1, cin_p), jnp.bfloat16)],
        compiler_params=pltpu.CompilerParams(
            dimension_semantics=("parallel",),
            vmem_limit_bytes=48 * 1024 * 1024,   # < v7x 64 MiB physical
        ),
    )(xp, w1f, b1r, w2f, b2r)

    # Extract the valid conv2 region (flat index oy2*Wp + ox2) and restore NCHW.
    out = out[:, : ho * wp, :cout].reshape(n, ho, wp, cout)[:, :, :wo, :]
    return jnp.transpose(out, (0, 3, 1, 2))


# ----------------------------------------------------------------------------
# Pure-JAX reference (full f32) for a correctness cross-check
# ----------------------------------------------------------------------------
def _ref_block(x_nchw, w1, b1, w2, b2):
    dn = ("NHWC", "HWIO", "NHWC")
    x = jnp.transpose(x_nchw, (0, 2, 3, 1))
    y = jax.lax.conv_general_dilated(
        x, w1, (1, 1), ((1, 1), (1, 1)), dimension_numbers=dn,
        precision=jax.lax.Precision.HIGHEST) + b1
    y = jnp.maximum(y + x, 0.0)
    y = jax.lax.conv_general_dilated(
        y, w2, (1, 1), ((0, 0), (0, 0)), dimension_numbers=dn,
        precision=jax.lax.Precision.HIGHEST) + b2
    y = jnp.maximum(y, 0.0)
    return jnp.transpose(y, (0, 3, 1, 2))


if __name__ == "__main__":
    key = jax.random.PRNGKey(0)
    k1, k2, k3, k4, kx = jax.random.split(key, 5)

    # Shapes consistent with the module (block3 of the KMNIST net: 64 -> 128).
    N, CIN, COUT, H, W = 2, 64, 128, 16, 16
    std = (2.0 / (9 * CIN)) ** 0.5
    w1 = jax.random.normal(k1, (3, 3, CIN, CIN), jnp.float32) * std
    b1 = jax.random.normal(k2, (CIN,), jnp.float32) * 0.1
    w2 = jax.random.normal(k3, (3, 3, CIN, COUT), jnp.float32) * std
    b2 = jax.random.normal(k4, (COUT,), jnp.float32) * 0.1
    x = jax.random.normal(kx, (N, CIN, H, W), jnp.float32)

    fwd = jax.jit(cnn_conv_block)
    out = fwd(x, w1, b1, w2, b2)
    jax.block_until_ready(out)

    assert out.shape == (N, COUT, H - 2, W - 2), out.shape
    assert out.dtype == jnp.float32
    assert bool(jnp.all(jnp.isfinite(out)))

    ref = _ref_block(x, w1, b1, w2, b2)
    # bf16 inputs/weights with f32 accumulation -> expected max abs error ~2e-2.
    max_err = float(jnp.max(jnp.abs(out - ref)))
    assert bool(jnp.allclose(out, ref, atol=3e-2, rtol=3e-2)), max_err

    print("KERNEL_OK")
</pallas_src>

<mosaic_0001>
module attributes {stable_mosaic.version = 11 : i64} {
  func.func @_block_kernel(%arg0: i32, %arg1: memref<1x336x128xbf16, #tpu.memory_space<vmem>>, %arg2: memref<1152x128xbf16, #tpu.memory_space<vmem>>, %arg3: memref<1x128xf32, #tpu.memory_space<vmem>>, %arg4: memref<1152x128xbf16, #tpu.memory_space<vmem>>, %arg5: memref<1x128xf32, #tpu.memory_space<vmem>>, %arg6: memref<1x256x128xf32, #tpu.memory_space<vmem>>, %arg7: memref<1x296x128xbf16, #tpu.memory_space<vmem>>) attributes {dimension_semantics = [#tpu.dimension_semantics<parallel>], iteration_bounds = array<i64: 2>, scalar_prefetch = 0 : i64, scratch_operands = 1 : i64, tpu.core_type = #tpu.core_type<tc>, window_params = [{transform_indices = @transform_0, window_bounds = array<i64: 1, 336, 128>}, {pipeline_mode = #tpu.pipeline_mode<synchronous>, transform_indices = @transform_1, window_bounds = array<i64: 1152, 128>}, {pipeline_mode = #tpu.pipeline_mode<synchronous>, transform_indices = @transform_2, window_bounds = array<i64: 1, 128>}, {pipeline_mode = #tpu.pipeline_mode<synchronous>, transform_indices = @transform_3, window_bounds = array<i64: 1152, 128>}, {pipeline_mode = #tpu.pipeline_mode<synchronous>, transform_indices = @transform_4, window_bounds = array<i64: 1, 128>}, {transform_indices = @transform_5, window_bounds = array<i64: 1, 256, 128>}]} {
    %c0 = arith.constant 0 : index
    %c0_0 = arith.constant 0 : index
    %c0_1 = arith.constant 0 : index
    %0 = vector.load %arg1[%c0, %c0_0, %c0_1] : memref<1x336x128xbf16, #tpu.memory_space<vmem>>, vector<1x296x128xbf16>
    %1 = vector.shape_cast %0 : vector<1x296x128xbf16> to vector<296x128xbf16>
    %c0_2 = arith.constant 0 : index
    %c1 = arith.constant 1 : index
    %c0_3 = arith.constant 0 : index
    %2 = vector.load %arg1[%c0_2, %c1, %c0_3] : memref<1x336x128xbf16, #tpu.memory_space<vmem>>, vector<1x296x128xbf16>
    %3 = vector.shape_cast %2 : vector<1x296x128xbf16> to vector<296x128xbf16>
    %c0_4 = arith.constant 0 : index
    %c2 = arith.constant 2 : index
    %c0_5 = arith.constant 0 : index
    %4 = vector.load %arg1[%c0_4, %c2, %c0_5] : memref<1x336x128xbf16, #tpu.memory_space<vmem>>, vector<1x296x128xbf16>
    %5 = vector.shape_cast %4 : vector<1x296x128xbf16> to vector<296x128xbf16>
    %c0_6 = arith.constant 0 : index
    %c18 = arith.constant 18 : index
    %c0_7 = arith.constant 0 : index
    %6 = vector.load %arg1[%c0_6, %c18, %c0_7] : memref<1x336x128xbf16, #tpu.memory_space<vmem>>, vector<1x296x128xbf16>
    %7 = vector.shape_cast %6 : vector<1x296x128xbf16> to vector<296x128xbf16>
    %c0_8 = arith.constant 0 : index
    %c19 = arith.constant 19 : index
    %c0_9 = arith.constant 0 : index
    %8 = vector.load %arg1[%c0_8, %c19, %c0_9] : memref<1x336x128xbf16, #tpu.memory_space<vmem>>, vector<1x296x128xbf16>
    %9 = vector.shape_cast %8 : vector<1x296x128xbf16> to vector<296x128xbf16>
    %c0_10 = arith.constant 0 : index
    %c20 = arith.constant 20 : index
    %c0_11 = arith.constant 0 : index
    %10 = vector.load %arg1[%c0_10, %c20, %c0_11] : memref<1x336x128xbf16, #tpu.memory_space<vmem>>, vector<1x296x128xbf16>
    %11 = vector.shape_cast %10 : vector<1x296x128xbf16> to vector<296x128xbf16>
    %c0_12 = arith.constant 0 : index
    %c36 = arith.constant 36 : index
    %c0_13 = arith.constant 0 : index
    %12 = vector.load %arg1[%c0_12, %c36, %c0_13] : memref<1x336x128xbf16, #tpu.memory_space<vmem>>, vector<1x296x128xbf16>
    %13 = vector.shape_cast %12 : vector<1x296x128xbf16> to vector<296x128xbf16>
    %c0_14 = arith.constant 0 : index
    %c37 = arith.constant 37 : index
    %c0_15 = arith.constant 0 : index
    %14 = vector.load %arg1[%c0_14, %c37, %c0_15] : memref<1x336x128xbf16, #tpu.memory_space<vmem>>, vector<1x296x128xbf16>
    %15 = vector.shape_cast %14 : vector<1x296x128xbf16> to vector<296x128xbf16>
    %c0_16 = arith.constant 0 : index
    %c38 = arith.constant 38 : index
    %c0_17 = arith.constant 0 : index
    %16 = vector.load %arg1[%c0_16, %c38, %c0_17] : memref<1x336x128xbf16, #tpu.memory_space<vmem>>, vector<1x296x128xbf16>
    %17 = vector.shape_cast %16 : vector<1x296x128xbf16> to vector<296x128xbf16>
    %18 = tpu.concatenate %1, %3, %5, %7, %9, %11, %13, %15, %17 in 1 : vector<296x128xbf16>, vector<296x128xbf16>, vector<296x128xbf16>, vector<296x128xbf16>, vector<296x128xbf16>, vector<296x128xbf16>, vector<296x128xbf16>, vector<296x128xbf16>, vector<296x128xbf16> -> vector<296x1152xbf16>
    %c0_18 = arith.constant 0 : index
    %c0_19 = arith.constant 0 : index
    %19 = vector.load %arg2[%c0_18, %c0_19] : memref<1152x128xbf16, #tpu.memory_space<vmem>>, vector<1152x128xbf16>
    %cst = arith.constant dense<0.000000e+00> : vector<296x128xf32>
    %20 = tpu.matmul %18, %19, %cst {dimension_numbers = #tpu.dot_dimension_numbers<[1], [0], [0], [1], [0, 0, 1, 1], [], []>} : vector<296x1152xbf16>, vector<1152x128xbf16>, vector<296x128xf32> -> vector<296x128xf32>
    %21 = arith.extf %9 : vector<296x128xbf16> to vector<296x128xf32>
    %c0_20 = arith.constant 0 : index
    %c0_21 = arith.constant 0 : index
    %22 = vector.load %arg3[%c0_20, %c0_21] : memref<1x128xf32, #tpu.memory_space<vmem>>, vector<1x128xf32>
    %23 = vector.broadcast %22 : vector<1x128xf32> to vector<296x128xf32>
    %24 = arith.addf %20, %23 : vector<296x128xf32>
    %25 = arith.addf %24, %21 : vector<296x128xf32>
    %cst_22 = arith.constant 0.000000e+00 : f32
    %26 = vector.broadcast %cst_22 : f32 to vector<296x128xf32>
    %27 = arith.maximumf %25, %26 : vector<296x128xf32>
    %28 = vector.shape_cast %27 : vector<296x128xf32> to vector<1x296x128xf32>
    %29 = arith.truncf %28 : vector<1x296x128xf32> to vector<1x296x128xbf16>
    %c0_23 = arith.constant 0 : index
    %c0_24 = arith.constant 0 : index
    %c0_25 = arith.constant 0 : index
    %30 = vector.load %arg7[%c0_23, %c0_24, %c0_25] : memref<1x296x128xbf16, #tpu.memory_space<vmem>>, vector<1x296x128xbf16>
    tpu.vector_store %arg7[%c0_23, %c0_24, %c0_25], %29 {strides = array<i32>} : memref<1x296x128xbf16, #tpu.memory_space<vmem>>, vector<1x296x128xbf16>,
    %c0_26 = arith.constant 0 : index
    %c0_27 = arith.constant 0 : index
    %c0_28 = arith.constant 0 : index
    %31 = vector.load %arg7[%c0_26, %c0_27, %c0_28] : memref<1x296x128xbf16, #tpu.memory_space<vmem>>, vector<1x256x128xbf16>
    %32 = vector.shape_cast %31 : vector<1x256x128xbf16> to vector<256x128xbf16>
    %c0_29 = arith.constant 0 : index
    %c1_30 = arith.constant 1 : index
    %c0_31 = arith.constant 0 : index
    %33 = vector.load %arg7[%c0_29, %c1_30, %c0_31] : memref<1x296x128xbf16, #tpu.memory_space<vmem>>, vector<1x256x128xbf16>
    %34 = vector.shape_cast %33 : vector<1x256x128xbf16> to vector<256x128xbf16>
    %c0_32 = arith.constant 0 : index
    %c2_33 = arith.constant 2 : index
    %c0_34 = arith.constant 0 : index
    %35 = vector.load %arg7[%c0_32, %c2_33, %c0_34] : memref<1x296x128xbf16, #tpu.memory_space<vmem>>, vector<1x256x128xbf16>
    %36 = vector.shape_cast %35 : vector<1x256x128xbf16> to vector<256x128xbf16>
    %c0_35 = arith.constant 0 : index
    %c18_36 = arith.constant 18 : index
    %c0_37 = arith.constant 0 : index
    %37 = vector.load %arg7[%c0_35, %c18_36, %c0_37] : memref<1x296x128xbf16, #tpu.memory_space<vmem>>, vector<1x256x128xbf16>
    %38 = vector.shape_cast %37 : vector<1x256x128xbf16> to vector<256x128xbf16>
    %c0_38 = arith.constant 0 : index
    %c19_39 = arith.constant 19 : index
    %c0_40 = arith.constant 0 : index
    %39 = vector.load %arg7[%c0_38, %c19_39, %c0_40] : memref<1x296x128xbf16, #tpu.memory_space<vmem>>, vector<1x256x128xbf16>
    %40 = vector.shape_cast %39 : vector<1x256x128xbf16> to vector<256x128xbf16>
    %c0_41 = arith.constant 0 : index
    %c20_42 = arith.constant 20 : index
    %c0_43 = arith.constant 0 : index
    %41 = vector.load %arg7[%c0_41, %c20_42, %c0_43] : memref<1x296x128xbf16, #tpu.memory_space<vmem>>, vector<1x256x128xbf16>
    %42 = vector.shape_cast %41 : vector<1x256x128xbf16> to vector<256x128xbf16>
    %c0_44 = arith.constant 0 : index
    %c36_45 = arith.constant 36 : index
    %c0_46 = arith.constant 0 : index
    %43 = vector.load %arg7[%c0_44, %c36_45, %c0_46] : memref<1x296x128xbf16, #tpu.memory_space<vmem>>, vector<1x256x128xbf16>
    %44 = vector.shape_cast %43 : vector<1x256x128xbf16> to vector<256x128xbf16>
    %c0_47 = arith.constant 0 : index
    %c37_48 = arith.constant 37 : index
    %c0_49 = arith.constant 0 : index
    %45 = vector.load %arg7[%c0_47, %c37_48, %c0_49] : memref<1x296x128xbf16, #tpu.memory_space<vmem>>, vector<1x256x128xbf16>
    %46 = vector.shape_cast %45 : vector<1x256x128xbf16> to vector<256x128xbf16>
    %c0_50 = arith.constant 0 : index
    %c38_51 = arith.constant 38 : index
    %c0_52 = arith.constant 0 : index
    %47 = vector.load %arg7[%c0_50, %c38_51, %c0_52] : memref<1x296x128xbf16, #tpu.memory_space<vmem>>, vector<1x256x128xbf16>
    %48 = vector.shape_cast %47 : vector<1x256x128xbf16> to vector<256x128xbf16>
    %49 = tpu.concatenate %32, %34, %36, %38, %40, %42, %44, %46, %48 in 1 : vector<256x128xbf16>, vector<256x128xbf16>, vector<256x128xbf16>, vector<256x128xbf16>, vector<256x128xbf16>, vector<256x128xbf16>, vector<256x128xbf16>, vector<256x128xbf16>, vector<256x128xbf16> -> vector<256x1152xbf16>
    %c0_53 = arith.constant 0 : index
    %c0_54 = arith.constant 0 : index
    %50 = vector.load %arg4[%c0_53, %c0_54] : memref<1152x128xbf16, #tpu.memory_space<vmem>>, vector<1152x128xbf16>
    %cst_55 = arith.constant dense<0.000000e+00> : vector<256x128xf32>
    %51 = tpu.matmul %49, %50, %cst_55 {dimension_numbers = #tpu.dot_dimension_numbers<[1], [0], [0], [1], [0, 0, 1, 1], [], []>} : vector<256x1152xbf16>, vector<1152x128xbf16>, vector<256x128xf32> -> vector<256x128xf32>
    %c0_56 = arith.constant 0 : index
    %c0_57 = arith.constant 0 : index
    %52 = vector.load %arg5[%c0_56, %c0_57] : memref<1x128xf32, #tpu.memory_space<vmem>>, vector<1x128xf32>
    %53 = vector.broadcast %52 : vector<1x128xf32> to vector<256x128xf32>
    %54 = arith.addf %51, %53 : vector<256x128xf32>
    %cst_58 = arith.constant 0.000000e+00 : f32
    %55 = vector.broadcast %cst_58 : f32 to vector<256x128xf32>
    %56 = arith.maximumf %54, %55 : vector<256x128xf32>
    %57 = vector.shape_cast %56 : vector<256x128xf32> to vector<1x256x128xf32>
    %c0_59 = arith.constant 0 : index
    %c0_60 = arith.constant 0 : index
    %c0_61 = arith.constant 0 : index
    %58 = vector.load %arg6[%c0_59, %c0_60, %c0_61] : memref<1x256x128xf32, #tpu.memory_space<vmem>>, vector<1x256x128xf32>
    tpu.vector_store %arg6[%c0_59, %c0_60, %c0_61], %57 {strides = array<i32>} : memref<1x256x128xf32, #tpu.memory_space<vmem>>, vector<1x256x128xf32>,
    return
  }
  func.func @transform_0(%arg0: i32) -> (i32, i32, i32) {
    %c0_i32 = arith.constant 0 : i32
    %c0_i32_0 = arith.constant 0 : i32
    %c0_i32_1 = arith.constant 0 : i32
    return %arg0, %c0_i32, %c0_i32_0 : i32, i32, i32
  }
  func.func @transform_1(%arg0: i32) -> (i32, i32) {
    %c0_i32 = arith.constant 0 : i32
    %c0_i32_0 = arith.constant 0 : i32
    %c0_i32_1 = arith.constant 0 : i32
    return %c0_i32, %c0_i32_0 : i32, i32
  }
  func.func @transform_2(%arg0: i32) -> (i32, i32) {
    %c0_i32 = arith.constant 0 : i32
    %c0_i32_0 = arith.constant 0 : i32
    %c0_i32_1 = arith.constant 0 : i32
    return %c0_i32, %c0_i32_0 : i32, i32
  }
  func.func @transform_3(%arg0: i32) -> (i32, i32) {
    %c0_i32 = arith.constant 0 : i32
    %c0_i32_0 = arith.constant 0 : i32
    %c0_i32_1 = arith.constant 0 : i32
    return %c0_i32, %c0_i32_0 : i32, i32
  }
  func.func @transform_4(%arg0: i32) -> (i32, i32) {
    %c0_i32 = arith.constant 0 : i32
    %c0_i32_0 = arith.constant 0 : i32
    %c0_i32_1 = arith.constant 0 : i32
    return %c0_i32, %c0_i32_0 : i32, i32
  }
  func.func @transform_5(%arg0: i32) -> (i32, i32, i32) {
    %c0_i32 = arith.constant 0 : i32
    %c0_i32_0 = arith.constant 0 : i32
    %c0_i32_1 = arith.constant 0 : i32
    return %arg0, %c0_i32, %c0_i32_0 : i32, i32, i32
  }
}

</mosaic_0001>

<llo_original>
// kernel: cnn_conv_block.1
$region0: #{cnn_conv_block.1}
  #allocation0 [shape = 'u32[]', space=smem, size = 0x4, offset = 0x4, fixed_abs, tag = 'smem constant byte address 0x4 - core index']
  #allocation1 [shape = 'u32[72,128]{1,0:T(1,128)}', space=vmem, size = 0x9000, scoped, tag = 'internal scratch']
  #allocation2 [shape = 'bf16[1,296,128]{2,1,0:T(8,128)(2,1)}', space=vmem, size = 0x12800, scoped, tag = 'scratch operand']
  %s0 = inlined_call_operand.vmem [shape: bf16[2,336,128], index: 0, kind: input, shape index: {}]
  %s1 = inlined_call_operand.vmem [shape: bf16[1152,128], index: 1, kind: input, shape index: {}]
  %s2 = inlined_call_operand.vmem [shape: f32[1,128], index: 2, kind: input, shape index: {}]
  %s3 = inlined_call_operand.vmem [shape: bf16[1152,128], index: 3, kind: input, shape index: {}]
  %s4 = inlined_call_operand.vmem [shape: f32[1,128], index: 4, kind: input, shape index: {}]
  %s5 = inlined_call_operand.vmem [shape: f32[2,256,128], index: 5, kind: output, shape index: {}]
  %s6 = sld [smem:[#allocation0]]
  $region53: #{cnn_conv_block.1} parent=0
    _
  %s8 = ssub.s32 1, %s6
  %s9 = scalar_select 0, %s8, %s6
  loop: start=0, step=1, limit=4
  $region2: #{cnn_conv_block.1} parent=0 // loop_pre_header
    _
  $region3: #{cnn_conv_block.1} parent=0 // loop_header
    %s11 = sphi 0, %s15
    %p12 = scmp.ge.s32.totalorder %s11, 4
    %s21 = sphi 0, %s23
    %s24 = sphi 0, %s21
    %s25 = sphi 0, %s24
    %s41 = sphi 0, %s25
    %s45 = sphi 0, %s45
    %s47 = sphi 0, %s45
    %s48 = sphi 0, %s47
    %s62 = sphi 0, %s48
    %s66 = sphi 0, %s66
    %s68 = sphi 0, %s66
    %s69 = sphi 0, %s68
    %s83 = sphi 0, %s69
    %s87 = sphi 0, %s87
    %s89 = sphi 0, %s87
    %s90 = sphi 0, %s89
    %s104 = sphi 0, %s90
    %s108 = sphi 0, %s108
    %s110 = sphi 0, %s108
    %s111 = sphi 0, %s110
    %s125 = sphi 0, %s111
    %s131 = sphi 0, %s133
    %s134 = sphi 0, %s131
    %s135 = sphi 0, %s134
    %s151 = sphi 0, %s135
  $region4: #{cnn_conv_block.1} parent=0 // loop_header_branch
    %14 = sbr.rel (%p12) target = $region8
  $region5: #{cnn_conv_block.1} parent=0 // loop_body
    %s16 = ssub.s32 %s11, 1
    %s17 = ssub.s32 %s11, 2
    %s18 = sadd.s32 %s11, 1
    %s19 = ssub.s32 %s11, %s18
    %p20 = scmp.eq.s32.totalorder %s19, 0
    %s22 = sadd.s32 %s21, 1
    %s23 = scalar_select %p20, %s21, %s22
    %p26 = pneg %p20
    %p27 = scmp.eq.s32.totalorder %s11, 1
    %p28 = por %p26, %p27
    %p29 = scmp.ne.s32.totalorder %s21, %s24
    %p30 = scmp.eq.s32.totalorder %s11, 0
    %p31 = por %p29, %p30
    %p32 = scmp.ne.s32.totalorder %s21, %s24
    %p33 = scmp.eq.s32.totalorder %s16, 1
    %p34 = por %p32, %p33
    %p35 = scmp.ne.s32.totalorder %s24, %s25
    %p36 = scmp.eq.s32.totalorder %s16, 0
    %p37 = por %p35, %p36
    %p38 = scmp.ne.s32.totalorder %s24, %s25
    %p39 = scmp.eq.s32.totalorder %s17, 1
    %p40 = por %p38, %p39
    %p42 = scmp.ne.s32.totalorder %s25, %s41
    %p43 = scmp.eq.s32.totalorder %s17, 0
    %p44 = por %p42, %p43
    %s46 = sadd.s32 %s45, 1
    %p49 = scmp.eq.s32.totalorder %s11, 1
    %p50 = scmp.ne.s32.totalorder %s45, %s47
    %p51 = scmp.eq.s32.totalorder %s11, 0
    %p52 = por %p50, %p51
    %p53 = scmp.ne.s32.totalorder %s45, %s47
    %p54 = scmp.eq.s32.totalorder %s16, 1
    %p55 = por %p53, %p54
    %p56 = scmp.ne.s32.totalorder %s47, %s48
    %p57 = scmp.eq.s32.totalorder %s16, 0
    %p58 = por %p56, %p57
    %p59 = scmp.ne.s32.totalorder %s47, %s48
    %p60 = scmp.eq.s32.totalorder %s17, 1
    %p61 = por %p59, %p60
    %p63 = scmp.ne.s32.totalorder %s48, %s62
    %p64 = scmp.eq.s32.totalorder %s17, 0
    %p65 = por %p63, %p64
    %s67 = sadd.s32 %s66, 1
    %p70 = scmp.eq.s32.totalorder %s11, 1
    %p71 = scmp.ne.s32.totalorder %s66, %s68
    %p72 = scmp.eq.s32.totalorder %s11, 0
    %p73 = por %p71, %p72
    %p74 = scmp.ne.s32.totalorder %s66, %s68
    %p75 = scmp.eq.s32.totalorder %s16, 1
    %p76 = por %p74, %p75
    %p77 = scmp.ne.s32.totalorder %s68, %s69
    %p78 = scmp.eq.s32.totalorder %s16, 0
    %p79 = por %p77, %p78
    %p80 = scmp.ne.s32.totalorder %s68, %s69
    %p81 = scmp.eq.s32.totalorder %s17, 1
    %p82 = por %p80, %p81
    %p84 = scmp.ne.s32.totalorder %s69, %s83
    %p85 = scmp.eq.s32.totalorder %s17, 0
    %p86 = por %p84, %p85
    %s88 = sadd.s32 %s87, 1
    %p91 = scmp.eq.s32.totalorder %s11, 1
    %p92 = scmp.ne.s32.totalorder %s87, %s89
    %p93 = scmp.eq.s32.totalorder %s11, 0
    %p94 = por %p92, %p93
    %p95 = scmp.ne.s32.totalorder %s87, %s89
    %p96 = scmp.eq.s32.totalorder %s16, 1
    %p97 = por %p95, %p96
    %p98 = scmp.ne.s32.totalorder %s89, %s90
    %p99 = scmp.eq.s32.totalorder %s16, 0
    %p100 = por %p98, %p99
    %p101 = scmp.ne.s32.totalorder %s89, %s90
    %p102 = scmp.eq.s32.totalorder %s17, 1
    %p103 = por %p101, %p102
    %p105 = scmp.ne.s32.totalorder %s90, %s104
    %p106 = scmp.eq.s32.totalorder %s17, 0
    %p107 = por %p105, %p106
    %s109 = sadd.s32 %s108, 1
    %p112 = scmp.eq.s32.totalorder %s11, 1
    %p113 = scmp.ne.s32.totalorder %s108, %s110
    %p114 = scmp.eq.s32.totalorder %s11, 0
    %p115 = por %p113, %p114
    %p116 = scmp.ne.s32.totalorder %s108, %s110
    %p117 = scmp.eq.s32.totalorder %s16, 1
    %p118 = por %p116, %p117
    %p119 = scmp.ne.s32.totalorder %s110, %s111
    %p120 = scmp.eq.s32.totalorder %s16, 0
    %p121 = por %p119, %p120
    %p122 = scmp.ne.s32.totalorder %s110, %s111
    %p123 = scmp.eq.s32.totalorder %s17, 1
    %p124 = por %p122, %p123
    %p126 = scmp.ne.s32.totalorder %s111, %s125
    %p127 = scmp.eq.s32.totalorder %s17, 0
    %p128 = por %p126, %p127
    %s129 = ssub.s32 %s11, %s18
    %p130 = scmp.eq.s32.totalorder %s129, 0
    %s132 = sadd.s32 %s131, 1
    %s133 = scalar_select %p130, %s131, %s132
    %p136 = pneg %p130
    %p137 = scmp.eq.s32.totalorder %s11, 1
    %p138 = por %p136, %p137
    %p139 = scmp.ne.s32.totalorder %s131, %s134
    %p140 = scmp.eq.s32.totalorder %s11, 0
    %p141 = por %p139, %p140
    %p142 = scmp.ne.s32.totalorder %s131, %s134
    %p143 = scmp.eq.s32.totalorder %s16, 1
    %p144 = por %p142, %p143
    %p145 = scmp.ne.s32.totalorder %s134, %s135
    %p146 = scmp.eq.s32.totalorder %s16, 0
    %p147 = por %p145, %p146
    %p148 = scmp.ne.s32.totalorder %s134, %s135
    %p149 = scmp.eq.s32.totalorder %s17, 1
    %p150 = por %p148, %p149
    %p152 = scmp.ne.s32.totalorder %s135, %s151
    %p153 = scmp.eq.s32.totalorder %s17, 0
    %p154 = por %p152, %p153
    %p155 = scmp.le.s32.totalorder 1, %s11
    %p156 = scmp.lt.s32.totalorder %s11, 3
    %p157 = pnand %p155, %p156
    %p158 = pneg %p157
    // Predicated region
    $region9: #{cnn_conv_block.1} parent=5 // pred_check
      _
    $region10: #{cnn_conv_block.1} parent=5 // pred_check_branch
      %160 = sbr.rel (%p157) target = $region12
    $region11: #{cnn_conv_block.1} parent=5 // pred_region
      %s161 = ssub.s32 %s11, 1
      // Predicated region
      $region13: #{cnn_conv_block.1} parent=11 // pred_check
        %p162 = pneg %p58
      $region14: #{cnn_conv_block.1} parent=11 // pred_check_branch
        %164 = sbr.rel (%p162) target = $region16
      $region15: #{cnn_conv_block.1} parent=11 // pred_region
        _
      $region16: #{cnn_conv_block.1} parent=11 // pred_fallthru
        _
      // Predicated region
      $region17: #{cnn_conv_block.1} parent=11 // pred_check
        %p165 = pneg %p79
      $region18: #{cnn_conv_block.1} parent=11 // pred_check_branch
        %167 = sbr.rel (%p165) target = $region20
      $region19: #{cnn_conv_block.1} parent=11 // pred_region
        _
      $region20: #{cnn_conv_block.1} parent=11 // pred_fallthru
        _
      // Predicated region
      $region21: #{cnn_conv_block.1} parent=11 // pred_check
        %p168 = pneg %p100
      $region22: #{cnn_conv_block.1} parent=11 // pred_check_branch
        %170 = sbr.rel (%p168) target = $region24
      $region23: #{cnn_conv_block.1} parent=11 // pred_region
        _
      $region24: #{cnn_conv_block.1} parent=11 // pred_fallthru
        _
      // Predicated region
      $region25: #{cnn_conv_block.1} parent=11 // pred_check
        %p171 = pneg %p121
      $region26: #{cnn_conv_block.1} parent=11 // pred_check_branch
        %173 = sbr.rel (%p171) target = $region28
      $region27: #{cnn_conv_block.1} parent=11 // pred_region
        _
      $region28: #{cnn_conv_block.1} parent=11 // pred_fallthru
        _
    $region12: #{cnn_conv_block.1} parent=5 // pred_fallthru
      _
    %p174 = scmp.lt.s32.totalorder %s11, 2
    // Predicated region
    $region29: #{cnn_conv_block.1} parent=5 // pred_check
      %p175 = pneg %p174
    $region30: #{cnn_conv_block.1} parent=5 // pred_check_branch
      %177 = sbr.rel (%p175) target = $region32
    $region31: #{cnn_conv_block.1} parent=5 // pred_region
      // Predicated region
      $region33: #{cnn_conv_block.1} parent=31 // pred_check
        %p178 = pneg %p31
      $region34: #{cnn_conv_block.1} parent=31 // pred_check_branch
        %180 = sbr.rel (%p178) target = $region36
      $region35: #{cnn_conv_block.1} parent=31 // pred_region
        %p181 = scmp.lt.s32.totalorder %s11, 1
        %s182 = scalar_select %p181, %s11, 1
        %s183 = smul.addr %s182, 42
        %s184 = smul.addr %s183, 4
        %s185 = scalar_lea.vmem %s0, %s184
      $region36: #{cnn_conv_block.1} parent=31 // pred_fallthru
        _
    $region32: #{cnn_conv_block.1} parent=5 // pred_fallthru
      _
    %p186 = scmp.le.s32.totalorder 1, %s11
    %p187 = scmp.lt.s32.totalorder %s11, 3
    %p188 = pnand %p186, %p187
    %p189 = pneg %p188
    // Predicated region
    $region37: #{cnn_conv_block.1} parent=5 // pred_check
      _
    $region38: #{cnn_conv_block.1} parent=5 // pred_check_branch
      %191 = sbr.rel (%p188) target = $region40
    $region39: #{cnn_conv_block.1} parent=5 // pred_region
      %s192 = ssub.s32 %s11, 1
      %p193 = scmp.lt.s32.totalorder %s16, 1
      %s194 = scalar_select %p193, %s16, 1
      %s195 = smul.addr %s194, 42
      %s196 = smul.addr %s195, 4
      %s197 = scalar_lea.vmem %s0, %s196
      %p198 = pneg %p37
      %p199 = pneg %p34
      %p200 = pneg %p58
      %p201 = pneg %p55
      %p202 = pneg %p79
      %p203 = pneg %p76
      %p204 = pneg %p100
      %p205 = pneg %p97
      %p206 = pneg %p121
      %p207 = pneg %p118
      %p208 = pneg %p147
      %p209 = pneg %p144
      %p210 = scmp.lt.s32.totalorder %s16, 1
      %s211 = scalar_select %p210, %s16, 1
      %s212 = smul.addr %s211, 32
      %s213 = smul.addr %s212, 8
      %s214 = scalar_lea.vmem %s5, %s213
      %p215 = scmp.lt.s32.totalorder %s16, 1
      %s216 = scalar_select %p215, %s16, 1
      %s217 = smul.addr %s216, 42
      %s218 = smul.addr %s217, 4
      %s219 = scalar_lea.vmem %s0, %s218
      %p220 = scmp.lt.s32.totalorder %s16, 1
      %s221 = scalar_select %p220, %s16, 1
      %s222 = smul.addr %s221, 32
      %s223 = smul.addr %s222, 8
      %s224 = scalar_lea.vmem %s5, %s223
      %v225 = vld [vmem:[%s219] sm:$0xf]
      %v226 = vld [vmem:[%s219 + $0x4] sm:$0xf]
      %v227 = vld [vmem:[%s219 + $0x8] sm:$0xf]
      %v228 = vld [vmem:[%s219 + $0xc] sm:$0xf]
      %v229 = vld [vmem:[%s219 + $0x10] sm:$0xf]
      %v230 = vld [vmem:[%s219 + $0x14] sm:$0xf]
      %v231 = vld [vmem:[%s219 + $0x18] sm:$0xf]
      %v232 = vld [vmem:[%s219 + $0x1c] sm:$0xf]
      %v233 = vld [vmem:[%s219 + $0x20] sm:$0xf]
      %v234 = vld [vmem:[%s219 + $0x24] sm:$0xf]
      %v235 = vld [vmem:[%s219 + $0x28] sm:$0xf]
      %v236 = vld [vmem:[%s219 + $0x2c] sm:$0xf]
      %v237 = vld [vmem:[%s219 + $0x30] sm:$0xf]
      %v238 = vld [vmem:[%s219 + $0x34] sm:$0xf]
      %v239 = vld [vmem:[%s219 + $0x38] sm:$0xf]
      %v240 = vld [vmem:[%s219 + $0x3c] sm:$0xf]
      %v241 = vld [vmem:[%s219 + $0x40] sm:$0xf]
      %v242 = vld [vmem:[%s219 + $0x44] sm:$0xf]
      %v243 = vld [vmem:[%s219 + $0x48] sm:$0xf]
      %v244 = vld [vmem:[%s219 + $0x4c] sm:$0xf]
      %v245 = vld [vmem:[%s219 + $0x50] sm:$0xf]
      %v246 = vld [vmem:[%s219 + $0x54] sm:$0xf]
      %v247 = vld [vmem:[%s219 + $0x58] sm:$0xf]
      %v248 = vld [vmem:[%s219 + $0x5c] sm:$0xf]
      %v249 = vld [vmem:[%s219 + $0x60] sm:$0xf]
      %v250 = vld [vmem:[%s219 + $0x64] sm:$0xf]
      %v251 = vld [vmem:[%s219 + $0x68] sm:$0xf]
      %v252 = vld [vmem:[%s219 + $0x6c] sm:$0xf]
      %v253 = vld [vmem:[%s219 + $0x70] sm:$0xf]
      %v254 = vld [vmem:[%s219 + $0x74] sm:$0xf]
      %v255 = vld [vmem:[%s219 + $0x78] sm:$0xf]
      %v256 = vld [vmem:[%s219 + $0x7c] sm:$0xf]
      %v257 = vld [vmem:[%s219 + $0x80] sm:$0xf]
      %v258 = vld [vmem:[%s219 + $0x84] sm:$0xf]
      %v259 = vld [vmem:[%s219 + $0x88] sm:$0xf]
      %v260 = vld [vmem:[%s219 + $0x8c] sm:$0xf]
      %v261 = vld [vmem:[%s219 + $0x90] sm:$0xf]
      %v262 = vld [vmem:[%s219 + $0x94] sm:$0x1]
      %v263 = vld [vmem:[%s219] sm:$0xe]
      %v264 = vld [vmem:[%s219 + $0x8] sm:$0xe]
      %v265 = vld [vmem:[%s219 + $0x94] sm:$0xf]
      %v266 = vld [vmem:[%s219 + $0x98] sm:$0xf]
      %v267 = vld [vmem:[%s219 + $0x9c] sm:$0x1]
      %v268 = vld [vmem:[%s219 + $0x9c] sm:$0x3]
      %v269 = vld [vmem:[%s219 + $0x8] sm:$0xc]
      %v270 = vld [vmem:[%s219 + $0x10] sm:$0xc]
      %v271 = vld [vmem:[%s219 + $0x14] sm:$0xf]
      %v272 = vld [vmem:[%s219 + $0x18] sm:$0xf]
      %v273 = vld [vmem:[%s219 + $0x1c] sm:$0xf]
      %v274 = vld [vmem:[%s219 + $0x20] sm:$0xf]
      %v275 = vld [vmem:[%s219 + $0x24] sm:$0xf]
      %v276 = vld [vmem:[%s219 + $0x28] sm:$0xf]
      %v277 = vld [vmem:[%s219 + $0x2c] sm:$0xf]
      %v278 = vld [vmem:[%s219 + $0x30] sm:$0xf]
      %v279 = vld [vmem:[%s219 + $0x34] sm:$0xf]
      %v280 = vld [vmem:[%s219 + $0x38] sm:$0xf]
      %v281 = vld [vmem:[%s219 + $0x3c] sm:$0xf]
      %v282 = vld [vmem:[%s219 + $0x40] sm:$0xf]
      %v283 = vld [vmem:[%s219 + $0x44] sm:$0xf]
      %v284 = vld [vmem:[%s219 + $0x48] sm:$0xf]
      %v285 = vld [vmem:[%s219 + $0x4c] sm:$0xf]
      %v286 = vld [vmem:[%s219 + $0x50] sm:$0xf]
      %v287 = vld [vmem:[%s219 + $0x54] sm:$0xf]
      %v288 = vld [vmem:[%s219 + $0x58] sm:$0xf]
      %v289 = vld [vmem:[%s219 + $0x5c] sm:$0xf]
      %v290 = vld [vmem:[%s219 + $0x60] sm:$0xf]
      %v291 = vld [vmem:[%s219 + $0x64] sm:$0xf]
      %v292 = vld [vmem:[%s219 + $0x68] sm:$0xf]
      %v293 = vld [vmem:[%s219 + $0x6c] sm:$0xf]
      %v294 = vld [vmem:[%s219 + $0x70] sm:$0xf]
      %v295 = vld [vmem:[%s219 + $0x74] sm:$0xf]
      %v296 = vld [vmem:[%s219 + $0x78] sm:$0xf]
      %v297 = vld [vmem:[%s219 + $0x7c] sm:$0xf]
      %v298 = vld [vmem:[%s219 + $0x80] sm:$0xf]
      %v299 = vld [vmem:[%s219 + $0x84] sm:$0xf]
      %v300 = vld [vmem:[%s219 + $0x88] sm:$0xf]
      %v301 = vld [vmem:[%s219 + $0x8c] sm:$0xf]
      %v302 = vld [vmem:[%s219 + $0x90] sm:$0xf]
      %v303 = vld [vmem:[%s219 + $0x94] sm:$0xf]
      %v304 = vld [vmem:[%s219 + $0x98] sm:$0xf]
      %v305 = vld [vmem:[%s219 + $0x9c] sm:$0xf]
      %v306 = vld [vmem:[%s219 + $0xa0] sm:$0xf]
      %v307 = vld [vmem:[%s219 + $0xa4] sm:$0x3]
      %v308 = vld [vmem:[%s219 + $0xa4] sm:$0x7]
      %v309 = vld [vmem:[%s219 + $0x10] sm:$0x8]
      %v347 = vunpack.c.l.b16 %v225
      %v348 = vunpack.c.l.b16 %v226
      %v349 = vunpack.c.l.b16 %v227
      %v350 = vunpack.c.l.b16 %v228
      %v351 = vunpack.c.l.b16 %v229
      %v352 = vunpack.c.l.b16 %v230
      %v353 = vunpack.c.l.b16 %v231
      %v354 = vunpack.c.l.b16 %v232
      %v355 = vunpack.c.l.b16 %v233
      %v356 = vunpack.c.l.b16 %v234
      %v357 = vunpack.c.l.b16 %v235
      %v358 = vunpack.c.l.b16 %v236
      %v359 = vunpack.c.l.b16 %v237
      %v360 = vunpack.c.l.b16 %v238
      %v361 = vunpack.c.l.b16 %v239
      %v362 = vunpack.c.l.b16 %v240
      %v363 = vunpack.c.l.b16 %v241
      %v364 = vunpack.c.l.b16 %v242
      %v365 = vunpack.c.l.b16 %v243
      %v366 = vunpack.c.l.b16 %v244
      %v367 = vunpack.c.l.b16 %v245
      %v368 = vunpack.c.l.b16 %v246
      %v369 = vunpack.c.l.b16 %v247
      %v370 = vunpack.c.l.b16 %v248
      %v371 = vunpack.c.l.b16 %v249
      %v372 = vunpack.c.l.b16 %v250
      %v373 = vunpack.c.l.b16 %v251
      %v374 = vunpack.c.l.b16 %v252
      %v375 = vunpack.c.l.b16 %v253
      %v376 = vunpack.c.l.b16 %v254
      %v377 = vunpack.c.l.b16 %v255
      %v378 = vunpack.c.l.b16 %v256
      %v379 = vunpack.c.l.b16 %v257
      %v380 = vunpack.c.l.b16 %v258
      %v381 = vunpack.c.l.b16 %v259
      %v382 = vunpack.c.l.b16 %v260
      %v383 = vunpack.c.l.b16 %v261
      %v384 = vpack.c.b16 %v348, %v347
      %v385 = vpack.c.b16 %v350, %v349
      %v386 = vpack.c.b16 %v352, %v351
      %v387 = vpack.c.b16 %v354, %v353
      %v388 = vpack.c.b16 %v356, %v355
      %v389 = vpack.c.b16 %v358, %v357
      %v390 = vpack.c.b16 %v360, %v359
      %v391 = vpack.c.b16 %v362, %v361
      %v392 = vpack.c.b16 %v364, %v363
      %v393 = vpack.c.b16 %v366, %v365
      %v394 = vpack.c.b16 %v368, %v367
      %v395 = vpack.c.b16 %v370, %v369
      %v396 = vpack.c.b16 %v372, %v371
      %v397 = vpack.c.b16 %v374, %v373
      %v398 = vpack.c.b16 %v376, %v375
      %v399 = vpack.c.b16 %v378, %v377
      %v400 = vpack.c.b16 %v380, %v379
      %v401 = vpack.c.b16 %v382, %v381
      %v402 = vpack.c.b16 %v383, %v383
      %v423 = vunpack.c.l.b16 %v262
      %v424 = vpack.c.b16 %v423, %v383
      %vm425 = vsmask.f32 7424
      %v427 = vshrl.u32 %v384, 16
      %v429 = vshll.u32 %v384, 16
      %v431 = vrot.slane %v429, 1
      %v432 = vor.u32 %v427, %v431
      %v434 = vshll.u32 %v385, 16
      %v436 = vrot.slane %v434, 1
      %v437 = vsel %vm425, %v432, %v436
      %v438 = vshrl.u32 %v385, 16
      %v440 = vor.u32 %v438, %v436
      %v442 = vshll.u32 %v386, 16
      %v444 = vrot.slane %v442, 1
      %v445 = vsel %vm425, %v440, %v444
      %v446 = vshrl.u32 %v386, 16
      %v448 = vor.u32 %v446, %v444
      %v450 = vshll.u32 %v387, 16
      %v452 = vrot.slane %v450, 1
      %v453 = vsel %vm425, %v448, %v452
      %v454 = vshrl.u32 %v387, 16
      %v456 = vor.u32 %v454, %v452
      %v458 = vshll.u32 %v388, 16
      %v460 = vrot.slane %v458, 1
      %v461 = vsel %vm425, %v456, %v460
      %v462 = vshrl.u32 %v388, 16
      %v464 = vor.u32 %v462, %v460
      %v466 = vshll.u32 %v389, 16
      %v468 = vrot.slane %v466, 1
      %v469 = vsel %vm425, %v464, %v468
      %v470 = vshrl.u32 %v389, 16
      %v472 = vor.u32 %v470, %v468
      %v474 = vshll.u32 %v390, 16
      %v476 = vrot.slane %v474, 1
      %v477 = vsel %vm425, %v472, %v476
      %v478 = vshrl.u32 %v390, 16
      %v480 = vor.u32 %v478, %v476
      %v482 = vshll.u32 %v391, 16
      %v484 = vrot.slane %v482, 1
      %v485 = vsel %vm425, %v480, %v484
      %v486 = vshrl.u32 %v391, 16
      %v488 = vor.u32 %v486, %v484
      %v490 = vshll.u32 %v392, 16
      %v492 = vrot.slane %v490, 1
      %v493 = vsel %vm425, %v488, %v492
      %v494 = vshrl.u32 %v392, 16
      %v496 = vor.u32 %v494, %v492
      %v498 = vshll.u32 %v393, 16
      %v500 = vrot.slane %v498, 1
      %v501 = vsel %vm425, %v496, %v500
      %v502 = vshrl.u32 %v393, 16
      %v504 = vor.u32 %v502, %v500
      %v506 = vshll.u32 %v394, 16
      %v508 = vrot.slane %v506, 1
      %v509 = vsel %vm425, %v504, %v508
      %v510 = vshrl.u32 %v394, 16
      %v512 = vor.u32 %v510, %v508
      %v514 = vshll.u32 %v395, 16
      %v516 = vrot.slane %v514, 1
      %v517 = vsel %vm425, %v512, %v516
      %v518 = vshrl.u32 %v395, 16
      %v520 = vor.u32 %v518, %v516
      %v522 = vshll.u32 %v396, 16
      %v524 = vrot.slane %v522, 1
      %v525 = vsel %vm425, %v520, %v524
      %v526 = vshrl.u32 %v396, 16
      %v528 = vor.u32 %v526, %v524
      %v530 = vshll.u32 %v397, 16
      %v532 = vrot.slane %v530, 1
      %v533 = vsel %vm425, %v528, %v532
      %v534 = vshrl.u32 %v397, 16
      %v536 = vor.u32 %v534, %v532
      %v538 = vshll.u32 %v398, 16
      %v540 = vrot.slane %v538, 1
      %v541 = vsel %vm425, %v536, %v540
      %v542 = vshrl.u32 %v398, 16
      %v544 = vor.u32 %v542, %v540
      %v546 = vshll.u32 %v399, 16
      %v548 = vrot.slane %v546, 1
      %v549 = vsel %vm425, %v544, %v548
      %v550 = vshrl.u32 %v399, 16
      %v552 = vor.u32 %v550, %v548
      %v554 = vshll.u32 %v400, 16
      %v556 = vrot.slane %v554, 1
      %v557 = vsel %vm425, %v552, %v556
      %v558 = vshrl.u32 %v400, 16
      %v560 = vor.u32 %v558, %v556
      %v562 = vshll.u32 %v401, 16
      %v564 = vrot.slane %v562, 1
      %v565 = vsel %vm425, %v560, %v564
      %v566 = vshrl.u32 %v401, 16
      %v568 = vor.u32 %v566, %v564
      %v570 = vshll.u32 %v424, 16
      %v572 = vrot.slane %v570, 1
      %v573 = vsel %vm425, %v568, %v572
      %v574 = vshrl.u32 %v424, 16
      %v576 = vor.u32 %v574, %v572
      %v597 = vunpack.c.l.b16 %v263
      %v598 = vpack.c.b16 %v348, %v597
      %vm599 = vcmask 1046528
      %v600 = vrot.slane %v598, 1
      %v601 = vrot.slane %v385, 1
      %v602 = vsel %vm599, %v600, %v601
      %v603 = vrot.slane %v386, 1
      %v604 = vsel %vm599, %v601, %v603
      %v605 = vrot.slane %v387, 1
      %v606 = vsel %vm599, %v603, %v605
      %v607 = vrot.slane %v388, 1
      %v608 = vsel %vm599, %v605, %v607
      %v609 = vrot.slane %v389, 1
      %v610 = vsel %vm599, %v607, %v609
      %v611 = vrot.slane %v390, 1
      %v612 = vsel %vm599, %v609, %v611
      %v613 = vrot.slane %v391, 1
      %v614 = vsel %vm599, %v611, %v613
      %v615 = vrot.slane %v392, 1
      %v616 = vsel %vm599, %v613, %v615
      %v617 = vrot.slane %v393, 1
      %v618 = vsel %vm599, %v615, %v617
      %v619 = vrot.slane %v394, 1
      %v620 = vsel %vm599, %v617, %v619
      %v621 = vrot.slane %v395, 1
      %v622 = vsel %vm599, %v619, %v621
      %v623 = vrot.slane %v396, 1
      %v624 = vsel %vm599, %v621, %v623
      %v625 = vrot.slane %v397, 1
      %v626 = vsel %vm599, %v623, %v625
      %v627 = vrot.slane %v398, 1
      %v628 = vsel %vm599, %v625, %v627
      %v629 = vrot.slane %v399, 1
      %v630 = vsel %vm599, %v627, %v629
      %v631 = vrot.slane %v400, 1
      %v632 = vsel %vm599, %v629, %v631
      %v633 = vrot.slane %v401, 1
      %v634 = vsel %vm599, %v631, %v633
      %v635 = vrot.slane %v424, 1
      %v636 = vsel %vm599, %v633, %v635
      %v660 = vunpack.c.l.b16 %v264
      %v661 = vunpack.c.l.b16 %v265
      %v662 = vunpack.c.l.b16 %v266
      %v663 = vunpack.c.l.b16 %v267
      %v664 = vpack.c.b16 %v350, %v660
      %v665 = vpack.c.b16 %v661, %v383
      %v666 = vpack.c.b16 %v663, %v662
      %v667 = vrot.slane %v664, 1
      %v668 = vsel %vm599, %v667, %v603
      %v669 = vrot.slane %v665, 1
      %v670 = vsel %vm599, %v633, %v669
      %v671 = vrot.slane %v666, 1
      %v672 = vsel %vm599, %v669, %v671
      %v678 = vunpack.c.l.b16 %v268
      %v679 = vpack.c.b16 %v678, %v662
      %vm680 = vsmask.f32 6400
      %v682 = vshrl.u32 %v664, 16
      %v684 = vrot.slane %v682, 1
      %v685 = vshll.u32 %v664, 16
      %v687 = vrot.slane %v685, 2
      %v688 = vor.u32 %v684, %v687
      %v689 = vrot.slane %v446, 1
      %v690 = vrot.slane %v442, 2
      %v691 = vor.u32 %v689, %v690
      %v692 = vsel %vm680, %v688, %v691
      %v693 = vrot.slane %v454, 1
      %v694 = vrot.slane %v450, 2
      %v695 = vor.u32 %v693, %v694
      %v696 = vsel %vm680, %v691, %v695
      %v697 = vrot.slane %v462, 1
      %v698 = vrot.slane %v458, 2
      %v699 = vor.u32 %v697, %v698
      %v700 = vsel %vm680, %v695, %v699
      %v701 = vrot.slane %v470, 1
      %v702 = vrot.slane %v466, 2
      %v703 = vor.u32 %v701, %v702
      %v704 = vsel %vm680, %v699, %v703
      %v705 = vrot.slane %v478, 1
      %v706 = vrot.slane %v474, 2
      %v707 = vor.u32 %v705, %v706
      %v708 = vsel %vm680, %v703, %v707
      %v709 = vrot.slane %v486, 1
      %v710 = vrot.slane %v482, 2
      %v711 = vor.u32 %v709, %v710
      %v712 = vsel %vm680, %v707, %v711
      %v713 = vrot.slane %v494, 1
      %v714 = vrot.slane %v490, 2
      %v715 = vor.u32 %v713, %v714
      %v716 = vsel %vm680, %v711, %v715
      %v717 = vrot.slane %v502, 1
      %v718 = vrot.slane %v498, 2
      %v719 = vor.u32 %v717, %v718
      %v720 = vsel %vm680, %v715, %v719
      %v721 = vrot.slane %v510, 1
      %v722 = vrot.slane %v506, 2
      %v723 = vor.u32 %v721, %v722
      %v724 = vsel %vm680, %v719, %v723
      %v725 = vrot.slane %v518, 1
      %v726 = vrot.slane %v514, 2
      %v727 = vor.u32 %v725, %v726
      %v728 = vsel %vm680, %v723, %v727
      %v729 = vrot.slane %v526, 1
      %v730 = vrot.slane %v522, 2
      %v731 = vor.u32 %v729, %v730
      %v732 = vsel %vm680, %v727, %v731
      %v733 = vrot.slane %v534, 1
      %v734 = vrot.slane %v530, 2
      %v735 = vor.u32 %v733, %v734
      %v736 = vsel %vm680, %v731, %v735
      %v737 = vrot.slane %v542, 1
      %v738 = vrot.slane %v538, 2
      %v739 = vor.u32 %v737, %v738
      %v740 = vsel %vm680, %v735, %v739
      %v741 = vrot.slane %v550, 1
      %v742 = vrot.slane %v546, 2
      %v743 = vor.u32 %v741, %v742
      %v744 = vsel %vm680, %v739, %v743
      %v745 = vrot.slane %v558, 1
      %v746 = vrot.slane %v554, 2
      %v747 = vor.u32 %v745, %v746
      %v748 = vsel %vm680, %v743, %v747
      %v749 = vrot.slane %v566, 1
      %v750 = vrot.slane %v562, 2
      %v751 = vor.u32 %v749, %v750
      %v752 = vsel %vm680, %v747, %v751
      %v754 = vshrl.u32 %v665, 16
      %v756 = vrot.slane %v754, 1
      %v757 = vshll.u32 %v665, 16
      %v759 = vrot.slane %v757, 2
      %v760 = vor.u32 %v756, %v759
      %v761 = vsel %vm680, %v751, %v760
      %v763 = vshrl.u32 %v679, 16
      %v765 = vrot.slane %v763, 1
      %v766 = vshll.u32 %v679, 16
      %v768 = vrot.slane %v766, 2
      %v769 = vor.u32 %v765, %v768
      %v770 = vsel %vm680, %v760, %v769
      %v791 = vunpack.c.l.b16 %v269
      %v792 = vpack.c.b16 %v350, %v791
      %vm793 = vcmask 1045504
      %v794 = vrot.slane %v792, 2
      %v795 = vrot.slane %v386, 2
      %v796 = vsel %vm793, %v794, %v795
      %v797 = vrot.slane %v387, 2
      %v798 = vsel %vm793, %v795, %v797
      %v799 = vrot.slane %v388, 2
      %v800 = vsel %vm793, %v797, %v799
      %v801 = vrot.slane %v389, 2
      %v802 = vsel %vm793, %v799, %v801
      %v803 = vrot.slane %v390, 2
      %v804 = vsel %vm793, %v801, %v803
      %v805 = vrot.slane %v391, 2
      %v806 = vsel %vm793, %v803, %v805
      %v807 = vrot.slane %v392, 2
      %v808 = vsel %vm793, %v805, %v807
      %v809 = vrot.slane %v393, 2
      %v810 = vsel %vm793, %v807, %v809
      %v811 = vrot.slane %v394, 2
      %v812 = vsel %vm793, %v809, %v811
      %v813 = vrot.slane %v395, 2
      %v814 = vsel %vm793, %v811, %v813
      %v815 = vrot.slane %v396, 2
      %v816 = vsel %vm793, %v813, %v815
      %v817 = vrot.slane %v397, 2
      %v818 = vsel %vm793, %v815, %v817
      %v819 = vrot.slane %v398, 2
      %v820 = vsel %vm793, %v817, %v819
      %v821 = vrot.slane %v399, 2
      %v822 = vsel %vm793, %v819, %v821
      %v823 = vrot.slane %v400, 2
      %v824 = vsel %vm793, %v821, %v823
      %v825 = vrot.slane %v401, 2
      %v826 = vsel %vm793, %v823, %v825
      %v827 = vrot.slane %v665, 2
      %v828 = vsel %vm793, %v825, %v827
      %v829 = vrot.slane %v679, 2
      %v830 = vsel %vm793, %v827, %v829
      %v888 = vunpack.c.l.b16 %v270
      %v889 = vunpack.c.l.b16 %v271
      %v890 = vunpack.c.l.b16 %v272
      %v891 = vunpack.c.l.b16 %v273
      %v892 = vunpack.c.l.b16 %v274
      %v893 = vunpack.c.l.b16 %v275
      %v894 = vunpack.c.l.b16 %v276
      %v895 = vunpack.c.l.b16 %v277
      %v896 = vunpack.c.l.b16 %v278
      %v897 = vunpack.c.l.b16 %v279
      %v898 = vunpack.c.l.b16 %v280
      %v899 = vunpack.c.l.b16 %v281
      %v900 = vunpack.c.l.b16 %v282
      %v901 = vunpack.c.l.b16 %v283
      %v902 = vunpack.c.l.b16 %v284
      %v903 = vunpack.c.l.b16 %v285
      %v904 = vunpack.c.l.b16 %v286
      %v905 = vunpack.c.l.b16 %v287
      %v906 = vunpack.c.l.b16 %v288
      %v907 = vunpack.c.l.b16 %v289
      %v908 = vunpack.c.l.b16 %v290
      %v909 = vunpack.c.l.b16 %v291
      %v910 = vunpack.c.l.b16 %v292
      %v911 = vunpack.c.l.b16 %v293
      %v912 = vunpack.c.l.b16 %v294
      %v913 = vunpack.c.l.b16 %v295
      %v914 = vunpack.c.l.b16 %v296
      %v915 = vunpack.c.l.b16 %v297
      %v916 = vunpack.c.l.b16 %v298
      %v917 = vunpack.c.l.b16 %v299
      %v918 = vunpack.c.l.b16 %v300
      %v919 = vunpack.c.l.b16 %v301
      %v920 = vunpack.c.l.b16 %v302
      %v921 = vunpack.c.l.b16 %v303
      %v922 = vunpack.c.l.b16 %v304
      %v923 = vunpack.c.l.b16 %v305
      %v924 = vunpack.c.l.b16 %v306
      %v925 = vunpack.c.l.b16 %v307
      %v926 = vpack.c.b16 %v889, %v888
      %v927 = vpack.c.b16 %v891, %v890
      %v928 = vpack.c.b16 %v893, %v892
      %v929 = vpack.c.b16 %v895, %v894
      %v930 = vpack.c.b16 %v897, %v896
      %v931 = vpack.c.b16 %v899, %v898
      %v932 = vpack.c.b16 %v901, %v900
      %v933 = vpack.c.b16 %v903, %v902
      %v934 = vpack.c.b16 %v905, %v904
      %v935 = vpack.c.b16 %v907, %v906
      %v936 = vpack.c.b16 %v909, %v908
      %v937 = vpack.c.b16 %v911, %v910
      %v938 = vpack.c.b16 %v913, %v912
      %v939 = vpack.c.b16 %v915, %v914
      %v940 = vpack.c.b16 %v917, %v916
      %v941 = vpack.c.b16 %v919, %v918
      %v942 = vpack.c.b16 %v921, %v920
      %v943 = vpack.c.b16 %v923, %v922
      %v944 = vpack.c.b16 %v925, %v924
      %v945 = vrot.slane %v926, 2
      %v946 = vrot.slane %v927, 2
      %v947 = vsel %vm793, %v945, %v946
      %v948 = vrot.slane %v928, 2
      %v949 = vsel %vm793, %v946, %v948
      %v950 = vrot.slane %v929, 2
      %v951 = vsel %vm793, %v948, %v950
      %v952 = vrot.slane %v930, 2
      %v953 = vsel %vm793, %v950, %v952
      %v954 = vrot.slane %v931, 2
      %v955 = vsel %vm793, %v952, %v954
      %v956 = vrot.slane %v932, 2
      %v957 = vsel %vm793, %v954, %v956
      %v958 = vrot.slane %v933, 2
      %v959 = vsel %vm793, %v956, %v958
      %v960 = vrot.slane %v934, 2
      %v961 = vsel %vm793, %v958, %v960
      %v962 = vrot.slane %v935, 2
      %v963 = vsel %vm793, %v960, %v962
      %v964 = vrot.slane %v936, 2
      %v965 = vsel %vm793, %v962, %v964
      %v966 = vrot.slane %v937, 2
      %v967 = vsel %vm793, %v964, %v966
      %v968 = vrot.slane %v938, 2
      %v969 = vsel %vm793, %v966, %v968
      %v970 = vrot.slane %v939, 2
      %v971 = vsel %vm793, %v968, %v970
      %v972 = vrot.slane %v940, 2
      %v973 = vsel %vm793, %v970, %v972
      %v974 = vrot.slane %v941, 2
      %v975 = vsel %vm793, %v972, %v974
      %v976 = vrot.slane %v942, 2
      %v977 = vsel %vm793, %v974, %v976
      %v978 = vrot.slane %v943, 2
      %v979 = vsel %vm793, %v976, %v978
      %v980 = vrot.slane %v944, 2
      %v981 = vsel %vm793, %v978, %v980
      %v1002 = vunpack.c.l.b16 %v308
      %v1003 = vpack.c.b16 %v1002, %v924
      %vm1004 = vsmask.f32 5376
      %v1006 = vshrl.u32 %v926, 16
      %v1008 = vrot.slane %v1006, 2
      %v1009 = vshll.u32 %v926, 16
      %v1011 = vrot.slane %v1009, 3
      %v1012 = vor.u32 %v1008, %v1011
      %v1014 = vshrl.u32 %v927, 16
      %v1016 = vrot.slane %v1014, 2
      %v1017 = vshll.u32 %v927, 16
      %v1019 = vrot.slane %v1017, 3
      %v1020 = vor.u32 %v1016, %v1019
      %v1021 = vsel %vm1004, %v1012, %v1020
      %v1023 = vshrl.u32 %v928, 16
      %v1025 = vrot.slane %v1023, 2
      %v1026 = vshll.u32 %v928, 16
      %v1028 = vrot.slane %v1026, 3
      %v1029 = vor.u32 %v1025, %v1028
      %v1030 = vsel %vm1004, %v1020, %v1029
      %v1032 = vshrl.u32 %v929, 16
      %v1034 = vrot.slane %v1032, 2
      %v1035 = vshll.u32 %v929, 16
      %v1037 = vrot.slane %v1035, 3
      %v1038 = vor.u32 %v1034, %v1037
      %v1039 = vsel %vm1004, %v1029, %v1038
      %v1041 = vshrl.u32 %v930, 16
      %v1043 = vrot.slane %v1041, 2
      %v1044 = vshll.u32 %v930, 16
      %v1046 = vrot.slane %v1044, 3
      %v1047 = vor.u32 %v1043, %v1046
      %v1048 = vsel %vm1004, %v1038, %v1047
      %v1050 = vshrl.u32 %v931, 16
      %v1052 = vrot.slane %v1050, 2
      %v1053 = vshll.u32 %v931, 16
      %v1055 = vrot.slane %v1053, 3
      %v1056 = vor.u32 %v1052, %v1055
      %v1057 = vsel %vm1004, %v1047, %v1056
      %v1059 = vshrl.u32 %v932, 16
      %v1061 = vrot.slane %v1059, 2
      %v1062 = vshll.u32 %v932, 16
      %v1064 = vrot.slane %v1062, 3
      %v1065 = vor.u32 %v1061, %v1064
      %v1066 = vsel %vm1004, %v1056, %v1065
      %v1068 = vshrl.u32 %v933, 16
      %v1070 = vrot.slane %v1068, 2
      %v1071 = vshll.u32 %v933, 16
      %v1073 = vrot.slane %v1071, 3
      %v1074 = vor.u32 %v1070, %v1073
      %v1075 = vsel %vm1004, %v1065, %v1074
      %v1077 = vshrl.u32 %v934, 16
      %v1079 = vrot.slane %v1077, 2
      %v1080 = vshll.u32 %v934, 16
      %v1082 = vrot.slane %v1080, 3
      %v1083 = vor.u32 %v1079, %v1082
      %v1084 = vsel %vm1004, %v1074, %v1083
      %v1086 = vshrl.u32 %v935, 16
      %v1088 = vrot.slane %v1086, 2
      %v1089 = vshll.u32 %v935, 16
      %v1091 = vrot.slane %v1089, 3
      %v1092 = vor.u32 %v1088, %v1091
      %v1093 = vsel %vm1004, %v1083, %v1092
      %v1095 = vshrl.u32 %v936, 16
      %v1097 = vrot.slane %v1095, 2
      %v1098 = vshll.u32 %v936, 16
      %v1100 = vrot.slane %v1098, 3
      %v1101 = vor.u32 %v1097, %v1100
      %v1102 = vsel %vm1004, %v1092, %v1101
      %v1104 = vshrl.u32 %v937, 16
      %v1106 = vrot.slane %v1104, 2
      %v1107 = vshll.u32 %v937, 16
      %v1109 = vrot.slane %v1107, 3
      %v1110 = vor.u32 %v1106, %v1109
      %v1111 = vsel %vm1004, %v1101, %v1110
      %v1113 = vshrl.u32 %v938, 16
      %v1115 = vrot.slane %v1113, 2
      %v1116 = vshll.u32 %v938, 16
      %v1118 = vrot.slane %v1116, 3
      %v1119 = vor.u32 %v1115, %v1118
      %v1120 = vsel %vm1004, %v1110, %v1119
      %v1122 = vshrl.u32 %v939, 16
      %v1124 = vrot.slane %v1122, 2
      %v1125 = vshll.u32 %v939, 16
      %v1127 = vrot.slane %v1125, 3
      %v1128 = vor.u32 %v1124, %v1127
      %v1129 = vsel %vm1004, %v1119, %v1128
      %v1131 = vshrl.u32 %v940, 16
      %v1133 = vrot.slane %v1131, 2
      %v1134 = vshll.u32 %v940, 16
      %v1136 = vrot.slane %v1134, 3
      %v1137 = vor.u32 %v1133, %v1136
      %v1138 = vsel %vm1004, %v1128, %v1137
      %v1140 = vshrl.u32 %v941, 16
      %v1142 = vrot.slane %v1140, 2
      %v1143 = vshll.u32 %v941, 16
      %v1145 = vrot.slane %v1143, 3
      %v1146 = vor.u32 %v1142, %v1145
      %v1147 = vsel %vm1004, %v1137, %v1146
      %v1149 = vshrl.u32 %v942, 16
      %v1151 = vrot.slane %v1149, 2
      %v1152 = vshll.u32 %v942, 16
      %v1154 = vrot.slane %v1152, 3
      %v1155 = vor.u32 %v1151, %v1154
      %v1156 = vsel %vm1004, %v1146, %v1155
      %v1158 = vshrl.u32 %v943, 16
      %v1160 = vrot.slane %v1158, 2
      %v1161 = vshll.u32 %v943, 16
      %v1163 = vrot.slane %v1161, 3
      %v1164 = vor.u32 %v1160, %v1163
      %v1165 = vsel %vm1004, %v1155, %v1164
      %v1167 = vshrl.u32 %v1003, 16
      %v1169 = vrot.slane %v1167, 2
      %v1170 = vshll.u32 %v1003, 16
      %v1172 = vrot.slane %v1170, 3
      %v1173 = vor.u32 %v1169, %v1172
      %v1174 = vsel %vm1004, %v1164, %v1173
      %v1195 = vunpack.c.l.b16 %v309
      %v1196 = vpack.c.b16 %v889, %v1195
      %vm1197 = vcmask 1044480
      %v1198 = vrot.slane %v1196, 3
      %v1199 = vrot.slane %v927, 3
      %v1200 = vsel %vm1197, %v1198, %v1199
      %v1201 = vrot.slane %v928, 3
      %v1202 = vsel %vm1197, %v1199, %v1201
      %v1203 = vrot.slane %v929, 3
      %v1204 = vsel %vm1197, %v1201, %v1203
      %v1205 = vrot.slane %v930, 3
      %v1206 = vsel %vm1197, %v1203, %v1205
      %v1207 = vrot.slane %v931, 3
      %v1208 = vsel %vm1197, %v1205, %v1207
      %v1209 = vrot.slane %v932, 3
      %v1210 = vsel %vm1197, %v1207, %v1209
      %v1211 = vrot.slane %v933, 3
      %v1212 = vsel %vm1197, %v1209, %v1211
      %v1213 = vrot.slane %v934, 3
      %v1214 = vsel %vm1197, %v1211, %v1213
      %v1215 = vrot.slane %v935, 3
      %v1216 = vsel %vm1197, %v1213, %v1215
      %v1217 = vrot.slane %v936, 3
      %v1218 = vsel %vm1197, %v1215, %v1217
      %v1219 = vrot.slane %v937, 3
      %v1220 = vsel %vm1197, %v1217, %v1219
      %v1221 = vrot.slane %v938, 3
      %v1222 = vsel %vm1197, %v1219, %v1221
      %v1223 = vrot.slane %v939, 3
      %v1224 = vsel %vm1197, %v1221, %v1223
      %v1225 = vrot.slane %v940, 3
      %v1226 = vsel %vm1197, %v1223, %v1225
      %v1227 = vrot.slane %v941, 3
      %v1228 = vsel %vm1197, %v1225, %v1227
      %v1229 = vrot.slane %v942, 3
      %v1230 = vsel %vm1197, %v1227, %v1229
      %v1231 = vrot.slane %v943, 3
      %v1232 = vsel %vm1197, %v1229, %v1231
      %v1233 = vrot.slane %v1003, 3
      %v1234 = vsel %vm1197, %v1231, %v1233
      %v1254 = vld [vmem:[%s1] sm:$0xf]
      %v1255 = vld [vmem:[%s1 + $0x4] sm:$0xf]
      %v1256 = vld [vmem:[%s1 + $0x8] sm:$0xf]
      %v1257 = vld [vmem:[%s1 + $0xc] sm:$0xf]
      %v1258 = vld [vmem:[%s1 + $0x10] sm:$0xf]
      %v1259 = vld [vmem:[%s1 + $0x14] sm:$0xf]
      %v1260 = vld [vmem:[%s1 + $0x18] sm:$0xf]
      %v1261 = vld [vmem:[%s1 + $0x1c] sm:$0xf]
      %v1262 = vld [vmem:[%s1 + $0x20] sm:$0xf]
      %v1263 = vld [vmem:[%s1 + $0x24] sm:$0xf]
      %v1264 = vld [vmem:[%s1 + $0x28] sm:$0xf]
      %v1265 = vld [vmem:[%s1 + $0x2c] sm:$0xf]
      %v1266 = vld [vmem:[%s1 + $0x30] sm:$0xf]
      %v1267 = vld [vmem:[%s1 + $0x34] sm:$0xf]
      %v1268 = vld [vmem:[%s1 + $0x38] sm:$0xf]
      %v1269 = vld [vmem:[%s1 + $0x3c] sm:$0xf]
      %v1270 = vld [vmem:[%s1 + $0x40] sm:$0xf]
      %v1271 = vld [vmem:[%s1 + $0x44] sm:$0xf]
      %v1272 = vld [vmem:[%s1 + $0x48] sm:$0xf]
      %v1273 = vld [vmem:[%s1 + $0x4c] sm:$0xf]
      %v1274 = vld [vmem:[%s1 + $0x50] sm:$0xf]
      %v1275 = vld [vmem:[%s1 + $0x54] sm:$0xf]
      %v1276 = vld [vmem:[%s1 + $0x58] sm:$0xf]
      %v1277 = vld [vmem:[%s1 + $0x5c] sm:$0xf]
      %v1278 = vld [vmem:[%s1 + $0x60] sm:$0xf]
      %v1279 = vld [vmem:[%s1 + $0x64] sm:$0xf]
      %v1280 = vld [vmem:[%s1 + $0x68] sm:$0xf]
      %v1281 = vld [vmem:[%s1 + $0x6c] sm:$0xf]
      %v1282 = vld [vmem:[%s1 + $0x70] sm:$0xf]
      %v1283 = vld [vmem:[%s1 + $0x74] sm:$0xf]
      %v1284 = vld [vmem:[%s1 + $0x78] sm:$0xf]
      %v1285 = vld [vmem:[%s1 + $0x7c] sm:$0xf]
      %v1286 = vld [vmem:[%s1 + $0x80] sm:$0xf]
      %v1287 = vld [vmem:[%s1 + $0x84] sm:$0xf]
      %v1288 = vld [vmem:[%s1 + $0x88] sm:$0xf]
      %v1289 = vld [vmem:[%s1 + $0x8c] sm:$0xf]
      %v1290 = vld [vmem:[%s1 + $0x90] sm:$0xf]
      %v1291 = vld [vmem:[%s1 + $0x94] sm:$0xf]
      %v1292 = vld [vmem:[%s1 + $0x98] sm:$0xf]
      %v1293 = vld [vmem:[%s1 + $0x9c] sm:$0xf]
      %v1294 = vld [vmem:[%s1 + $0xa0] sm:$0xf]
      %v1295 = vld [vmem:[%s1 + $0xa4] sm:$0xf]
      %v1296 = vld [vmem:[%s1 + $0xa8] sm:$0xf]
      %v1297 = vld [vmem:[%s1 + $0xac] sm:$0xf]
      %v1298 = vld [vmem:[%s1 + $0xb0] sm:$0xf]
      %v1299 = vld [vmem:[%s1 + $0xb4] sm:$0xf]
      %v1300 = vld [vmem:[%s1 + $0xb8] sm:$0xf]
      %v1301 = vld [vmem:[%s1 + $0xbc] sm:$0xf]
      %v1302 = vld [vmem:[%s1 + $0xc0] sm:$0xf]
      %v1303 = vld [vmem:[%s1 + $0xc4] sm:$0xf]
      %v1304 = vld [vmem:[%s1 + $0xc8] sm:$0xf]
      %v1305 = vld [vmem:[%s1 + $0xcc] sm:$0xf]
      %v1306 = vld [vmem:[%s1 + $0xd0] sm:$0xf]
      %v1307 = vld [vmem:[%s1 + $0xd4] sm:$0xf]
      %v1308 = vld [vmem:[%s1 + $0xd8] sm:$0xf]
      %v1309 = vld [vmem:[%s1 + $0xdc] sm:$0xf]
      %v1310 = vld [vmem:[%s1 + $0xe0] sm:$0xf]
      %v1311 = vld [vmem:[%s1 + $0xe4] sm:$0xf]
      %v1312 = vld [vmem:[%s1 + $0xe8] sm:$0xf]
      %v1313 = vld [vmem:[%s1 + $0xec] sm:$0xf]
      %v1314 = vld [vmem:[%s1 + $0xf0] sm:$0xf]
      %v1315 = vld [vmem:[%s1 + $0xf4] sm:$0xf]
      %v1316 = vld [vmem:[%s1 + $0xf8] sm:$0xf]
      %v1317 = vld [vmem:[%s1 + $0xfc] sm:$0xf]
      %v1318 = vld [vmem:[%s1 + $0x100] sm:$0xf]
      %v1319 = vld [vmem:[%s1 + $0x104] sm:$0xf]
      %v1320 = vld [vmem:[%s1 + $0x108] sm:$0xf]
      %v1321 = vld [vmem:[%s1 + $0x10c] sm:$0xf]
      %v1322 = vld [vmem:[%s1 + $0x110] sm:$0xf]
      %v1323 = vld [vmem:[%s1 + $0x114] sm:$0xf]
      %v1324 = vld [vmem:[%s1 + $0x118] sm:$0xf]
      %v1325 = vld [vmem:[%s1 + $0x11c] sm:$0xf]
      %v1326 = vld [vmem:[%s1 + $0x120] sm:$0xf]
      %v1327 = vld [vmem:[%s1 + $0x124] sm:$0xf]
      %v1328 = vld [vmem:[%s1 + $0x128] sm:$0xf]
      %v1329 = vld [vmem:[%s1 + $0x12c] sm:$0xf]
      %v1330 = vld [vmem:[%s1 + $0x130] sm:$0xf]
      %v1331 = vld [vmem:[%s1 + $0x134] sm:$0xf]
      %v1332 = vld [vmem:[%s1 + $0x138] sm:$0xf]
      %v1333 = vld [vmem:[%s1 + $0x13c] sm:$0xf]
      %v1334 = vld [vmem:[%s1 + $0x140] sm:$0xf]
      %v1335 = vld [vmem:[%s1 + $0x144] sm:$0xf]
      %v1336 = vld [vmem:[%s1 + $0x148] sm:$0xf]
      %v1337 = vld [vmem:[%s1 + $0x14c] sm:$0xf]
      %v1338 = vld [vmem:[%s1 + $0x150] sm:$0xf]
      %v1339 = vld [vmem:[%s1 + $0x154] sm:$0xf]
      %v1340 = vld [vmem:[%s1 + $0x158] sm:$0xf]
      %v1341 = vld [vmem:[%s1 + $0x15c] sm:$0xf]
      %v1342 = vld [vmem:[%s1 + $0x160] sm:$0xf]
      %v1343 = vld [vmem:[%s1 + $0x164] sm:$0xf]
      %v1344 = vld [vmem:[%s1 + $0x168] sm:$0xf]
      %v1345 = vld [vmem:[%s1 + $0x16c] sm:$0xf]
      %v1346 = vld [vmem:[%s1 + $0x170] sm:$0xf]
      %v1347 = vld [vmem:[%s1 + $0x174] sm:$0xf]
      %v1348 = vld [vmem:[%s1 + $0x178] sm:$0xf]
      %v1349 = vld [vmem:[%s1 + $0x17c] sm:$0xf]
      %v1350 = vld [vmem:[%s1 + $0x180] sm:$0xf]
      %v1351 = vld [vmem:[%s1 + $0x184] sm:$0xf]
      %v1352 = vld [vmem:[%s1 + $0x188] sm:$0xf]
      %v1353 = vld [vmem:[%s1 + $0x18c] sm:$0xf]
      %v1354 = vld [vmem:[%s1 + $0x190] sm:$0xf]
      %v1355 = vld [vmem:[%s1 + $0x194] sm:$0xf]
      %v1356 = vld [vmem:[%s1 + $0x198] sm:$0xf]
      %v1357 = vld [vmem:[%s1 + $0x19c] sm:$0xf]
      %v1358 = vld [vmem:[%s1 + $0x1a0] sm:$0xf]
      %v1359 = vld [vmem:[%s1 + $0x1a4] sm:$0xf]
      %v1360 = vld [vmem:[%s1 + $0x1a8] sm:$0xf]
      %v1361 = vld [vmem:[%s1 + $0x1ac] sm:$0xf]
      %v1362 = vld [vmem:[%s1 + $0x1b0] sm:$0xf]
      %v1363 = vld [vmem:[%s1 + $0x1b4] sm:$0xf]
      %v1364 = vld [vmem:[%s1 + $0x1b8] sm:$0xf]
      %v1365 = vld [vmem:[%s1 + $0x1bc] sm:$0xf]
      %v1366 = vld [vmem:[%s1 + $0x1c0] sm:$0xf]
      %v1367 = vld [vmem:[%s1 + $0x1c4] sm:$0xf]
      %v1368 = vld [vmem:[%s1 + $0x1c8] sm:$0xf]
      %v1369 = vld [vmem:[%s1 + $0x1cc] sm:$0xf]
      %v1370 = vld [vmem:[%s1 + $0x1d0] sm:$0xf]
      %v1371 = vld [vmem:[%s1 + $0x1d4] sm:$0xf]
      %v1372 = vld [vmem:[%s1 + $0x1d8] sm:$0xf]
      %v1373 = vld [vmem:[%s1 + $0x1dc] sm:$0xf]
      %v1374 = vld [vmem:[%s1 + $0x1e0] sm:$0xf]
      %v1375 = vld [vmem:[%s1 + $0x1e4] sm:$0xf]
      %v1376 = vld [vmem:[%s1 + $0x1e8] sm:$0xf]
      %v1377 = vld [vmem:[%s1 + $0x1ec] sm:$0xf]
      %v1378 = vld [vmem:[%s1 + $0x1f0] sm:$0xf]
      %v1379 = vld [vmem:[%s1 + $0x1f4] sm:$0xf]
      %v1380 = vld [vmem:[%s1 + $0x1f8] sm:$0xf]
      %v1381 = vld [vmem:[%s1 + $0x1fc] sm:$0xf]
      %v1382 = vld [vmem:[%s1 + $0x200] sm:$0xf]
      %v1383 = vld [vmem:[%s1 + $0x204] sm:$0xf]
      %v1384 = vld [vmem:[%s1 + $0x208] sm:$0xf]
      %v1385 = vld [vmem:[%s1 + $0x20c] sm:$0xf]
      %v1386 = vld [vmem:[%s1 + $0x210] sm:$0xf]
      %v1387 = vld [vmem:[%s1 + $0x214] sm:$0xf]
      %v1388 = vld [vmem:[%s1 + $0x218] sm:$0xf]
      %v1389 = vld [vmem:[%s1 + $0x21c] sm:$0xf]
      %v1390 = vld [vmem:[%s1 + $0x220] sm:$0xf]
      %v1391 = vld [vmem:[%s1 + $0x224] sm:$0xf]
      %v1392 = vld [vmem:[%s1 + $0x228] sm:$0xf]
      %v1393 = vld [vmem:[%s1 + $0x22c] sm:$0xf]
      %v1394 = vld [vmem:[%s1 + $0x230] sm:$0xf]
      %v1395 = vld [vmem:[%s1 + $0x234] sm:$0xf]
      %v1396 = vld [vmem:[%s1 + $0x238] sm:$0xf]
      %v1397 = vld [vmem:[%s1 + $0x23c] sm:$0xf]
      %v1398 = vunpack.c.l.bf16 %v264
      %v1399 = vunpack.c.l.bf16 %v228
      %v1400 = vunpack.c.l.bf16 %v229
      %v1401 = vunpack.c.l.bf16 %v230
      %v1402 = vunpack.c.l.bf16 %v231
      %v1403 = vunpack.c.l.bf16 %v232
      %v1404 = vunpack.c.l.bf16 %v233
      %v1405 = vunpack.c.l.bf16 %v234
      %v1406 = vunpack.c.l.bf16 %v235
      %v1407 = vunpack.c.l.bf16 %v236
      %v1408 = vunpack.c.l.bf16 %v237
      %v1409 = vunpack.c.l.bf16 %v238
      %v1410 = vunpack.c.l.bf16 %v239
      %v1411 = vunpack.c.l.bf16 %v240
      %v1412 = vunpack.c.l.bf16 %v241
      %v1413 = vunpack.c.l.bf16 %v242
      %v1414 = vunpack.c.l.bf16 %v243
      %v1415 = vunpack.c.l.bf16 %v244
      %v1416 = vunpack.c.l.bf16 %v245
      %v1417 = vunpack.c.l.bf16 %v246
      %v1418 = vunpack.c.l.bf16 %v247
      %v1419 = vunpack.c.l.bf16 %v248
      %v1420 = vunpack.c.l.bf16 %v249
      %v1421 = vunpack.c.l.bf16 %v250
      %v1422 = vunpack.c.l.bf16 %v251
      %v1423 = vunpack.c.l.bf16 %v252
      %v1424 = vunpack.c.l.bf16 %v253
      %v1425 = vunpack.c.l.bf16 %v254
      %v1426 = vunpack.c.l.bf16 %v255
      %v1427 = vunpack.c.l.bf16 %v256
      %v1428 = vunpack.c.l.bf16 %v257
      %v1429 = vunpack.c.l.bf16 %v258
      %v1430 = vunpack.c.l.bf16 %v259
      %v1431 = vunpack.c.l.bf16 %v260
      %v1432 = vunpack.c.l.bf16 %v261
      %v1433 = vunpack.c.l.bf16 %v265
      %v1434 = vunpack.c.l.bf16 %v266
      %v1435 = vunpack.c.l.bf16 %v268
      %v1436 = vld [vmem:[%s2] sm:$0x1]
      %v1438 = vperm.slane %v1436, 0
      %v1584 = vunpack.c.l.b16 %v1254
      %v1585 = vunpack.c.l.b16 %v1255
      %v1586 = vunpack.c.l.b16 %v1256
      %v1587 = vunpack.c.l.b16 %v1257
      %v1588 = vunpack.c.l.b16 %v1258
      %v1589 = vunpack.c.l.b16 %v1259
      %v1590 = vunpack.c.l.b16 %v1260
      %v1591 = vunpack.c.l.b16 %v1261
      %v1592 = vunpack.c.l.b16 %v1262
      %v1593 = vunpack.c.l.b16 %v1263
      %v1594 = vunpack.c.l.b16 %v1264
      %v1595 = vunpack.c.l.b16 %v1265
      %v1596 = vunpack.c.l.b16 %v1266
      %v1597 = vunpack.c.l.b16 %v1267
      %v1598 = vunpack.c.l.b16 %v1268
      %v1599 = vunpack.c.l.b16 %v1269
      %v1600 = vunpack.c.l.b16 %v1270
      %v1601 = vunpack.c.l.b16 %v1271
      %v1602 = vunpack.c.l.b16 %v1272
      %v1603 = vunpack.c.l.b16 %v1273
      %v1604 = vunpack.c.l.b16 %v1274
      %v1605 = vunpack.c.l.b16 %v1275
      %v1606 = vunpack.c.l.b16 %v1276
      %v1607 = vunpack.c.l.b16 %v1277
      %v1608 = vunpack.c.l.b16 %v1278
      %v1609 = vunpack.c.l.b16 %v1279
      %v1610 = vunpack.c.l.b16 %v1280
      %v1611 = vunpack.c.l.b16 %v1281
      %v1612 = vunpack.c.l.b16 %v1282
      %v1613 = vunpack.c.l.b16 %v1283
      %v1614 = vunpack.c.l.b16 %v1284
      %v1615 = vunpack.c.l.b16 %v1285
      %v1616 = vunpack.c.l.b16 %v1286
      %v1617 = vunpack.c.l.b16 %v1287
      %v1618 = vunpack.c.l.b16 %v1288
      %v1619 = vunpack.c.l.b16 %v1289
      %v1620 = vunpack.c.l.b16 %v1290
      %v1621 = vunpack.c.l.b16 %v1291
      %v1622 = vunpack.c.l.b16 %v1292
      %v1623 = vunpack.c.l.b16 %v1293
      %v1624 = vunpack.c.l.b16 %v1294
      %v1625 = vunpack.c.l.b16 %v1295
      %v1626 = vunpack.c.l.b16 %v1296
      %v1627 = vunpack.c.l.b16 %v1297
      %v1628 = vunpack.c.l.b16 %v1298
      %v1629 = vunpack.c.l.b16 %v1299
      %v1630 = vunpack.c.l.b16 %v1300
      %v1631 = vunpack.c.l.b16 %v1301
      %v1632 = vunpack.c.l.b16 %v1302
      %v1633 = vunpack.c.l.b16 %v1303
      %v1634 = vunpack.c.l.b16 %v1304
      %v1635 = vunpack.c.l.b16 %v1305
      %v1636 = vunpack.c.l.b16 %v1306
      %v1637 = vunpack.c.l.b16 %v1307
      %v1638 = vunpack.c.l.b16 %v1308
      %v1639 = vunpack.c.l.b16 %v1309
      %v1640 = vunpack.c.l.b16 %v1310
      %v1641 = vunpack.c.l.b16 %v1311
      %v1642 = vunpack.c.l.b16 %v1312
      %v1643 = vunpack.c.l.b16 %v1313
      %v1644 = vunpack.c.l.b16 %v1314
      %v1645 = vunpack.c.l.b16 %v1315
      %v1646 = vunpack.c.l.b16 %v1316
      %v1647 = vunpack.c.l.b16 %v1317
      %v1648 = vunpack.c.l.b16 %v1318
      %v1649 = vunpack.c.l.b16 %v1319
      %v1650 = vunpack.c.l.b16 %v1320
      %v1651 = vunpack.c.l.b16 %v1321
      %v1652 = vunpack.c.l.b16 %v1322
      %v1653 = vunpack.c.l.b16 %v1323
      %v1654 = vunpack.c.l.b16 %v1324
      %v1655 = vunpack.c.l.b16 %v1325
      %v1656 = vunpack.c.l.b16 %v1326
      %v1657 = vunpack.c.l.b16 %v1327
      %v1658 = vunpack.c.l.b16 %v1328
      %v1659 = vunpack.c.l.b16 %v1329
      %v1660 = vunpack.c.l.b16 %v1330
      %v1661 = vunpack.c.l.b16 %v1331
      %v1662 = vunpack.c.l.b16 %v1332
      %v1663 = vunpack.c.l.b16 %v1333
      %v1664 = vunpack.c.l.b16 %v1334
      %v1665 = vunpack.c.l.b16 %v1335
      %v1666 = vunpack.c.l.b16 %v1336
      %v1667 = vunpack.c.l.b16 %v1337
      %v1668 = vunpack.c.l.b16 %v1338
      %v1669 = vunpack.c.l.b16 %v1339
      %v1670 = vunpack.c.l.b16 %v1340
      %v1671 = vunpack.c.l.b16 %v1341
      %v1672 = vunpack.c.l.b16 %v1342
      %v1673 = vunpack.c.l.b16 %v1343
      %v1674 = vunpack.c.l.b16 %v1344
      %v1675 = vunpack.c.l.b16 %v1345
      %v1676 = vunpack.c.l.b16 %v1346
      %v1677 = vunpack.c.l.b16 %v1347
      %v1678 = vunpack.c.l.b16 %v1348
      %v1679 = vunpack.c.l.b16 %v1349
      %v1680 = vunpack.c.l.b16 %v1350
      %v1681 = vunpack.c.l.b16 %v1351
      %v1682 = vunpack.c.l.b16 %v1352
      %v1683 = vunpack.c.l.b16 %v1353
      %v1684 = vunpack.c.l.b16 %v1354
      %v1685 = vunpack.c.l.b16 %v1355
      %v1686 = vunpack.c.l.b16 %v1356
      %v1687 = vunpack.c.l.b16 %v1357
      %v1688 = vunpack.c.l.b16 %v1358
      %v1689 = vunpack.c.l.b16 %v1359
      %v1690 = vunpack.c.l.b16 %v1360
      %v1691 = vunpack.c.l.b16 %v1361
      %v1692 = vunpack.c.l.b16 %v1362
      %v1693 = vunpack.c.l.b16 %v1363
      %v1694 = vunpack.c.l.b16 %v1364
      %v1695 = vunpack.c.l.b16 %v1365
      %v1696 = vunpack.c.l.b16 %v1366
      %v1697 = vunpack.c.l.b16 %v1367
      %v1698 = vunpack.c.l.b16 %v1368
      %v1699 = vunpack.c.l.b16 %v1369
      %v1700 = vunpack.c.l.b16 %v1370
      %v1701 = vunpack.c.l.b16 %v1371
      %v1702 = vunpack.c.l.b16 %v1372
      %v1703 = vunpack.c.l.b16 %v1373
      %v1704 = vunpack.c.l.b16 %v1374
      %v1705 = vunpack.c.l.b16 %v1375
      %v1706 = vunpack.c.l.b16 %v1376
      %v1707 = vunpack.c.l.b16 %v1377
      %v1708 = vunpack.c.l.b16 %v1378
      %v1709 = vunpack.c.l.b16 %v1379
      %v1710 = vunpack.c.l.b16 %v1380
      %v1711 = vunpack.c.l.b16 %v1381
      %v1712 = vunpack.c.l.b16 %v1382
      %v1713 = vunpack.c.l.b16 %v1383
      %v1714 = vunpack.c.l.b16 %v1384
      %v1715 = vunpack.c.l.b16 %v1385
      %v1716 = vunpack.c.l.b16 %v1386
      %v1717 = vunpack.c.l.b16 %v1387
      %v1718 = vunpack.c.l.b16 %v1388
      %v1719 = vunpack.c.l.b16 %v1389
      %v1720 = vunpack.c.l.b16 %v1390
      %v1721 = vunpack.c.l.b16 %v1391
      %v1722 = vunpack.c.l.b16 %v1392
      %v1723 = vunpack.c.l.b16 %v1393
      %v1724 = vunpack.c.l.b16 %v1394
      %v1725 = vunpack.c.l.b16 %v1395
      %v1726 = vunpack.c.l.b16 %v1396
      %v1727 = vunpack.c.l.b16 %v1397
      %v1728 = vpack.c.b16 %v1585, %v1584
      %v1729 = vpack.c.b16 %v1587, %v1586
      %v1730 = vpack.c.b16 %v1589, %v1588
      %v1731 = vpack.c.b16 %v1591, %v1590
      %v1732 = vpack.c.b16 %v1593, %v1592
      %v1733 = vpack.c.b16 %v1595, %v1594
      %v1734 = vpack.c.b16 %v1597, %v1596
      %v1735 = vpack.c.b16 %v1599, %v1598
      %v1736 = vpack.c.b16 %v1601, %v1600
      %v1737 = vpack.c.b16 %v1603, %v1602
      %v1738 = vpack.c.b16 %v1605, %v1604
      %v1739 = vpack.c.b16 %v1607, %v1606
      %v1740 = vpack.c.b16 %v1609, %v1608
      %v1741 = vpack.c.b16 %v1611, %v1610
      %v1742 = vpack.c.b16 %v1613, %v1612
      %v1743 = vpack.c.b16 %v1615, %v1614
      %v1744 = vpack.c.b16 %v1617, %v1616
      %v1745 = vpack.c.b16 %v1619, %v1618
      %v1746 = vpack.c.b16 %v1621, %v1620
      %v1747 = vpack.c.b16 %v1623, %v1622
      %v1748 = vpack.c.b16 %v1625, %v1624
      %v1749 = vpack.c.b16 %v1627, %v1626
      %v1750 = vpack.c.b16 %v1629, %v1628
      %v1751 = vpack.c.b16 %v1631, %v1630
      %v1752 = vpack.c.b16 %v1633, %v1632
      %v1753 = vpack.c.b16 %v1635, %v1634
      %v1754 = vpack.c.b16 %v1637, %v1636
      %v1755 = vpack.c.b16 %v1639, %v1638
      %v1756 = vpack.c.b16 %v1641, %v1640
      %v1757 = vpack.c.b16 %v1643, %v1642
      %v1758 = vpack.c.b16 %v1645, %v1644
      %v1759 = vpack.c.b16 %v1647, %v1646
      %v1760 = vpack.c.b16 %v1649, %v1648
      %v1761 = vpack.c.b16 %v1651, %v1650
      %v1762 = vpack.c.b16 %v1653, %v1652
      %v1763 = vpack.c.b16 %v1655, %v1654
      %v1764 = vpack.c.b16 %v1657, %v1656
      %v1765 = vpack.c.b16 %v1659, %v1658
      %v1766 = vpack.c.b16 %v1661, %v1660
      %v1767 = vpack.c.b16 %v1663, %v1662
      %v1768 = vpack.c.b16 %v1665, %v1664
      %v1769 = vpack.c.b16 %v1667, %v1666
      %v1770 = vpack.c.b16 %v1669, %v1668
      %v1771 = vpack.c.b16 %v1671, %v1670
      %v1772 = vpack.c.b16 %v1673, %v1672
      %v1773 = vpack.c.b16 %v1675, %v1674
      %v1774 = vpack.c.b16 %v1677, %v1676
      %v1775 = vpack.c.b16 %v1679, %v1678
      %v1776 = vpack.c.b16 %v1681, %v1680
      %v1777 = vpack.c.b16 %v1683, %v1682
      %v1778 = vpack.c.b16 %v1685, %v1684
      %v1779 = vpack.c.b16 %v1687, %v1686
      %v1780 = vpack.c.b16 %v1689, %v1688
      %v1781 = vpack.c.b16 %v1691, %v1690
      %v1782 = vpack.c.b16 %v1693, %v1692
      %v1783 = vpack.c.b16 %v1695, %v1694
      %v1784 = vpack.c.b16 %v1697, %v1696
      %v1785 = vpack.c.b16 %v1699, %v1698
      %v1786 = vpack.c.b16 %v1701, %v1700
      %v1787 = vpack.c.b16 %v1703, %v1702
      %v1788 = vpack.c.b16 %v1705, %v1704
      %v1789 = vpack.c.b16 %v1707, %v1706
      %v1790 = vpack.c.b16 %v1709, %v1708
      %v1791 = vpack.c.b16 %v1711, %v1710
      %v1792 = vpack.c.b16 %v1713, %v1712
      %v1793 = vpack.c.b16 %v1715, %v1714
      %v1794 = vpack.c.b16 %v1717, %v1716
      %v1795 = vpack.c.b16 %v1719, %v1718
      %v1796 = vpack.c.b16 %v1721, %v1720
      %v1797 = vpack.c.b16 %v1723, %v1722
      %v1798 = vpack.c.b16 %v1725, %v1724
      %v1799 = vpack.c.b16 %v1727, %v1726
      %1872 = vmatpush.bf16.msra.mxu0 %v1735
      %1873 = vmatpush.bf16.msra.mxu0 %v1734
      %1874 = vmatpush.bf16.msra.mxu0 %v1733
      %1875 = vmatpush.bf16.msra.mxu0 %v1732
      %1876 = vmatpush.bf16.msra.mxu0 %v1731
      %1877 = vmatpush.bf16.msra.mxu0 %v1730
      %1878 = vmatpush.bf16.msra.mxu0 %v1729
      %1879 = vmatpush.bf16.msra.mxu0 %v1728
      %1880 = vmatmul.bf16.gmra.mxu0 %v384
      %v1881 = vpop.f32.mrf.mxu0
      %v1882 = vadd.f32 %v1438, %v1881
      %v1883 = vpop.f32.mrf.mxu0
      %v1884 = vadd.f32 %v1438, %v1883
      %1885 = vmatmul.bf16.gmra.mxu0 %v385
      %v1886 = vpop.f32.mrf.mxu0
      %v1887 = vadd.f32 %v1438, %v1886
      %v1888 = vpop.f32.mrf.mxu0
      %v1889 = vadd.f32 %v1438, %v1888
      %1890 = vmatmul.bf16.gmra.mxu0 %v386
      %v1891 = vpop.f32.mrf.mxu0
      %v1892 = vadd.f32 %v1438, %v1891
      %v1893 = vpop.f32.mrf.mxu0
      %v1894 = vadd.f32 %v1438, %v1893
      %1895 = vmatmul.bf16.gmra.mxu0 %v387
      %v1896 = vpop.f32.mrf.mxu0
      %v1897 = vadd.f32 %v1438, %v1896
      %v1898 = vpop.f32.mrf.mxu0
      %v1899 = vadd.f32 %v1438, %v1898
      %1900 = vmatmul.bf16.gmra.mxu0 %v388
      %v1901 = vpop.f32.mrf.mxu0
      %v1902 = vadd.f32 %v1438, %v1901
      %v1903 = vpop.f32.mrf.mxu0
      %v1904 = vadd.f32 %v1438, %v1903
      %1905 = vmatmul.bf16.gmra.mxu0 %v389
      %v1906 = vpop.f32.mrf.mxu0
      %v1907 = vadd.f32 %v1438, %v1906
      %v1908 = vpop.f32.mrf.mxu0
      %v1909 = vadd.f32 %v1438, %v1908
      %1910 = vmatmul.bf16.gmra.mxu0 %v390
      %v1911 = vpop.f32.mrf.mxu0
      %v1912 = vadd.f32 %v1438, %v1911
      %v1913 = vpop.f32.mrf.mxu0
      %v1914 = vadd.f32 %v1438, %v1913
      %1915 = vmatmul.bf16.gmra.mxu0 %v391
      %v1916 = vpop.f32.mrf.mxu0
      %v1917 = vadd.f32 %v1438, %v1916
      %v1918 = vpop.f32.mrf.mxu0
      %v1919 = vadd.f32 %v1438, %v1918
      %1920 = vmatmul.bf16.gmra.mxu0 %v392
      %v1921 = vpop.f32.mrf.mxu0
      %v1922 = vadd.f32 %v1438, %v1921
      %v1923 = vpop.f32.mrf.mxu0
      %v1924 = vadd.f32 %v1438, %v1923
      %1925 = vmatmul.bf16.gmra.mxu0 %v393
      %v1926 = vpop.f32.mrf.mxu0
      %v1927 = vadd.f32 %v1438, %v1926
      %v1928 = vpop.f32.mrf.mxu0
      %v1929 = vadd.f32 %v1438, %v1928
      %1930 = vmatmul.bf16.gmra.mxu0 %v394
      %v1931 = vpop.f32.mrf.mxu0
      %v1932 = vadd.f32 %v1438, %v1931
      %v1933 = vpop.f32.mrf.mxu0
      %v1934 = vadd.f32 %v1438, %v1933
      %1935 = vmatmul.bf16.gmra.mxu0 %v395
      %v1936 = vpop.f32.mrf.mxu0
      %v1937 = vadd.f32 %v1438, %v1936
      %v1938 = vpop.f32.mrf.mxu0
      %v1939 = vadd.f32 %v1438, %v1938
      %1940 = vmatmul.bf16.gmra.mxu0 %v396
      %v1941 = vpop.f32.mrf.mxu0
      %v1942 = vadd.f32 %v1438, %v1941
      %v1943 = vpop.f32.mrf.mxu0
      %v1944 = vadd.f32 %v1438, %v1943
      %1945 = vmatmul.bf16.gmra.mxu0 %v397
      %v1946 = vpop.f32.mrf.mxu0
      %v1947 = vadd.f32 %v1438, %v1946
      %v1948 = vpop.f32.mrf.mxu0
      %v1949 = vadd.f32 %v1438, %v1948
      %1950 = vmatmul.bf16.gmra.mxu0 %v398
      %v1951 = vpop.f32.mrf.mxu0
      %v1952 = vadd.f32 %v1438, %v1951
      %v1953 = vpop.f32.mrf.mxu0
      %v1954 = vadd.f32 %v1438, %v1953
      %1955 = vmatmul.bf16.gmra.mxu0 %v399
      %v1956 = vpop.f32.mrf.mxu0
      %v1957 = vadd.f32 %v1438, %v1956
      %v1958 = vpop.f32.mrf.mxu0
      %v1959 = vadd.f32 %v1438, %v1958
      %1960 = vmatmul.bf16.gmra.mxu0 %v400
      %v1961 = vpop.f32.mrf.mxu0
      %v1962 = vadd.f32 %v1438, %v1961
      %v1963 = vpop.f32.mrf.mxu0
      %v1964 = vadd.f32 %v1438, %v1963
      %1965 = vmatmul.bf16.gmra.mxu0 %v401
      %v1966 = vpop.f32.mrf.mxu0
      %v1967 = vadd.f32 %v1438, %v1966
      %v1968 = vpop.f32.mrf.mxu0
      %v1969 = vadd.f32 %v1438, %v1968
      %1970 = vmatmul.bf16.gmra.mxu0 %v402
      %v1971 = vpop.f32.mrf.mxu0
      %v1972 = vadd.f32 %v1438, %v1971
      %v1973 = vpop.f32.mrf.mxu0
      %1974 = vdwg.mxu0
      %1975 = vmatpush.bf16.msra.mxu0 %v1743
      %1976 = vmatpush.bf16.msra.mxu0 %v1742
      %1977 = vmatpush.bf16.msra.mxu0 %v1741
      %1978 = vmatpush.bf16.msra.mxu0 %v1740
      %1979 = vmatpush.bf16.msra.mxu0 %v1739
      %1980 = vmatpush.bf16.msra.mxu0 %v1738
      %1981 = vmatpush.bf16.msra.mxu0 %v1737
      %1982 = vmatpush.bf16.msra.mxu0 %v1736
      %1983 = vmatmul.bf16.gmra.mxu0 %v437
      %v1984 = vpop.f32.mrf.mxu0
      %v1985 = vadd.f32 %v1882, %v1984
      %v1986 = vpop.f32.mrf.mxu0
      %v1987 = vadd.f32 %v1884, %v1986
      %1988 = vmatmul.bf16.gmra.mxu0 %v445
      %v1989 = vpop.f32.mrf.mxu0
      %v1990 = vadd.f32 %v1887, %v1989
      %v1991 = vpop.f32.mrf.mxu0
      %v1992 = vadd.f32 %v1889, %v1991
      %1993 = vmatmul.bf16.gmra.mxu0 %v453
      %v1994 = vpop.f32.mrf.mxu0
      %v1995 = vadd.f32 %v1892, %v1994
      %v1996 = vpop.f32.mrf.mxu0
      %v1997 = vadd.f32 %v1894, %v1996
      %1998 = vmatmul.bf16.gmra.mxu0 %v461
      %v1999 = vpop.f32.mrf.mxu0
      %v2000 = vadd.f32 %v1897, %v1999
      %v2001 = vpop.f32.mrf.mxu0
      %v2002 = vadd.f32 %v1899, %v2001
      %2003 = vmatmul.bf16.gmra.mxu0 %v469
      %v2004 = vpop.f32.mrf.mxu0
      %v2005 = vadd.f32 %v1902, %v2004
      %v2006 = vpop.f32.mrf.mxu0
      %v2007 = vadd.f32 %v1904, %v2006
      %2008 = vmatmul.bf16.gmra.mxu0 %v477
      %v2009 = vpop.f32.mrf.mxu0
      %v2010 = vadd.f32 %v1907, %v2009
      %v2011 = vpop.f32.mrf.mxu0
      %v2012 = vadd.f32 %v1909, %v2011
      %2013 = vmatmul.bf16.gmra.mxu0 %v485
      %v2014 = vpop.f32.mrf.mxu0
      %v2015 = vadd.f32 %v1912, %v2014
      %v2016 = vpop.f32.mrf.mxu0
      %v2017 = vadd.f32 %v1914, %v2016
      %2018 = vmatmul.bf16.gmra.mxu0 %v493
      %v2019 = vpop.f32.mrf.mxu0
      %v2020 = vadd.f32 %v1917, %v2019
      %v2021 = vpop.f32.mrf.mxu0
      %v2022 = vadd.f32 %v1919, %v2021
      %2023 = vmatmul.bf16.gmra.mxu0 %v501
      %v2024 = vpop.f32.mrf.mxu0
      %v2025 = vadd.f32 %v1922, %v2024
      %v2026 = vpop.f32.mrf.mxu0
      %v2027 = vadd.f32 %v1924, %v2026
      %2028 = vmatmul.bf16.gmra.mxu0 %v509
      %v2029 = vpop.f32.mrf.mxu0
      %v2030 = vadd.f32 %v1927, %v2029
      %v2031 = vpop.f32.mrf.mxu0
      %v2032 = vadd.f32 %v1929, %v2031
      %2033 = vmatmul.bf16.gmra.mxu0 %v517
      %v2034 = vpop.f32.mrf.mxu0
      %v2035 = vadd.f32 %v1932, %v2034
      %v2036 = vpop.f32.mrf.mxu0
      %v2037 = vadd.f32 %v1934, %v2036
      %2038 = vmatmul.bf16.gmra.mxu0 %v525
      %v2039 = vpop.f32.mrf.mxu0
      %v2040 = vadd.f32 %v1937, %v2039
      %v2041 = vpop.f32.mrf.mxu0
      %v2042 = vadd.f32 %v1939, %v2041
      %2043 = vmatmul.bf16.gmra.mxu0 %v533
      %v2044 = vpop.f32.mrf.mxu0
      %v2045 = vadd.f32 %v1942, %v2044
      %v2046 = vpop.f32.mrf.mxu0
      %v2047 = vadd.f32 %v1944, %v2046
      %2048 = vmatmul.bf16.gmra.mxu0 %v541
      %v2049 = vpop.f32.mrf.mxu0
      %v2050 = vadd.f32 %v1947, %v2049
      %v2051 = vpop.f32.mrf.mxu0
      %v2052 = vadd.f32 %v1949, %v2051
      %2053 = vmatmul.bf16.gmra.mxu0 %v549
      %v2054 = vpop.f32.mrf.mxu0
      %v2055 = vadd.f32 %v1952, %v2054
      %v2056 = vpop.f32.mrf.mxu0
      %v2057 = vadd.f32 %v1954, %v2056
      %2058 = vmatmul.bf16.gmra.mxu0 %v557
      %v2059 = vpop.f32.mrf.mxu0
      %v2060 = vadd.f32 %v1957, %v2059
      %v2061 = vpop.f32.mrf.mxu0
      %v2062 = vadd.f32 %v1959, %v2061
      %2063 = vmatmul.bf16.gmra.mxu0 %v565
      %v2064 = vpop.f32.mrf.mxu0
      %v2065 = vadd.f32 %v1962, %v2064
      %v2066 = vpop.f32.mrf.mxu0
      %v2067 = vadd.f32 %v1964, %v2066
      %2068 = vmatmul.bf16.gmra.mxu0 %v573
      %v2069 = vpop.f32.mrf.mxu0
      %v2070 = vadd.f32 %v1967, %v2069
      %v2071 = vpop.f32.mrf.mxu0
      %v2072 = vadd.f32 %v1969, %v2071
      %2073 = vmatmul.bf16.gmra.mxu0 %v576
      %v2074 = vpop.f32.mrf.mxu0
      %v2075 = vadd.f32 %v1972, %v2074
      %v2076 = vpop.f32.mrf.mxu0
      %2077 = vdwg.mxu0
      %2078 = vmatpush.bf16.msra.mxu0 %v1751
      %2079 = vmatpush.bf16.msra.mxu0 %v1750
      %2080 = vmatpush.bf16.msra.mxu0 %v1749
      %2081 = vmatpush.bf16.msra.mxu0 %v1748
      %2082 = vmatpush.bf16.msra.mxu0 %v1747
      %2083 = vmatpush.bf16.msra.mxu0 %v1746
      %2084 = vmatpush.bf16.msra.mxu0 %v1745
      %2085 = vmatpush.bf16.msra.mxu0 %v1744
      %2086 = vmatmul.bf16.gmra.mxu0 %v602
      %v2087 = vpop.f32.mrf.mxu0
      %v2088 = vadd.f32 %v1985, %v2087
      %v2089 = vpop.f32.mrf.mxu0
      %v2090 = vadd.f32 %v1987, %v2089
      %2091 = vmatmul.bf16.gmra.mxu0 %v604
      %v2092 = vpop.f32.mrf.mxu0
      %v2093 = vadd.f32 %v1990, %v2092
      %v2094 = vpop.f32.mrf.mxu0
      %v2095 = vadd.f32 %v1992, %v2094
      %2096 = vmatmul.bf16.gmra.mxu0 %v606
      %v2097 = vpop.f32.mrf.mxu0
      %v2098 = vadd.f32 %v1995, %v2097
      %v2099 = vpop.f32.mrf.mxu0
      %v2100 = vadd.f32 %v1997, %v2099
      %2101 = vmatmul.bf16.gmra.mxu0 %v608
      %v2102 = vpop.f32.mrf.mxu0
      %v2103 = vadd.f32 %v2000, %v2102
      %v2104 = vpop.f32.mrf.mxu0
      %v2105 = vadd.f32 %v2002, %v2104
      %2106 = vmatmul.bf16.gmra.mxu0 %v610
      %v2107 = vpop.f32.mrf.mxu0
      %v2108 = vadd.f32 %v2005, %v2107
      %v2109 = vpop.f32.mrf.mxu0
      %v2110 = vadd.f32 %v2007, %v2109
      %2111 = vmatmul.bf16.gmra.mxu0 %v612
      %v2112 = vpop.f32.mrf.mxu0
      %v2113 = vadd.f32 %v2010, %v2112
      %v2114 = vpop.f32.mrf.mxu0
      %v2115 = vadd.f32 %v2012, %v2114
      %2116 = vmatmul.bf16.gmra.mxu0 %v614
      %v2117 = vpop.f32.mrf.mxu0
      %v2118 = vadd.f32 %v2015, %v2117
      %v2119 = vpop.f32.mrf.mxu0
      %v2120 = vadd.f32 %v2017, %v2119
      %2121 = vmatmul.bf16.gmra.mxu0 %v616
      %v2122 = vpop.f32.mrf.mxu0
      %v2123 = vadd.f32 %v2020, %v2122
      %v2124 = vpop.f32.mrf.mxu0
      %v2125 = vadd.f32 %v2022, %v2124
      %2126 = vmatmul.bf16.gmra.mxu0 %v618
      %v2127 = vpop.f32.mrf.mxu0
      %v2128 = vadd.f32 %v2025, %v2127
      %v2129 = vpop.f32.mrf.mxu0
      %v2130 = vadd.f32 %v2027, %v2129
      %2131 = vmatmul.bf16.gmra.mxu0 %v620
      %v2132 = vpop.f32.mrf.mxu0
      %v2133 = vadd.f32 %v2030, %v2132
      %v2134 = vpop.f32.mrf.mxu0
      %v2135 = vadd.f32 %v2032, %v2134
      %2136 = vmatmul.bf16.gmra.mxu0 %v622
      %v2137 = vpop.f32.mrf.mxu0
      %v2138 = vadd.f32 %v2035, %v2137
      %v2139 = vpop.f32.mrf.mxu0
      %v2140 = vadd.f32 %v2037, %v2139
      %2141 = vmatmul.bf16.gmra.mxu0 %v624
      %v2142 = vpop.f32.mrf.mxu0
      %v2143 = vadd.f32 %v2040, %v2142
      %v2144 = vpop.f32.mrf.mxu0
      %v2145 = vadd.f32 %v2042, %v2144
      %2146 = vmatmul.bf16.gmra.mxu0 %v626
      %v2147 = vpop.f32.mrf.mxu0
      %v2148 = vadd.f32 %v2045, %v2147
      %v2149 = vpop.f32.mrf.mxu0
      %v2150 = vadd.f32 %v2047, %v2149
      %2151 = vmatmul.bf16.gmra.mxu0 %v628
      %v2152 = vpop.f32.mrf.mxu0
      %v2153 = vadd.f32 %v2050, %v2152
      %v2154 = vpop.f32.mrf.mxu0
      %v2155 = vadd.f32 %v2052, %v2154
      %2156 = vmatmul.bf16.gmra.mxu0 %v630
      %v2157 = vpop.f32.mrf.mxu0
      %v2158 = vadd.f32 %v2055, %v2157
      %v2159 = vpop.f32.mrf.mxu0
      %v2160 = vadd.f32 %v2057, %v2159
      %2161 = vmatmul.bf16.gmra.mxu0 %v632
      %v2162 = vpop.f32.mrf.mxu0
      %v2163 = vadd.f32 %v2060, %v2162
      %v2164 = vpop.f32.mrf.mxu0
      %v2165 = vadd.f32 %v2062, %v2164
      %2166 = vmatmul.bf16.gmra.mxu0 %v634
      %v2167 = vpop.f32.mrf.mxu0
      %v2168 = vadd.f32 %v2065, %v2167
      %v2169 = vpop.f32.mrf.mxu0
      %v2170 = vadd.f32 %v2067, %v2169
      %2171 = vmatmul.bf16.gmra.mxu0 %v636
      %v2172 = vpop.f32.mrf.mxu0
      %v2173 = vadd.f32 %v2070, %v2172
      %v2174 = vpop.f32.mrf.mxu0
      %v2175 = vadd.f32 %v2072, %v2174
      %2176 = vmatmul.bf16.gmra.mxu0 %v635
      %v2177 = vpop.f32.mrf.mxu0
      %v2178 = vadd.f32 %v2075, %v2177
      %v2179 = vpop.f32.mrf.mxu0
      %2180 = vdwg.mxu0
      %2181 = vmatpush.bf16.msra.mxu0 %v1759
      %2182 = vmatpush.bf16.msra.mxu0 %v1758
      %2183 = vmatpush.bf16.msra.mxu0 %v1757
      %2184 = vmatpush.bf16.msra.mxu0 %v1756
      %2185 = vmatpush.bf16.msra.mxu0 %v1755
      %2186 = vmatpush.bf16.msra.mxu0 %v1754
      %2187 = vmatpush.bf16.msra.mxu0 %v1753
      %2188 = vmatpush.bf16.msra.mxu0 %v1752
      %2189 = vmatmul.bf16.gmra.mxu0 %v668
      %v2190 = vpop.f32.mrf.mxu0
      %v2191 = vadd.f32 %v2088, %v2190
      %v2192 = vpop.f32.mrf.mxu0
      %v2193 = vadd.f32 %v2090, %v2192
      %2194 = vmatmul.bf16.gmra.mxu0 %v606
      %v2195 = vpop.f32.mrf.mxu0
      %v2196 = vadd.f32 %v2093, %v2195
      %v2197 = vpop.f32.mrf.mxu0
      %v2198 = vadd.f32 %v2095, %v2197
      %2199 = vmatmul.bf16.gmra.mxu0 %v608
      %v2200 = vpop.f32.mrf.mxu0
      %v2201 = vadd.f32 %v2098, %v2200
      %v2202 = vpop.f32.mrf.mxu0
      %v2203 = vadd.f32 %v2100, %v2202
      %2204 = vmatmul.bf16.gmra.mxu0 %v610
      %v2205 = vpop.f32.mrf.mxu0
      %v2206 = vadd.f32 %v2103, %v2205
      %v2207 = vpop.f32.mrf.mxu0
      %v2208 = vadd.f32 %v2105, %v2207
      %2209 = vmatmul.bf16.gmra.mxu0 %v612
      %v2210 = vpop.f32.mrf.mxu0
      %v2211 = vadd.f32 %v2108, %v2210
      %v2212 = vpop.f32.mrf.mxu0
      %v2213 = vadd.f32 %v2110, %v2212
      %2214 = vmatmul.bf16.gmra.mxu0 %v614
      %v2215 = vpop.f32.mrf.mxu0
      %v2216 = vadd.f32 %v2113, %v2215
      %v2217 = vpop.f32.mrf.mxu0
      %v2218 = vadd.f32 %v2115, %v2217
      %2219 = vmatmul.bf16.gmra.mxu0 %v616
      %v2220 = vpop.f32.mrf.mxu0
      %v2221 = vadd.f32 %v2118, %v2220
      %v2222 = vpop.f32.mrf.mxu0
      %v2223 = vadd.f32 %v2120, %v2222
      %2224 = vmatmul.bf16.gmra.mxu0 %v618
      %v2225 = vpop.f32.mrf.mxu0
      %v2226 = vadd.f32 %v2123, %v2225
      %v2227 = vpop.f32.mrf.mxu0
      %v2228 = vadd.f32 %v2125, %v2227
      %2229 = vmatmul.bf16.gmra.mxu0 %v620
      %v2230 = vpop.f32.mrf.mxu0
      %v2231 = vadd.f32 %v2128, %v2230
      %v2232 = vpop.f32.mrf.mxu0
      %v2233 = vadd.f32 %v2130, %v2232
      %2234 = vmatmul.bf16.gmra.mxu0 %v622
      %v2235 = vpop.f32.mrf.mxu0
      %v2236 = vadd.f32 %v2133, %v2235
      %v2237 = vpop.f32.mrf.mxu0
      %v2238 = vadd.f32 %v2135, %v2237
      %2239 = vmatmul.bf16.gmra.mxu0 %v624
      %v2240 = vpop.f32.mrf.mxu0
      %v2241 = vadd.f32 %v2138, %v2240
      %v2242 = vpop.f32.mrf.mxu0
      %v2243 = vadd.f32 %v2140, %v2242
      %2244 = vmatmul.bf16.gmra.mxu0 %v626
      %v2245 = vpop.f32.mrf.mxu0
      %v2246 = vadd.f32 %v2143, %v2245
      %v2247 = vpop.f32.mrf.mxu0
      %v2248 = vadd.f32 %v2145, %v2247
      %2249 = vmatmul.bf16.gmra.mxu0 %v628
      %v2250 = vpop.f32.mrf.mxu0
      %v2251 = vadd.f32 %v2148, %v2250
      %v2252 = vpop.f32.mrf.mxu0
      %v2253 = vadd.f32 %v2150, %v2252
      %2254 = vmatmul.bf16.gmra.mxu0 %v630
      %v2255 = vpop.f32.mrf.mxu0
      %v2256 = vadd.f32 %v2153, %v2255
      %v2257 = vpop.f32.mrf.mxu0
      %v2258 = vadd.f32 %v2155, %v2257
      %2259 = vmatmul.bf16.gmra.mxu0 %v632
      %v2260 = vpop.f32.mrf.mxu0
      %v2261 = vadd.f32 %v2158, %v2260
      %v2262 = vpop.f32.mrf.mxu0
      %v2263 = vadd.f32 %v2160, %v2262
      %2264 = vmatmul.bf16.gmra.mxu0 %v634
      %v2265 = vpop.f32.mrf.mxu0
      %v2266 = vadd.f32 %v2163, %v2265
      %v2267 = vpop.f32.mrf.mxu0
      %v2268 = vadd.f32 %v2165, %v2267
      %2269 = vmatmul.bf16.gmra.mxu0 %v670
      %v2270 = vpop.f32.mrf.mxu0
      %v2271 = vadd.f32 %v2168, %v2270
      %v2272 = vpop.f32.mrf.mxu0
      %v2273 = vadd.f32 %v2170, %v2272
      %2274 = vmatmul.bf16.gmra.mxu0 %v672
      %v2275 = vpop.f32.mrf.mxu0
      %v2276 = vadd.f32 %v2173, %v2275
      %v2277 = vpop.f32.mrf.mxu0
      %v2278 = vadd.f32 %v2175, %v2277
      %2279 = vmatmul.bf16.gmra.mxu0 %v671
      %v2280 = vpop.f32.mrf.mxu0
      %v2281 = vadd.f32 %v2178, %v2280
      %v2282 = vpop.f32.mrf.mxu0
      %2283 = vdwg.mxu0
      %2284 = vmatpush.bf16.msra.mxu0 %v1767
      %2285 = vmatpush.bf16.msra.mxu0 %v1766
      %2286 = vmatpush.bf16.msra.mxu0 %v1765
      %2287 = vmatpush.bf16.msra.mxu0 %v1764
      %2288 = vmatpush.bf16.msra.mxu0 %v1763
      %2289 = vmatpush.bf16.msra.mxu0 %v1762
      %2290 = vmatpush.bf16.msra.mxu0 %v1761
      %2291 = vmatpush.bf16.msra.mxu0 %v1760
      %2292 = vmatmul.bf16.gmra.mxu0 %v692
      %v2293 = vpop.f32.mrf.mxu0
      %v2294 = vadd.f32 %v2191, %v2293
      %v2295 = vpop.f32.mrf.mxu0
      %v2296 = vadd.f32 %v2193, %v2295
      %2297 = vmatmul.bf16.gmra.mxu0 %v696
      %v2298 = vpop.f32.mrf.mxu0
      %v2299 = vadd.f32 %v2196, %v2298
      %v2300 = vpop.f32.mrf.mxu0
      %v2301 = vadd.f32 %v2198, %v2300
      %2302 = vmatmul.bf16.gmra.mxu0 %v700
      %v2303 = vpop.f32.mrf.mxu0
      %v2304 = vadd.f32 %v2201, %v2303
      %v2305 = vpop.f32.mrf.mxu0
      %v2306 = vadd.f32 %v2203, %v2305
      %2307 = vmatmul.bf16.gmra.mxu0 %v704
      %v2308 = vpop.f32.mrf.mxu0
      %v2309 = vadd.f32 %v2206, %v2308
      %v2310 = vpop.f32.mrf.mxu0
      %v2311 = vadd.f32 %v2208, %v2310
      %2312 = vmatmul.bf16.gmra.mxu0 %v708
      %v2313 = vpop.f32.mrf.mxu0
      %v2314 = vadd.f32 %v2211, %v2313
      %v2315 = vpop.f32.mrf.mxu0
      %v2316 = vadd.f32 %v2213, %v2315
      %2317 = vmatmul.bf16.gmra.mxu0 %v712
      %v2318 = vpop.f32.mrf.mxu0
      %v2319 = vadd.f32 %v2216, %v2318
      %v2320 = vpop.f32.mrf.mxu0
      %v2321 = vadd.f32 %v2218, %v2320
      %2322 = vmatmul.bf16.gmra.mxu0 %v716
      %v2323 = vpop.f32.mrf.mxu0
      %v2324 = vadd.f32 %v2221, %v2323
      %v2325 = vpop.f32.mrf.mxu0
      %v2326 = vadd.f32 %v2223, %v2325
      %2327 = vmatmul.bf16.gmra.mxu0 %v720
      %v2328 = vpop.f32.mrf.mxu0
      %v2329 = vadd.f32 %v2226, %v2328
      %v2330 = vpop.f32.mrf.mxu0
      %v2331 = vadd.f32 %v2228, %v2330
      %2332 = vmatmul.bf16.gmra.mxu0 %v724
      %v2333 = vpop.f32.mrf.mxu0
      %v2334 = vadd.f32 %v2231, %v2333
      %v2335 = vpop.f32.mrf.mxu0
      %v2336 = vadd.f32 %v2233, %v2335
      %2337 = vmatmul.bf16.gmra.mxu0 %v728
      %v2338 = vpop.f32.mrf.mxu0
      %v2339 = vadd.f32 %v2236, %v2338
      %v2340 = vpop.f32.mrf.mxu0
      %v2341 = vadd.f32 %v2238, %v2340
      %2342 = vmatmul.bf16.gmra.mxu0 %v732
      %v2343 = vpop.f32.mrf.mxu0
      %v2344 = vadd.f32 %v2241, %v2343
      %v2345 = vpop.f32.mrf.mxu0
      %v2346 = vadd.f32 %v2243, %v2345
      %2347 = vmatmul.bf16.gmra.mxu0 %v736
      %v2348 = vpop.f32.mrf.mxu0
      %v2349 = vadd.f32 %v2246, %v2348
      %v2350 = vpop.f32.mrf.mxu0
      %v2351 = vadd.f32 %v2248, %v2350
      %2352 = vmatmul.bf16.gmra.mxu0 %v740
      %v2353 = vpop.f32.mrf.mxu0
      %v2354 = vadd.f32 %v2251, %v2353
      %v2355 = vpop.f32.mrf.mxu0
      %v2356 = vadd.f32 %v2253, %v2355
      %2357 = vmatmul.bf16.gmra.mxu0 %v744
      %v2358 = vpop.f32.mrf.mxu0
      %v2359 = vadd.f32 %v2256, %v2358
      %v2360 = vpop.f32.mrf.mxu0
      %v2361 = vadd.f32 %v2258, %v2360
      %2362 = vmatmul.bf16.gmra.mxu0 %v748
      %v2363 = vpop.f32.mrf.mxu0
      %v2364 = vadd.f32 %v2261, %v2363
      %v2365 = vpop.f32.mrf.mxu0
      %v2366 = vadd.f32 %v2263, %v2365
      %2367 = vmatmul.bf16.gmra.mxu0 %v752
      %v2368 = vpop.f32.mrf.mxu0
      %v2369 = vadd.f32 %v2266, %v2368
      %v2370 = vpop.f32.mrf.mxu0
      %v2371 = vadd.f32 %v2268, %v2370
      %2372 = vmatmul.bf16.gmra.mxu0 %v761
      %v2373 = vpop.f32.mrf.mxu0
      %v2374 = vadd.f32 %v2271, %v2373
      %v2375 = vpop.f32.mrf.mxu0
      %v2376 = vadd.f32 %v2273, %v2375
      %2377 = vmatmul.bf16.gmra.mxu0 %v770
      %v2378 = vpop.f32.mrf.mxu0
      %v2379 = vadd.f32 %v2276, %v2378
      %v2380 = vpop.f32.mrf.mxu0
      %v2381 = vadd.f32 %v2278, %v2380
      %2382 = vmatmul.bf16.gmra.mxu0 %v769
      %v2383 = vpop.f32.mrf.mxu0
      %v2384 = vadd.f32 %v2281, %v2383
      %v2385 = vpop.f32.mrf.mxu0
      %2386 = vdwg.mxu0
      %2387 = vmatpush.bf16.msra.mxu0 %v1775
      %2388 = vmatpush.bf16.msra.mxu0 %v1774
      %2389 = vmatpush.bf16.msra.mxu0 %v1773
      %2390 = vmatpush.bf16.msra.mxu0 %v1772
      %2391 = vmatpush.bf16.msra.mxu0 %v1771
      %2392 = vmatpush.bf16.msra.mxu0 %v1770
      %2393 = vmatpush.bf16.msra.mxu0 %v1769
      %2394 = vmatpush.bf16.msra.mxu0 %v1768
      %2395 = vmatmul.bf16.gmra.mxu0 %v796
      %v2396 = vpop.f32.mrf.mxu0
      %v2397 = vadd.f32 %v2294, %v2396
      %v2398 = vpop.f32.mrf.mxu0
      %v2399 = vadd.f32 %v2296, %v2398
      %2400 = vmatmul.bf16.gmra.mxu0 %v798
      %v2401 = vpop.f32.mrf.mxu0
      %v2402 = vadd.f32 %v2299, %v2401
      %v2403 = vpop.f32.mrf.mxu0
      %v2404 = vadd.f32 %v2301, %v2403
      %2405 = vmatmul.bf16.gmra.mxu0 %v800
      %v2406 = vpop.f32.mrf.mxu0
      %v2407 = vadd.f32 %v2304, %v2406
      %v2408 = vpop.f32.mrf.mxu0
      %v2409 = vadd.f32 %v2306, %v2408
      %2410 = vmatmul.bf16.gmra.mxu0 %v802
      %v2411 = vpop.f32.mrf.mxu0
      %v2412 = vadd.f32 %v2309, %v2411
      %v2413 = vpop.f32.mrf.mxu0
      %v2414 = vadd.f32 %v2311, %v2413
      %2415 = vmatmul.bf16.gmra.mxu0 %v804
      %v2416 = vpop.f32.mrf.mxu0
      %v2417 = vadd.f32 %v2314, %v2416
      %v2418 = vpop.f32.mrf.mxu0
      %v2419 = vadd.f32 %v2316, %v2418
      %2420 = vmatmul.bf16.gmra.mxu0 %v806
      %v2421 = vpop.f32.mrf.mxu0
      %v2422 = vadd.f32 %v2319, %v2421
      %v2423 = vpop.f32.mrf.mxu0
      %v2424 = vadd.f32 %v2321, %v2423
      %2425 = vmatmul.bf16.gmra.mxu0 %v808
      %v2426 = vpop.f32.mrf.mxu0
      %v2427 = vadd.f32 %v2324, %v2426
      %v2428 = vpop.f32.mrf.mxu0
      %v2429 = vadd.f32 %v2326, %v2428
      %2430 = vmatmul.bf16.gmra.mxu0 %v810
      %v2431 = vpop.f32.mrf.mxu0
      %v2432 = vadd.f32 %v2329, %v2431
      %v2433 = vpop.f32.mrf.mxu0
      %v2434 = vadd.f32 %v2331, %v2433
      %2435 = vmatmul.bf16.gmra.mxu0 %v812
      %v2436 = vpop.f32.mrf.mxu0
      %v2437 = vadd.f32 %v2334, %v2436
      %v2438 = vpop.f32.mrf.mxu0
      %v2439 = vadd.f32 %v2336, %v2438
      %2440 = vmatmul.bf16.gmra.mxu0 %v814
      %v2441 = vpop.f32.mrf.mxu0
      %v2442 = vadd.f32 %v2339, %v2441
      %v2443 = vpop.f32.mrf.mxu0
      %v2444 = vadd.f32 %v2341, %v2443
      %2445 = vmatmul.bf16.gmra.mxu0 %v816
      %v2446 = vpop.f32.mrf.mxu0
      %v2447 = vadd.f32 %v2344, %v2446
      %v2448 = vpop.f32.mrf.mxu0
      %v2449 = vadd.f32 %v2346, %v2448
      %2450 = vmatmul.bf16.gmra.mxu0 %v818
      %v2451 = vpop.f32.mrf.mxu0
      %v2452 = vadd.f32 %v2349, %v2451
      %v2453 = vpop.f32.mrf.mxu0
      %v2454 = vadd.f32 %v2351, %v2453
      %2455 = vmatmul.bf16.gmra.mxu0 %v820
      %v2456 = vpop.f32.mrf.mxu0
      %v2457 = vadd.f32 %v2354, %v2456
      %v2458 = vpop.f32.mrf.mxu0
      %v2459 = vadd.f32 %v2356, %v2458
      %2460 = vmatmul.bf16.gmra.mxu0 %v822
      %v2461 = vpop.f32.mrf.mxu0
      %v2462 = vadd.f32 %v2359, %v2461
      %v2463 = vpop.f32.mrf.mxu0
      %v2464 = vadd.f32 %v2361, %v2463
      %2465 = vmatmul.bf16.gmra.mxu0 %v824
      %v2466 = vpop.f32.mrf.mxu0
      %v2467 = vadd.f32 %v2364, %v2466
      %v2468 = vpop.f32.mrf.mxu0
      %v2469 = vadd.f32 %v2366, %v2468
      %2470 = vmatmul.bf16.gmra.mxu0 %v826
      %v2471 = vpop.f32.mrf.mxu0
      %v2472 = vadd.f32 %v2369, %v2471
      %v2473 = vpop.f32.mrf.mxu0
      %v2474 = vadd.f32 %v2371, %v2473
      %2475 = vmatmul.bf16.gmra.mxu0 %v828
      %v2476 = vpop.f32.mrf.mxu0
      %v2477 = vadd.f32 %v2374, %v2476
      %v2478 = vpop.f32.mrf.mxu0
      %v2479 = vadd.f32 %v2376, %v2478
      %2480 = vmatmul.bf16.gmra.mxu0 %v830
      %v2481 = vpop.f32.mrf.mxu0
      %v2482 = vadd.f32 %v2379, %v2481
      %v2483 = vpop.f32.mrf.mxu0
      %v2484 = vadd.f32 %v2381, %v2483
      %2485 = vmatmul.bf16.gmra.mxu0 %v829
      %v2486 = vpop.f32.mrf.mxu0
      %v2487 = vadd.f32 %v2384, %v2486
      %v2488 = vpop.f32.mrf.mxu0
      %2489 = vdwg.mxu0
      %2490 = vmatpush.bf16.msra.mxu0 %v1783
      %2491 = vmatpush.bf16.msra.mxu0 %v1782
      %2492 = vmatpush.bf16.msra.mxu0 %v1781
      %2493 = vmatpush.bf16.msra.mxu0 %v1780
      %2494 = vmatpush.bf16.msra.mxu0 %v1779
      %2495 = vmatpush.bf16.msra.mxu0 %v1778
      %2496 = vmatpush.bf16.msra.mxu0 %v1777
      %2497 = vmatpush.bf16.msra.mxu0 %v1776
      %2498 = vmatmul.bf16.gmra.mxu0 %v947
      %v2499 = vpop.f32.mrf.mxu0
      %v2500 = vadd.f32 %v2397, %v2499
      %v2501 = vpop.f32.mrf.mxu0
      %v2502 = vadd.f32 %v2399, %v2501
      %2503 = vmatmul.bf16.gmra.mxu0 %v949
      %v2504 = vpop.f32.mrf.mxu0
      %v2505 = vadd.f32 %v2402, %v2504
      %v2506 = vpop.f32.mrf.mxu0
      %v2507 = vadd.f32 %v2404, %v2506
      %2508 = vmatmul.bf16.gmra.mxu0 %v951
      %v2509 = vpop.f32.mrf.mxu0
      %v2510 = vadd.f32 %v2407, %v2509
      %v2511 = vpop.f32.mrf.mxu0
      %v2512 = vadd.f32 %v2409, %v2511
      %2513 = vmatmul.bf16.gmra.mxu0 %v953
      %v2514 = vpop.f32.mrf.mxu0
      %v2515 = vadd.f32 %v2412, %v2514
      %v2516 = vpop.f32.mrf.mxu0
      %v2517 = vadd.f32 %v2414, %v2516
      %2518 = vmatmul.bf16.gmra.mxu0 %v955
      %v2519 = vpop.f32.mrf.mxu0
      %v2520 = vadd.f32 %v2417, %v2519
      %v2521 = vpop.f32.mrf.mxu0
      %v2522 = vadd.f32 %v2419, %v2521
      %2523 = vmatmul.bf16.gmra.mxu0 %v957
      %v2524 = vpop.f32.mrf.mxu0
      %v2525 = vadd.f32 %v2422, %v2524
      %v2526 = vpop.f32.mrf.mxu0
      %v2527 = vadd.f32 %v2424, %v2526
      %2528 = vmatmul.bf16.gmra.mxu0 %v959
      %v2529 = vpop.f32.mrf.mxu0
      %v2530 = vadd.f32 %v2427, %v2529
      %v2531 = vpop.f32.mrf.mxu0
      %v2532 = vadd.f32 %v2429, %v2531
      %2533 = vmatmul.bf16.gmra.mxu0 %v961
      %v2534 = vpop.f32.mrf.mxu0
      %v2535 = vadd.f32 %v2432, %v2534
      %v2536 = vpop.f32.mrf.mxu0
      %v2537 = vadd.f32 %v2434, %v2536
      %2538 = vmatmul.bf16.gmra.mxu0 %v963
      %v2539 = vpop.f32.mrf.mxu0
      %v2540 = vadd.f32 %v2437, %v2539
      %v2541 = vpop.f32.mrf.mxu0
      %v2542 = vadd.f32 %v2439, %v2541
      %2543 = vmatmul.bf16.gmra.mxu0 %v965
      %v2544 = vpop.f32.mrf.mxu0
      %v2545 = vadd.f32 %v2442, %v2544
      %v2546 = vpop.f32.mrf.mxu0
      %v2547 = vadd.f32 %v2444, %v2546
      %2548 = vmatmul.bf16.gmra.mxu0 %v967
      %v2549 = vpop.f32.mrf.mxu0
      %v2550 = vadd.f32 %v2447, %v2549
      %v2551 = vpop.f32.mrf.mxu0
      %v2552 = vadd.f32 %v2449, %v2551
      %2553 = vmatmul.bf16.gmra.mxu0 %v969
      %v2554 = vpop.f32.mrf.mxu0
      %v2555 = vadd.f32 %v2452, %v2554
      %v2556 = vpop.f32.mrf.mxu0
      %v2557 = vadd.f32 %v2454, %v2556
      %2558 = vmatmul.bf16.gmra.mxu0 %v971
      %v2559 = vpop.f32.mrf.mxu0
      %v2560 = vadd.f32 %v2457, %v2559
      %v2561 = vpop.f32.mrf.mxu0
      %v2562 = vadd.f32 %v2459, %v2561
      %2563 = vmatmul.bf16.gmra.mxu0 %v973
      %v2564 = vpop.f32.mrf.mxu0
      %v2565 = vadd.f32 %v2462, %v2564
      %v2566 = vpop.f32.mrf.mxu0
      %v2567 = vadd.f32 %v2464, %v2566
      %2568 = vmatmul.bf16.gmra.mxu0 %v975
      %v2569 = vpop.f32.mrf.mxu0
      %v2570 = vadd.f32 %v2467, %v2569
      %v2571 = vpop.f32.mrf.mxu0
      %v2572 = vadd.f32 %v2469, %v2571
      %2573 = vmatmul.bf16.gmra.mxu0 %v977
      %v2574 = vpop.f32.mrf.mxu0
      %v2575 = vadd.f32 %v2472, %v2574
      %v2576 = vpop.f32.mrf.mxu0
      %v2577 = vadd.f32 %v2474, %v2576
      %2578 = vmatmul.bf16.gmra.mxu0 %v979
      %v2579 = vpop.f32.mrf.mxu0
      %v2580 = vadd.f32 %v2477, %v2579
      %v2581 = vpop.f32.mrf.mxu0
      %v2582 = vadd.f32 %v2479, %v2581
      %2583 = vmatmul.bf16.gmra.mxu0 %v981
      %v2584 = vpop.f32.mrf.mxu0
      %v2585 = vadd.f32 %v2482, %v2584
      %v2586 = vpop.f32.mrf.mxu0
      %v2587 = vadd.f32 %v2484, %v2586
      %2588 = vmatmul.bf16.gmra.mxu0 %v980
      %v2589 = vpop.f32.mrf.mxu0
      %v2590 = vadd.f32 %v2487, %v2589
      %v2591 = vpop.f32.mrf.mxu0
      %2592 = vdwg.mxu0
      %2593 = vmatpush.bf16.msra.mxu0 %v1791
      %2594 = vmatpush.bf16.msra.mxu0 %v1790
      %2595 = vmatpush.bf16.msra.mxu0 %v1789
      %2596 = vmatpush.bf16.msra.mxu0 %v1788
      %2597 = vmatpush.bf16.msra.mxu0 %v1787
      %2598 = vmatpush.bf16.msra.mxu0 %v1786
      %2599 = vmatpush.bf16.msra.mxu0 %v1785
      %2600 = vmatpush.bf16.msra.mxu0 %v1784
      %2601 = vmatmul.bf16.gmra.mxu0 %v1021
      %v2602 = vpop.f32.mrf.mxu0
      %v2603 = vadd.f32 %v2500, %v2602
      %v2604 = vpop.f32.mrf.mxu0
      %v2605 = vadd.f32 %v2502, %v2604
      %2606 = vmatmul.bf16.gmra.mxu0 %v1030
      %v2607 = vpop.f32.mrf.mxu0
      %v2608 = vadd.f32 %v2505, %v2607
      %v2609 = vpop.f32.mrf.mxu0
      %v2610 = vadd.f32 %v2507, %v2609
      %2611 = vmatmul.bf16.gmra.mxu0 %v1039
      %v2612 = vpop.f32.mrf.mxu0
      %v2613 = vadd.f32 %v2510, %v2612
      %v2614 = vpop.f32.mrf.mxu0
      %v2615 = vadd.f32 %v2512, %v2614
      %2616 = vmatmul.bf16.gmra.mxu0 %v1048
      %v2617 = vpop.f32.mrf.mxu0
      %v2618 = vadd.f32 %v2515, %v2617
      %v2619 = vpop.f32.mrf.mxu0
      %v2620 = vadd.f32 %v2517, %v2619
      %2621 = vmatmul.bf16.gmra.mxu0 %v1057
      %v2622 = vpop.f32.mrf.mxu0
      %v2623 = vadd.f32 %v2520, %v2622
      %v2624 = vpop.f32.mrf.mxu0
      %v2625 = vadd.f32 %v2522, %v2624
      %2626 = vmatmul.bf16.gmra.mxu0 %v1066
      %v2627 = vpop.f32.mrf.mxu0
      %v2628 = vadd.f32 %v2525, %v2627
      %v2629 = vpop.f32.mrf.mxu0
      %v2630 = vadd.f32 %v2527, %v2629
      %2631 = vmatmul.bf16.gmra.mxu0 %v1075
      %v2632 = vpop.f32.mrf.mxu0
      %v2633 = vadd.f32 %v2530, %v2632
      %v2634 = vpop.f32.mrf.mxu0
      %v2635 = vadd.f32 %v2532, %v2634
      %2636 = vmatmul.bf16.gmra.mxu0 %v1084
      %v2637 = vpop.f32.mrf.mxu0
      %v2638 = vadd.f32 %v2535, %v2637
      %v2639 = vpop.f32.mrf.mxu0
      %v2640 = vadd.f32 %v2537, %v2639
      %2641 = vmatmul.bf16.gmra.mxu0 %v1093
      %v2642 = vpop.f32.mrf.mxu0
      %v2643 = vadd.f32 %v2540, %v2642
      %v2644 = vpop.f32.mrf.mxu0
      %v2645 = vadd.f32 %v2542, %v2644
      %2646 = vmatmul.bf16.gmra.mxu0 %v1102
      %v2647 = vpop.f32.mrf.mxu0
      %v2648 = vadd.f32 %v2545, %v2647
      %v2649 = vpop.f32.mrf.mxu0
      %v2650 = vadd.f32 %v2547, %v2649
      %2651 = vmatmul.bf16.gmra.mxu0 %v1111
      %v2652 = vpop.f32.mrf.mxu0
      %v2653 = vadd.f32 %v2550, %v2652
      %v2654 = vpop.f32.mrf.mxu0
      %v2655 = vadd.f32 %v2552, %v2654
      %2656 = vmatmul.bf16.gmra.mxu0 %v1120
      %v2657 = vpop.f32.mrf.mxu0
      %v2658 = vadd.f32 %v2555, %v2657
      %v2659 = vpop.f32.mrf.mxu0
      %v2660 = vadd.f32 %v2557, %v2659
      %2661 = vmatmul.bf16.gmra.mxu0 %v1129
      %v2662 = vpop.f32.mrf.mxu0
      %v2663 = vadd.f32 %v2560, %v2662
      %v2664 = vpop.f32.mrf.mxu0
      %v2665 = vadd.f32 %v2562, %v2664
      %2666 = vmatmul.bf16.gmra.mxu0 %v1138
      %v2667 = vpop.f32.mrf.mxu0
      %v2668 = vadd.f32 %v2565, %v2667
      %v2669 = vpop.f32.mrf.mxu0
      %v2670 = vadd.f32 %v2567, %v2669
      %2671 = vmatmul.bf16.gmra.mxu0 %v1147
      %v2672 = vpop.f32.mrf.mxu0
      %v2673 = vadd.f32 %v2570, %v2672
      %v2674 = vpop.f32.mrf.mxu0
      %v2675 = vadd.f32 %v2572, %v2674
      %2676 = vmatmul.bf16.gmra.mxu0 %v1156
      %v2677 = vpop.f32.mrf.mxu0
      %v2678 = vadd.f32 %v2575, %v2677
      %v2679 = vpop.f32.mrf.mxu0
      %v2680 = vadd.f32 %v2577, %v2679
      %2681 = vmatmul.bf16.gmra.mxu0 %v1165
      %v2682 = vpop.f32.mrf.mxu0
      %v2683 = vadd.f32 %v2580, %v2682
      %v2684 = vpop.f32.mrf.mxu0
      %v2685 = vadd.f32 %v2582, %v2684
      %2686 = vmatmul.bf16.gmra.mxu0 %v1174
      %v2687 = vpop.f32.mrf.mxu0
      %v2688 = vadd.f32 %v2585, %v2687
      %v2689 = vpop.f32.mrf.mxu0
      %v2690 = vadd.f32 %v2587, %v2689
      %2691 = vmatmul.bf16.gmra.mxu0 %v1173
      %v2692 = vpop.f32.mrf.mxu0
      %v2693 = vadd.f32 %v2590, %v2692
      %v2694 = vpop.f32.mrf.mxu0
      %2695 = vdwg.mxu0
      %2696 = vmatpush.bf16.msra.mxu0 %v1799
      %2697 = vmatpush.bf16.msra.mxu0 %v1798
      %2698 = vmatpush.bf16.msra.mxu0 %v1797
      %2699 = vmatpush.bf16.msra.mxu0 %v1796
      %2700 = vmatpush.bf16.msra.mxu0 %v1795
      %2701 = vmatpush.bf16.msra.mxu0 %v1794
      %2702 = vmatpush.bf16.msra.mxu0 %v1793
      %2703 = vmatpush.bf16.msra.mxu0 %v1792
      %2704 = vmatmul.bf16.gmra.mxu0 %v1200
      %v2705 = vpop.f32.mrf.mxu0
      %v2706 = vadd.f32 %v2603, %v2705
      %v2707 = vpop.f32.mrf.mxu0
      %v2708 = vadd.f32 %v2605, %v2707
      %2709 = vmatmul.bf16.gmra.mxu0 %v1202
      %v2710 = vpop.f32.mrf.mxu0
      %v2711 = vadd.f32 %v2608, %v2710
      %v2712 = vpop.f32.mrf.mxu0
      %v2713 = vadd.f32 %v2610, %v2712
      %2714 = vmatmul.bf16.gmra.mxu0 %v1204
      %v2715 = vpop.f32.mrf.mxu0
      %v2716 = vadd.f32 %v2613, %v2715
      %v2717 = vpop.f32.mrf.mxu0
      %v2718 = vadd.f32 %v2615, %v2717
      %2719 = vmatmul.bf16.gmra.mxu0 %v1206
      %v2720 = vpop.f32.mrf.mxu0
      %v2721 = vadd.f32 %v2618, %v2720
      %v2722 = vpop.f32.mrf.mxu0
      %v2723 = vadd.f32 %v2620, %v2722
      %2724 = vmatmul.bf16.gmra.mxu0 %v1208
      %v2725 = vpop.f32.mrf.mxu0
      %v2726 = vadd.f32 %v2623, %v2725
      %v2727 = vpop.f32.mrf.mxu0
      %v2728 = vadd.f32 %v2625, %v2727
      %2729 = vmatmul.bf16.gmra.mxu0 %v1210
      %v2730 = vpop.f32.mrf.mxu0
      %v2731 = vadd.f32 %v2628, %v2730
      %v2732 = vpop.f32.mrf.mxu0
      %v2733 = vadd.f32 %v2630, %v2732
      %2734 = vmatmul.bf16.gmra.mxu0 %v1212
      %v2735 = vpop.f32.mrf.mxu0
      %v2736 = vadd.f32 %v2633, %v2735
      %v2737 = vpop.f32.mrf.mxu0
      %v2738 = vadd.f32 %v2635, %v2737
      %2739 = vmatmul.bf16.gmra.mxu0 %v1214
      %v2740 = vpop.f32.mrf.mxu0
      %v2741 = vadd.f32 %v2638, %v2740
      %v2742 = vpop.f32.mrf.mxu0
      %v2743 = vadd.f32 %v2640, %v2742
      %2744 = vmatmul.bf16.gmra.mxu0 %v1216
      %v2745 = vpop.f32.mrf.mxu0
      %v2746 = vadd.f32 %v2643, %v2745
      %v2747 = vpop.f32.mrf.mxu0
      %v2748 = vadd.f32 %v2645, %v2747
      %2749 = vmatmul.bf16.gmra.mxu0 %v1218
      %v2750 = vpop.f32.mrf.mxu0
      %v2751 = vadd.f32 %v2648, %v2750
      %v2752 = vpop.f32.mrf.mxu0
      %v2753 = vadd.f32 %v2650, %v2752
      %2754 = vmatmul.bf16.gmra.mxu0 %v1220
      %v2755 = vpop.f32.mrf.mxu0
      %v2756 = vadd.f32 %v2653, %v2755
      %v2757 = vpop.f32.mrf.mxu0
      %v2758 = vadd.f32 %v2655, %v2757
      %2759 = vmatmul.bf16.gmra.mxu0 %v1222
      %v2760 = vpop.f32.mrf.mxu0
      %v2761 = vadd.f32 %v2658, %v2760
      %v2762 = vpop.f32.mrf.mxu0
      %v2763 = vadd.f32 %v2660, %v2762
      %2764 = vmatmul.bf16.gmra.mxu0 %v1224
      %v2765 = vpop.f32.mrf.mxu0
      %v2766 = vadd.f32 %v2663, %v2765
      %v2767 = vpop.f32.mrf.mxu0
      %v2768 = vadd.f32 %v2665, %v2767
      %2769 = vmatmul.bf16.gmra.mxu0 %v1226
      %v2770 = vpop.f32.mrf.mxu0
      %v2771 = vadd.f32 %v2668, %v2770
      %v2772 = vpop.f32.mrf.mxu0
      %v2773 = vadd.f32 %v2670, %v2772
      %2774 = vmatmul.bf16.gmra.mxu0 %v1228
      %v2775 = vpop.f32.mrf.mxu0
      %v2776 = vadd.f32 %v2673, %v2775
      %v2777 = vpop.f32.mrf.mxu0
      %v2778 = vadd.f32 %v2675, %v2777
      %2779 = vmatmul.bf16.gmra.mxu0 %v1230
      %v2780 = vpop.f32.mrf.mxu0
      %v2781 = vadd.f32 %v2678, %v2780
      %v2782 = vpop.f32.mrf.mxu0
      %v2783 = vadd.f32 %v2680, %v2782
      %2784 = vmatmul.bf16.gmra.mxu0 %v1232
      %v2785 = vpop.f32.mrf.mxu0
      %v2786 = vadd.f32 %v2683, %v2785
      %v2787 = vpop.f32.mrf.mxu0
      %v2788 = vadd.f32 %v2685, %v2787
      %2789 = vmatmul.bf16.gmra.mxu0 %v1234
      %v2790 = vpop.f32.mrf.mxu0
      %v2791 = vadd.f32 %v2688, %v2790
      %v2792 = vpop.f32.mrf.mxu0
      %v2793 = vadd.f32 %v2690, %v2792
      %2794 = vmatmul.bf16.gmra.mxu0 %v1233
      %v2795 = vpop.f32.mrf.mxu0
      %v2796 = vadd.f32 %v2693, %v2795
      %v2797 = vpop.f32.mrf.mxu0
      %2798 = vdwg.mxu0
      %vm2837 = vcmask 1044480
      %v2838 = vrot.slane %v1398, 3
      %v2839 = vrot.slane %v1399, 3
      %v2840 = vsel %vm2837, %v2838, %v2839
      %v2841 = vrot.slane %v1400, 3
      %v2842 = vsel %vm2837, %v2839, %v2841
      %v2843 = vrot.slane %v1401, 3
      %v2844 = vsel %vm2837, %v2841, %v2843
      %v2845 = vrot.slane %v1402, 3
      %v2846 = vsel %vm2837, %v2843, %v2845
      %v2847 = vrot.slane %v1403, 3
      %v2848 = vsel %vm2837, %v2845, %v2847
      %v2849 = vrot.slane %v1404, 3
      %v2850 = vsel %vm2837, %v2847, %v2849
      %v2851 = vrot.slane %v1405, 3
      %v2852 = vsel %vm2837, %v2849, %v2851
      %v2853 = vrot.slane %v1406, 3
      %v2854 = vsel %vm2837, %v2851, %v2853
      %v2855 = vrot.slane %v1407, 3
      %v2856 = vsel %vm2837, %v2853, %v2855
      %v2857 = vrot.slane %v1408, 3
      %v2858 = vsel %vm2837, %v2855, %v2857
      %v2859 = vrot.slane %v1409, 3
      %v2860 = vsel %vm2837, %v2857, %v2859
      %v2861 = vrot.slane %v1410, 3
      %v2862 = vsel %vm2837, %v2859, %v2861
      %v2863 = vrot.slane %v1411, 3
      %v2864 = vsel %vm2837, %v2861, %v2863
      %v2865 = vrot.slane %v1412, 3
      %v2866 = vsel %vm2837, %v2863, %v2865
      %v2867 = vrot.slane %v1413, 3
      %v2868 = vsel %vm2837, %v2865, %v2867
      %v2869 = vrot.slane %v1414, 3
      %v2870 = vsel %vm2837, %v2867, %v2869
      %v2871 = vrot.slane %v1415, 3
      %v2872 = vsel %vm2837, %v2869, %v2871
      %v2873 = vrot.slane %v1416, 3
      %v2874 = vsel %vm2837, %v2871, %v2873
      %v2875 = vrot.slane %v1417, 3
      %v2876 = vsel %vm2837, %v2873, %v2875
      %v2877 = vrot.slane %v1418, 3
      %v2878 = vsel %vm2837, %v2875, %v2877
      %v2879 = vrot.slane %v1419, 3
      %v2880 = vsel %vm2837, %v2877, %v2879
      %v2881 = vrot.slane %v1420, 3
      %v2882 = vsel %vm2837, %v2879, %v2881
      %v2883 = vrot.slane %v1421, 3
      %v2884 = vsel %vm2837, %v2881, %v2883
      %v2885 = vrot.slane %v1422, 3
      %v2886 = vsel %vm2837, %v2883, %v2885
      %v2887 = vrot.slane %v1423, 3
      %v2888 = vsel %vm2837, %v2885, %v2887
      %v2889 = vrot.slane %v1424, 3
      %v2890 = vsel %vm2837, %v2887, %v2889
      %v2891 = vrot.slane %v1425, 3
      %v2892 = vsel %vm2837, %v2889, %v2891
      %v2893 = vrot.slane %v1426, 3
      %v2894 = vsel %vm2837, %v2891, %v2893
      %v2895 = vrot.slane %v1427, 3
      %v2896 = vsel %vm2837, %v2893, %v2895
      %v2897 = vrot.slane %v1428, 3
      %v2898 = vsel %vm2837, %v2895, %v2897
      %v2899 = vrot.slane %v1429, 3
      %v2900 = vsel %vm2837, %v2897, %v2899
      %v2901 = vrot.slane %v1430, 3
      %v2902 = vsel %vm2837, %v2899, %v2901
      %v2903 = vrot.slane %v1431, 3
      %v2904 = vsel %vm2837, %v2901, %v2903
      %v2905 = vrot.slane %v1432, 3
      %v2906 = vsel %vm2837, %v2903, %v2905
      %v2907 = vrot.slane %v1433, 3
      %v2908 = vsel %vm2837, %v2905, %v2907
      %v2909 = vrot.slane %v1434, 3
      %v2910 = vsel %vm2837, %v2907, %v2909
      %v2911 = vrot.slane %v1435, 3
      %v2912 = vsel %vm2837, %v2909, %v2911
      %v2950 = vadd.f32 %v2706, %v2840
      %v2951 = vadd.f32 %v2708, %v2842
      %v2952 = vadd.f32 %v2711, %v2844
      %v2953 = vadd.f32 %v2713, %v2846
      %v2954 = vadd.f32 %v2716, %v2848
      %v2955 = vadd.f32 %v2718, %v2850
      %v2956 = vadd.f32 %v2721, %v2852
      %v2957 = vadd.f32 %v2723, %v2854
      %v2958 = vadd.f32 %v2726, %v2856
      %v2959 = vadd.f32 %v2728, %v2858
      %v2960 = vadd.f32 %v2731, %v2860
      %v2961 = vadd.f32 %v2733, %v2862
      %v2962 = vadd.f32 %v2736, %v2864
      %v2963 = vadd.f32 %v2738, %v2866
      %v2964 = vadd.f32 %v2741, %v2868
      %v2965 = vadd.f32 %v2743, %v2870
      %v2966 = vadd.f32 %v2746, %v2872
      %v2967 = vadd.f32 %v2748, %v2874
      %v2968 = vadd.f32 %v2751, %v2876
      %v2969 = vadd.f32 %v2753, %v2878
      %v2970 = vadd.f32 %v2756, %v2880
      %v2971 = vadd.f32 %v2758, %v2882
      %v2972 = vadd.f32 %v2761, %v2884
      %v2973 = vadd.f32 %v2763, %v2886
      %v2974 = vadd.f32 %v2766, %v2888
      %v2975 = vadd.f32 %v2768, %v2890
      %v2976 = vadd.f32 %v2771, %v2892
      %v2977 = vadd.f32 %v2773, %v2894
      %v2978 = vadd.f32 %v2776, %v2896
      %v2979 = vadd.f32 %v2778, %v2898
      %v2980 = vadd.f32 %v2781, %v2900
      %v2981 = vadd.f32 %v2783, %v2902
      %v2982 = vadd.f32 %v2786, %v2904
      %v2983 = vadd.f32 %v2788, %v2906
      %v2984 = vadd.f32 %v2791, %v2908
      %v2985 = vadd.f32 %v2793, %v2910
      %v2986 = vadd.f32 %v2796, %v2912
      %v2987 = vmax.f32 %v2950, 0.0
      %v2988 = vmax.f32 %v2951, 0.0
      %v2989 = vmax.f32 %v2952, 0.0
      %v2990 = vmax.f32 %v2953, 0.0
      %v2991 = vmax.f32 %v2954, 0.0
      %v2992 = vmax.f32 %v2955, 0.0
      %v2993 = vmax.f32 %v2956, 0.0
      %v2994 = vmax.f32 %v2957, 0.0
      %v2995 = vmax.f32 %v2958, 0.0
      %v2996 = vmax.f32 %v2959, 0.0
      %v2997 = vmax.f32 %v2960, 0.0
      %v2998 = vmax.f32 %v2961, 0.0
      %v2999 = vmax.f32 %v2962, 0.0
      %v3000 = vmax.f32 %v2963, 0.0
      %v3001 = vmax.f32 %v2964, 0.0
      %v3002 = vmax.f32 %v2965, 0.0
      %v3003 = vmax.f32 %v2966, 0.0
      %v3004 = vmax.f32 %v2967, 0.0
      %v3005 = vmax.f32 %v2968, 0.0
      %v3006 = vmax.f32 %v2969, 0.0
      %v3007 = vmax.f32 %v2970, 0.0
      %v3008 = vmax.f32 %v2971, 0.0
      %v3009 = vmax.f32 %v2972, 0.0
      %v3010 = vmax.f32 %v2973, 0.0
      %v3011 = vmax.f32 %v2974, 0.0
      %v3012 = vmax.f32 %v2975, 0.0
      %v3013 = vmax.f32 %v2976, 0.0
      %v3014 = vmax.f32 %v2977, 0.0
      %v3015 = vmax.f32 %v2978, 0.0
      %v3016 = vmax.f32 %v2979, 0.0
      %v3017 = vmax.f32 %v2980, 0.0
      %v3018 = vmax.f32 %v2981, 0.0
      %v3019 = vmax.f32 %v2982, 0.0
      %v3020 = vmax.f32 %v2983, 0.0
      %v3021 = vmax.f32 %v2984, 0.0
      %v3022 = vmax.f32 %v2985, 0.0
      %v3023 = vmax.f32 %v2986, 0.0
      %v3024 = vpack.c.bf16 %v2987, %v2987
      %v3025 = vpack.c.bf16 %v2988, %v2988
      %v3026 = vpack.c.bf16 %v2989, %v2989
      %v3027 = vpack.c.bf16 %v2990, %v2990
      %v3028 = vpack.c.bf16 %v2991, %v2991
      %v3029 = vpack.c.bf16 %v2992, %v2992
      %v3030 = vpack.c.bf16 %v2993, %v2993
      %v3031 = vpack.c.bf16 %v2994, %v2994
      %v3032 = vpack.c.bf16 %v2995, %v2995
      %v3033 = vpack.c.bf16 %v2996, %v2996
      %v3034 = vpack.c.bf16 %v2997, %v2997
      %v3035 = vpack.c.bf16 %v2998, %v2998
      %v3036 = vpack.c.bf16 %v2999, %v2999
      %v3037 = vpack.c.bf16 %v3000, %v3000
      %v3038 = vpack.c.bf16 %v3001, %v3001
      %v3039 = vpack.c.bf16 %v3002, %v3002
      %v3040 = vpack.c.bf16 %v3003, %v3003
      %v3041 = vpack.c.bf16 %v3004, %v3004
      %v3042 = vpack.c.bf16 %v3005, %v3005
      %v3043 = vpack.c.bf16 %v3006, %v3006
      %v3044 = vpack.c.bf16 %v3007, %v3007
      %v3045 = vpack.c.bf16 %v3008, %v3008
      %v3046 = vpack.c.bf16 %v3009, %v3009
      %v3047 = vpack.c.bf16 %v3010, %v3010
      %v3048 = vpack.c.bf16 %v3011, %v3011
      %v3049 = vpack.c.bf16 %v3012, %v3012
      %v3050 = vpack.c.bf16 %v3013, %v3013
      %v3051 = vpack.c.bf16 %v3014, %v3014
      %v3052 = vpack.c.bf16 %v3015, %v3015
      %v3053 = vpack.c.bf16 %v3016, %v3016
      %v3054 = vpack.c.bf16 %v3017, %v3017
      %v3055 = vpack.c.bf16 %v3018, %v3018
      %v3056 = vpack.c.bf16 %v3019, %v3019
      %v3057 = vpack.c.bf16 %v3020, %v3020
      %v3058 = vpack.c.bf16 %v3021, %v3021
      %v3059 = vpack.c.bf16 %v3022, %v3022
      %v3060 = vpack.c.bf16 %v3023, %v3023
      %3061 = vst [vmem:[#allocation2] sm:$0xf] %v3024
      %3062 = vst [vmem:[#allocation2 + $0x4] sm:$0xf] %v3025
      %3063 = vst [vmem:[#allocation2 + $0x8] sm:$0xf] %v3026
      %3064 = vst [vmem:[#allocation2 + $0xc] sm:$0xf] %v3027
      %3065 = vst [vmem:[#allocation2 + $0x10] sm:$0xf] %v3028
      %3066 = vst [vmem:[#allocation2 + $0x14] sm:$0xf] %v3029
      %3067 = vst [vmem:[#allocation2 + $0x18] sm:$0xf] %v3030
      %3068 = vst [vmem:[#allocation2 + $0x1c] sm:$0xf] %v3031
      %3069 = vst [vmem:[#allocation2 + $0x20] sm:$0xf] %v3032
      %3070 = vst [vmem:[#allocation2 + $0x24] sm:$0xf] %v3033
      %3071 = vst [vmem:[#allocation2 + $0x28] sm:$0xf] %v3034
      %3072 = vst [vmem:[#allocation2 + $0x2c] sm:$0xf] %v3035
      %3073 = vst [vmem:[#allocation2 + $0x30] sm:$0xf] %v3036
      %3074 = vst [vmem:[#allocation2 + $0x34] sm:$0xf] %v3037
      %3075 = vst [vmem:[#allocation2 + $0x38] sm:$0xf] %v3038
      %3076 = vst [vmem:[#allocation2 + $0x3c] sm:$0xf] %v3039
      %3077 = vst [vmem:[#allocation2 + $0x40] sm:$0xf] %v3040
      %3078 = vst [vmem:[#allocation2 + $0x44] sm:$0xf] %v3041
      %3079 = vst [vmem:[#allocation2 + $0x48] sm:$0xf] %v3042
      %3080 = vst [vmem:[#allocation2 + $0x4c] sm:$0xf] %v3043
      %3081 = vst [vmem:[#allocation2 + $0x50] sm:$0xf] %v3044
      %3082 = vst [vmem:[#allocation2 + $0x54] sm:$0xf] %v3045
      %3083 = vst [vmem:[#allocation2 + $0x58] sm:$0xf] %v3046
      %3084 = vst [vmem:[#allocation2 + $0x5c] sm:$0xf] %v3047
      %3085 = vst [vmem:[#allocation2 + $0x60] sm:$0xf] %v3048
      %3086 = vst [vmem:[#allocation2 + $0x64] sm:$0xf] %v3049
      %3087 = vst [vmem:[#allocation2 + $0x68] sm:$0xf] %v3050
      %3088 = vst [vmem:[#allocation2 + $0x6c] sm:$0xf] %v3051
      %3089 = vst [vmem:[#allocation2 + $0x70] sm:$0xf] %v3052
      %3090 = vst [vmem:[#allocation2 + $0x74] sm:$0xf] %v3053
      %3091 = vst [vmem:[#allocation2 + $0x78] sm:$0xf] %v3054
      %3092 = vst [vmem:[#allocation2 + $0x7c] sm:$0xf] %v3055
      %3093 = vst [vmem:[#allocation2 + $0x80] sm:$0xf] %v3056
      %3094 = vst [vmem:[#allocation2 + $0x84] sm:$0xf] %v3057
      %3095 = vst [vmem:[#allocation2 + $0x88] sm:$0xf] %v3058
      %3096 = vst [vmem:[#allocation2 + $0x8c] sm:$0xf] %v3059
      %3097 = vst [vmem:[#allocation2 + $0x90] sm:$0xf] %v3060
      %v3098 = vld [vmem:[#allocation2] sm:$0xf]
      %v3099 = vld [vmem:[#allocation2 + $0x4] sm:$0xf]
      %v3100 = vld [vmem:[#allocation2 + $0x8] sm:$0xf]
      %v3101 = vld [vmem:[#allocation2 + $0xc] sm:$0xf]
      %v3102 = vld [vmem:[#allocation2 + $0x10] sm:$0xf]
      %v3103 = vld [vmem:[#allocation2 + $0x14] sm:$0xf]
      %v3104 = vld [vmem:[#allocation2 + $0x18] sm:$0xf]
      %v3105 = vld [vmem:[#allocation2 + $0x1c] sm:$0xf]
      %v3106 = vld [vmem:[#allocation2 + $0x20] sm:$0xf]
      %v3107 = vld [vmem:[#allocation2 + $0x24] sm:$0xf]
      %v3108 = vld [vmem:[#allocation2 + $0x28] sm:$0xf]
      %v3109 = vld [vmem:[#allocation2 + $0x2c] sm:$0xf]
      %v3110 = vld [vmem:[#allocation2 + $0x30] sm:$0xf]
      %v3111 = vld [vmem:[#allocation2 + $0x34] sm:$0xf]
      %v3112 = vld [vmem:[#allocation2 + $0x38] sm:$0xf]
      %v3113 = vld [vmem:[#allocation2 + $0x3c] sm:$0xf]
      %v3114 = vld [vmem:[#allocation2 + $0x40] sm:$0xf]
      %v3115 = vld [vmem:[#allocation2 + $0x44] sm:$0xf]
      %v3116 = vld [vmem:[#allocation2 + $0x48] sm:$0xf]
      %v3117 = vld [vmem:[#allocation2 + $0x4c] sm:$0xf]
      %v3118 = vld [vmem:[#allocation2 + $0x50] sm:$0xf]
      %v3119 = vld [vmem:[#allocation2 + $0x54] sm:$0xf]
      %v3120 = vld [vmem:[#allocation2 + $0x58] sm:$0xf]
      %v3121 = vld [vmem:[#allocation2 + $0x5c] sm:$0xf]
      %v3122 = vld [vmem:[#allocation2 + $0x60] sm:$0xf]
      %v3123 = vld [vmem:[#allocation2 + $0x64] sm:$0xf]
      %v3124 = vld [vmem:[#allocation2 + $0x68] sm:$0xf]
      %v3125 = vld [vmem:[#allocation2 + $0x6c] sm:$0xf]
      %v3126 = vld [vmem:[#allocation2 + $0x70] sm:$0xf]
      %v3127 = vld [vmem:[#allocation2 + $0x74] sm:$0xf]
      %v3128 = vld [vmem:[#allocation2 + $0x78] sm:$0xf]
      %v3129 = vld [vmem:[#allocation2 + $0x7c] sm:$0xf]
      %v3130 = vld [vmem:[#allocation2 + $0x80] sm:$0x1]
      %v3131 = vld [vmem:[#allocation2] sm:$0xe]
      %v3132 = vld [vmem:[#allocation2 + $0x8] sm:$0xe]
      %v3133 = vld [vmem:[#allocation2 + $0x80] sm:$0xf]
      %v3134 = vld [vmem:[#allocation2 + $0x84] sm:$0xf]
      %v3135 = vld [vmem:[#allocation2 + $0x88] sm:$0x1]
      %v3136 = vld [vmem:[#allocation2 + $0x88] sm:$0x3]
      %v3137 = vld [vmem:[#allocation2 + $0x8] sm:$0xc]
      %v3138 = vld [vmem:[#allocation2 + $0x10] sm:$0xc]
      %v3139 = vld [vmem:[#allocation2 + $0x14] sm:$0xf]
      %v3140 = vld [vmem:[#allocation2 + $0x18] sm:$0xf]
      %v3141 = vld [vmem:[#allocation2 + $0x1c] sm:$0xf]
      %v3142 = vld [vmem:[#allocation2 + $0x20] sm:$0xf]
      %v3143 = vld [vmem:[#allocation2 + $0x24] sm:$0xf]
      %v3144 = vld [vmem:[#allocation2 + $0x28] sm:$0xf]
      %v3145 = vld [vmem:[#allocation2 + $0x2c] sm:$0xf]
      %v3146 = vld [vmem:[#allocation2 + $0x30] sm:$0xf]
      %v3147 = vld [vmem:[#allocation2 + $0x34] sm:$0xf]
      %v3148 = vld [vmem:[#allocation2 + $0x38] sm:$0xf]
      %v3149 = vld [vmem:[#allocation2 + $0x3c] sm:$0xf]
      %v3150 = vld [vmem:[#allocation2 + $0x40] sm:$0xf]
      %v3151 = vld [vmem:[#allocation2 + $0x44] sm:$0xf]
      %v3152 = vld [vmem:[#allocation2 + $0x48] sm:$0xf]
      %v3153 = vld [vmem:[#allocation2 + $0x4c] sm:$0xf]
      %v3154 = vld [vmem:[#allocation2 + $0x50] sm:$0xf]
      %v3155 = vld [vmem:[#allocation2 + $0x54] sm:$0xf]
      %v3156 = vld [vmem:[#allocation2 + $0x58] sm:$0xf]
      %v3157 = vld [vmem:[#allocation2 + $0x5c] sm:$0xf]
      %v3158 = vld [vmem:[#allocation2 + $0x60] sm:$0xf]
      %v3159 = vld [vmem:[#allocation2 + $0x64] sm:$0xf]
      %v3160 = vld [vmem:[#allocation2 + $0x68] sm:$0xf]
      %v3161 = vld [vmem:[#allocation2 + $0x6c] sm:$0xf]
      %v3162 = vld [vmem:[#allocation2 + $0x70] sm:$0xf]
      %v3163 = vld [vmem:[#allocation2 + $0x74] sm:$0xf]
      %v3164 = vld [vmem:[#allocation2 + $0x78] sm:$0xf]
      %v3165 = vld [vmem:[#allocation2 + $0x7c] sm:$0xf]
      %v3166 = vld [vmem:[#allocation2 + $0x80] sm:$0xf]
      %v3167 = vld [vmem:[#allocation2 + $0x84] sm:$0xf]
      %v3168 = vld [vmem:[#allocation2 + $0x88] sm:$0xf]
      %v3169 = vld [vmem:[#allocation2 + $0x8c] sm:$0xf]
      %v3170 = vld [vmem:[#allocation2 + $0x90] sm:$0x3]
      %v3171 = vld [vmem:[#allocation2 + $0x90] sm:$0x7]
      %v3172 = vld [vmem:[#allocation2 + $0x10] sm:$0x8]
      %v3205 = vunpack.c.l.b16 %v3098
      %v3206 = vunpack.c.l.b16 %v3099
      %v3207 = vunpack.c.l.b16 %v3100
      %v3208 = vunpack.c.l.b16 %v3101
      %v3209 = vunpack.c.l.b16 %v3102
      %v3210 = vunpack.c.l.b16 %v3103
      %v3211 = vunpack.c.l.b16 %v3104
      %v3212 = vunpack.c.l.b16 %v3105
      %v3213 = vunpack.c.l.b16 %v3106
      %v3214 = vunpack.c.l.b16 %v3107
      %v3215 = vunpack.c.l.b16 %v3108
      %v3216 = vunpack.c.l.b16 %v3109
      %v3217 = vunpack.c.l.b16 %v3110
      %v3218 = vunpack.c.l.b16 %v3111
      %v3219 = vunpack.c.l.b16 %v3112
      %v3220 = vunpack.c.l.b16 %v3113
      %v3221 = vunpack.c.l.b16 %v3114
      %v3222 = vunpack.c.l.b16 %v3115
      %v3223 = vunpack.c.l.b16 %v3116
      %v3224 = vunpack.c.l.b16 %v3117
      %v3225 = vunpack.c.l.b16 %v3118
      %v3226 = vunpack.c.l.b16 %v3119
      %v3227 = vunpack.c.l.b16 %v3120
      %v3228 = vunpack.c.l.b16 %v3121
      %v3229 = vunpack.c.l.b16 %v3122
      %v3230 = vunpack.c.l.b16 %v3123
      %v3231 = vunpack.c.l.b16 %v3124
      %v3232 = vunpack.c.l.b16 %v3125
      %v3233 = vunpack.c.l.b16 %v3126
      %v3234 = vunpack.c.l.b16 %v3127
      %v3235 = vunpack.c.l.b16 %v3128
      %v3236 = vunpack.c.l.b16 %v3129
      %v3237 = vpack.c.b16 %v3206, %v3205
      %v3238 = vpack.c.b16 %v3208, %v3207
      %v3239 = vpack.c.b16 %v3210, %v3209
      %v3240 = vpack.c.b16 %v3212, %v3211
      %v3241 = vpack.c.b16 %v3214, %v3213
      %v3242 = vpack.c.b16 %v3216, %v3215
      %v3243 = vpack.c.b16 %v3218, %v3217
      %v3244 = vpack.c.b16 %v3220, %v3219
      %v3245 = vpack.c.b16 %v3222, %v3221
      %v3246 = vpack.c.b16 %v3224, %v3223
      %v3247 = vpack.c.b16 %v3226, %v3225
      %v3248 = vpack.c.b16 %v3228, %v3227
      %v3249 = vpack.c.b16 %v3230, %v3229
      %v3250 = vpack.c.b16 %v3232, %v3231
      %v3251 = vpack.c.b16 %v3234, %v3233
      %v3252 = vpack.c.b16 %v3236, %v3235
      %v3270 = vunpack.c.l.b16 %v3130
      %v3271 = vpack.c.b16 %v3270, %v3270
      %v3273 = vshrl.u32 %v3237, 16
      %v3275 = vshll.u32 %v3237, 16
      %v3277 = vrot.slane %v3275, 1
      %v3278 = vor.u32 %v3273, %v3277
      %v3280 = vshll.u32 %v3238, 16
      %v3282 = vrot.slane %v3280, 1
      %v3283 = vsel %vm425, %v3278, %v3282
      %v3284 = vshrl.u32 %v3238, 16
      %v3286 = vor.u32 %v3284, %v3282
      %v3288 = vshll.u32 %v3239, 16
      %v3290 = vrot.slane %v3288, 1
      %v3291 = vsel %vm425, %v3286, %v3290
      %v3292 = vshrl.u32 %v3239, 16
      %v3294 = vor.u32 %v3292, %v3290
      %v3296 = vshll.u32 %v3240, 16
      %v3298 = vrot.slane %v3296, 1
      %v3299 = vsel %vm425, %v3294, %v3298
      %v3300 = vshrl.u32 %v3240, 16
      %v3302 = vor.u32 %v3300, %v3298
      %v3304 = vshll.u32 %v3241, 16
      %v3306 = vrot.slane %v3304, 1
      %v3307 = vsel %vm425, %v3302, %v3306
      %v3308 = vshrl.u32 %v3241, 16
      %v3310 = vor.u32 %v3308, %v3306
      %v3312 = vshll.u32 %v3242, 16
      %v3314 = vrot.slane %v3312, 1
      %v3315 = vsel %vm425, %v3310, %v3314
      %v3316 = vshrl.u32 %v3242, 16
      %v3318 = vor.u32 %v3316, %v3314
      %v3320 = vshll.u32 %v3243, 16
      %v3322 = vrot.slane %v3320, 1
      %v3323 = vsel %vm425, %v3318, %v3322
      %v3324 = vshrl.u32 %v3243, 16
      %v3326 = vor.u32 %v3324, %v3322
      %v3328 = vshll.u32 %v3244, 16
      %v3330 = vrot.slane %v3328, 1
      %v3331 = vsel %vm425, %v3326, %v3330
      %v3332 = vshrl.u32 %v3244, 16
      %v3334 = vor.u32 %v3332, %v3330
      %v3336 = vshll.u32 %v3245, 16
      %v3338 = vrot.slane %v3336, 1
      %v3339 = vsel %vm425, %v3334, %v3338
      %v3340 = vshrl.u32 %v3245, 16
      %v3342 = vor.u32 %v3340, %v3338
      %v3344 = vshll.u32 %v3246, 16
      %v3346 = vrot.slane %v3344, 1
      %v3347 = vsel %vm425, %v3342, %v3346
      %v3348 = vshrl.u32 %v3246, 16
      %v3350 = vor.u32 %v3348, %v3346
      %v3352 = vshll.u32 %v3247, 16
      %v3354 = vrot.slane %v3352, 1
      %v3355 = vsel %vm425, %v3350, %v3354
      %v3356 = vshrl.u32 %v3247, 16
      %v3358 = vor.u32 %v3356, %v3354
      %v3360 = vshll.u32 %v3248, 16
      %v3362 = vrot.slane %v3360, 1
      %v3363 = vsel %vm425, %v3358, %v3362
      %v3364 = vshrl.u32 %v3248, 16
      %v3366 = vor.u32 %v3364, %v3362
      %v3368 = vshll.u32 %v3249, 16
      %v3370 = vrot.slane %v3368, 1
      %v3371 = vsel %vm425, %v3366, %v3370
      %v3372 = vshrl.u32 %v3249, 16
      %v3374 = vor.u32 %v3372, %v3370
      %v3376 = vshll.u32 %v3250, 16
      %v3378 = vrot.slane %v3376, 1
      %v3379 = vsel %vm425, %v3374, %v3378
      %v3380 = vshrl.u32 %v3250, 16
      %v3382 = vor.u32 %v3380, %v3378
      %v3384 = vshll.u32 %v3251, 16
      %v3386 = vrot.slane %v3384, 1
      %v3387 = vsel %vm425, %v3382, %v3386
      %v3388 = vshrl.u32 %v3251, 16
      %v3390 = vor.u32 %v3388, %v3386
      %v3392 = vshll.u32 %v3252, 16
      %v3394 = vrot.slane %v3392, 1
      %v3395 = vsel %vm425, %v3390, %v3394
      %v3396 = vshrl.u32 %v3252, 16
      %v3398 = vor.u32 %v3396, %v3394
      %v3400 = vshll.u32 %v3271, 16
      %v3402 = vrot.slane %v3400, 1
      %v3403 = vsel %vm425, %v3398, %v3402
      %v3421 = vunpack.c.l.b16 %v3131
      %v3422 = vpack.c.b16 %v3206, %v3421
      %v3423 = vrot.slane %v3422, 1
      %v3424 = vrot.slane %v3238, 1
      %v3425 = vsel %vm599, %v3423, %v3424
      %v3426 = vrot.slane %v3239, 1
      %v3427 = vsel %vm599, %v3424, %v3426
      %v3428 = vrot.slane %v3240, 1
      %v3429 = vsel %vm599, %v3426, %v3428
      %v3430 = vrot.slane %v3241, 1
      %v3431 = vsel %vm599, %v3428, %v3430
      %v3432 = vrot.slane %v3242, 1
      %v3433 = vsel %vm599, %v3430, %v3432
      %v3434 = vrot.slane %v3243, 1
      %v3435 = vsel %vm599, %v3432, %v3434
      %v3436 = vrot.slane %v3244, 1
      %v3437 = vsel %vm599, %v3434, %v3436
      %v3438 = vrot.slane %v3245, 1
      %v3439 = vsel %vm599, %v3436, %v3438
      %v3440 = vrot.slane %v3246, 1
      %v3441 = vsel %vm599, %v3438, %v3440
      %v3442 = vrot.slane %v3247, 1
      %v3443 = vsel %vm599, %v3440, %v3442
      %v3444 = vrot.slane %v3248, 1
      %v3445 = vsel %vm599, %v3442, %v3444
      %v3446 = vrot.slane %v3249, 1
      %v3447 = vsel %vm599, %v3444, %v3446
      %v3448 = vrot.slane %v3250, 1
      %v3449 = vsel %vm599, %v3446, %v3448
      %v3450 = vrot.slane %v3251, 1
      %v3451 = vsel %vm599, %v3448, %v3450
      %v3452 = vrot.slane %v3252, 1
      %v3453 = vsel %vm599, %v3450, %v3452
      %v3454 = vrot.slane %v3271, 1
      %v3455 = vsel %vm599, %v3452, %v3454
      %v3476 = vunpack.c.l.b16 %v3132
      %v3477 = vunpack.c.l.b16 %v3133
      %v3478 = vunpack.c.l.b16 %v3134
      %v3479 = vunpack.c.l.b16 %v3135
      %v3480 = vpack.c.b16 %v3208, %v3476
      %v3481 = vpack.c.b16 %v3478, %v3477
      %v3482 = vpack.c.b16 %v3479, %v3479
      %v3483 = vrot.slane %v3480, 1
      %v3484 = vsel %vm599, %v3483, %v3426
      %v3485 = vrot.slane %v3481, 1
      %v3486 = vsel %vm599, %v3452, %v3485
      %v3487 = vrot.slane %v3482, 1
      %v3488 = vsel %vm599, %v3485, %v3487
      %v3493 = vunpack.c.l.b16 %v3136
      %v3494 = vpack.c.b16 %v3493, %v3493
      %v3496 = vshrl.u32 %v3480, 16
      %v3498 = vrot.slane %v3496, 1
      %v3499 = vshll.u32 %v3480, 16
      %v3501 = vrot.slane %v3499, 2
      %v3502 = vor.u32 %v3498, %v3501
      %v3503 = vrot.slane %v3292, 1
      %v3504 = vrot.slane %v3288, 2
      %v3505 = vor.u32 %v3503, %v3504
      %v3506 = vsel %vm680, %v3502, %v3505
      %v3507 = vrot.slane %v3300, 1
      %v3508 = vrot.slane %v3296, 2
      %v3509 = vor.u32 %v3507, %v3508
      %v3510 = vsel %vm680, %v3505, %v3509
      %v3511 = vrot.slane %v3308, 1
      %v3512 = vrot.slane %v3304, 2
      %v3513 = vor.u32 %v3511, %v3512
      %v3514 = vsel %vm680, %v3509, %v3513
      %v3515 = vrot.slane %v3316, 1
      %v3516 = vrot.slane %v3312, 2
      %v3517 = vor.u32 %v3515, %v3516
      %v3518 = vsel %vm680, %v3513, %v3517
      %v3519 = vrot.slane %v3324, 1
      %v3520 = vrot.slane %v3320, 2
      %v3521 = vor.u32 %v3519, %v3520
      %v3522 = vsel %vm680, %v3517, %v3521
      %v3523 = vrot.slane %v3332, 1
      %v3524 = vrot.slane %v3328, 2
      %v3525 = vor.u32 %v3523, %v3524
      %v3526 = vsel %vm680, %v3521, %v3525
      %v3527 = vrot.slane %v3340, 1
      %v3528 = vrot.slane %v3336, 2
      %v3529 = vor.u32 %v3527, %v3528
      %v3530 = vsel %vm680, %v3525, %v3529
      %v3531 = vrot.slane %v3348, 1
      %v3532 = vrot.slane %v3344, 2
      %v3533 = vor.u32 %v3531, %v3532
      %v3534 = vsel %vm680, %v3529, %v3533
      %v3535 = vrot.slane %v3356, 1
      %v3536 = vrot.slane %v3352, 2
      %v3537 = vor.u32 %v3535, %v3536
      %v3538 = vsel %vm680, %v3533, %v3537
      %v3539 = vrot.slane %v3364, 1
      %v3540 = vrot.slane %v3360, 2
      %v3541 = vor.u32 %v3539, %v3540
      %v3542 = vsel %vm680, %v3537, %v3541
      %v3543 = vrot.slane %v3372, 1
      %v3544 = vrot.slane %v3368, 2
      %v3545 = vor.u32 %v3543, %v3544
      %v3546 = vsel %vm680, %v3541, %v3545
      %v3547 = vrot.slane %v3380, 1
      %v3548 = vrot.slane %v3376, 2
      %v3549 = vor.u32 %v3547, %v3548
      %v3550 = vsel %vm680, %v3545, %v3549
      %v3551 = vrot.slane %v3388, 1
      %v3552 = vrot.slane %v3384, 2
      %v3553 = vor.u32 %v3551, %v3552
      %v3554 = vsel %vm680, %v3549, %v3553
      %v3555 = vrot.slane %v3396, 1
      %v3556 = vrot.slane %v3392, 2
      %v3557 = vor.u32 %v3555, %v3556
      %v3558 = vsel %vm680, %v3553, %v3557
      %v3560 = vshrl.u32 %v3481, 16
      %v3562 = vrot.slane %v3560, 1
      %v3563 = vshll.u32 %v3481, 16
      %v3565 = vrot.slane %v3563, 2
      %v3566 = vor.u32 %v3562, %v3565
      %v3567 = vsel %vm680, %v3557, %v3566
      %v3569 = vshrl.u32 %v3494, 16
      %v3571 = vrot.slane %v3569, 1
      %v3572 = vshll.u32 %v3494, 16
      %v3574 = vrot.slane %v3572, 2
      %v3575 = vor.u32 %v3571, %v3574
      %v3576 = vsel %vm680, %v3566, %v3575
      %v3594 = vunpack.c.l.b16 %v3137
      %v3595 = vpack.c.b16 %v3208, %v3594
      %v3596 = vrot.slane %v3595, 2
      %v3597 = vrot.slane %v3239, 2
      %v3598 = vsel %vm793, %v3596, %v3597
      %v3599 = vrot.slane %v3240, 2
      %v3600 = vsel %vm793, %v3597, %v3599
      %v3601 = vrot.slane %v3241, 2
      %v3602 = vsel %vm793, %v3599, %v3601
      %v3603 = vrot.slane %v3242, 2
      %v3604 = vsel %vm793, %v3601, %v3603
      %v3605 = vrot.slane %v3243, 2
      %v3606 = vsel %vm793, %v3603, %v3605
      %v3607 = vrot.slane %v3244, 2
      %v3608 = vsel %vm793, %v3605, %v3607
      %v3609 = vrot.slane %v3245, 2
      %v3610 = vsel %vm793, %v3607, %v3609
      %v3611 = vrot.slane %v3246, 2
      %v3612 = vsel %vm793, %v3609, %v3611
      %v3613 = vrot.slane %v3247, 2
      %v3614 = vsel %vm793, %v3611, %v3613
      %v3615 = vrot.slane %v3248, 2
      %v3616 = vsel %vm793, %v3613, %v3615
      %v3617 = vrot.slane %v3249, 2
      %v3618 = vsel %vm793, %v3615, %v3617
      %v3619 = vrot.slane %v3250, 2
      %v3620 = vsel %vm793, %v3617, %v3619
      %v3621 = vrot.slane %v3251, 2
      %v3622 = vsel %vm793, %v3619, %v3621
      %v3623 = vrot.slane %v3252, 2
      %v3624 = vsel %vm793, %v3621, %v3623
      %v3625 = vrot.slane %v3481, 2
      %v3626 = vsel %vm793, %v3623, %v3625
      %v3627 = vrot.slane %v3494, 2
      %v3628 = vsel %vm793, %v3625, %v3627
      %v3678 = vunpack.c.l.b16 %v3138
      %v3679 = vunpack.c.l.b16 %v3139
      %v3680 = vunpack.c.l.b16 %v3140
      %v3681 = vunpack.c.l.b16 %v3141
      %v3682 = vunpack.c.l.b16 %v3142
      %v3683 = vunpack.c.l.b16 %v3143
      %v3684 = vunpack.c.l.b16 %v3144
      %v3685 = vunpack.c.l.b16 %v3145
      %v3686 = vunpack.c.l.b16 %v3146
      %v3687 = vunpack.c.l.b16 %v3147
      %v3688 = vunpack.c.l.b16 %v3148
      %v3689 = vunpack.c.l.b16 %v3149
      %v3690 = vunpack.c.l.b16 %v3150
      %v3691 = vunpack.c.l.b16 %v3151
      %v3692 = vunpack.c.l.b16 %v3152
      %v3693 = vunpack.c.l.b16 %v3153
      %v3694 = vunpack.c.l.b16 %v3154
      %v3695 = vunpack.c.l.b16 %v3155
      %v3696 = vunpack.c.l.b16 %v3156
      %v3697 = vunpack.c.l.b16 %v3157
      %v3698 = vunpack.c.l.b16 %v3158
      %v3699 = vunpack.c.l.b16 %v3159
      %v3700 = vunpack.c.l.b16 %v3160
      %v3701 = vunpack.c.l.b16 %v3161
      %v3702 = vunpack.c.l.b16 %v3162
      %v3703 = vunpack.c.l.b16 %v3163
      %v3704 = vunpack.c.l.b16 %v3164
      %v3705 = vunpack.c.l.b16 %v3165
      %v3706 = vunpack.c.l.b16 %v3166
      %v3707 = vunpack.c.l.b16 %v3167
      %v3708 = vunpack.c.l.b16 %v3168
      %v3709 = vunpack.c.l.b16 %v3169
      %v3710 = vunpack.c.l.b16 %v3170
      %v3711 = vpack.c.b16 %v3679, %v3678
      %v3712 = vpack.c.b16 %v3681, %v3680
      %v3713 = vpack.c.b16 %v3683, %v3682
      %v3714 = vpack.c.b16 %v3685, %v3684
      %v3715 = vpack.c.b16 %v3687, %v3686
      %v3716 = vpack.c.b16 %v3689, %v3688
      %v3717 = vpack.c.b16 %v3691, %v3690
      %v3718 = vpack.c.b16 %v3693, %v3692
      %v3719 = vpack.c.b16 %v3695, %v3694
      %v3720 = vpack.c.b16 %v3697, %v3696
      %v3721 = vpack.c.b16 %v3699, %v3698
      %v3722 = vpack.c.b16 %v3701, %v3700
      %v3723 = vpack.c.b16 %v3703, %v3702
      %v3724 = vpack.c.b16 %v3705, %v3704
      %v3725 = vpack.c.b16 %v3707, %v3706
      %v3726 = vpack.c.b16 %v3709, %v3708
      %v3727 = vpack.c.b16 %v3710, %v3710
      %v3728 = vrot.slane %v3711, 2
      %v3729 = vrot.slane %v3712, 2
      %v3730 = vsel %vm793, %v3728, %v3729
      %v3731 = vrot.slane %v3713, 2
      %v3732 = vsel %vm793, %v3729, %v3731
      %v3733 = vrot.slane %v3714, 2
      %v3734 = vsel %vm793, %v3731, %v3733
      %v3735 = vrot.slane %v3715, 2
      %v3736 = vsel %vm793, %v3733, %v3735
      %v3737 = vrot.slane %v3716, 2
      %v3738 = vsel %vm793, %v3735, %v3737
      %v3739 = vrot.slane %v3717, 2
      %v3740 = vsel %vm793, %v3737, %v3739
      %v3741 = vrot.slane %v3718, 2
      %v3742 = vsel %vm793, %v3739, %v3741
      %v3743 = vrot.slane %v3719, 2
      %v3744 = vsel %vm793, %v3741, %v3743
      %v3745 = vrot.slane %v3720, 2
      %v3746 = vsel %vm793, %v3743, %v3745
      %v3747 = vrot.slane %v3721, 2
      %v3748 = vsel %vm793, %v3745, %v3747
      %v3749 = vrot.slane %v3722, 2
      %v3750 = vsel %vm793, %v3747, %v3749
      %v3751 = vrot.slane %v3723, 2
      %v3752 = vsel %vm793, %v3749, %v3751
      %v3753 = vrot.slane %v3724, 2
      %v3754 = vsel %vm793, %v3751, %v3753
      %v3755 = vrot.slane %v3725, 2
      %v3756 = vsel %vm793, %v3753, %v3755
      %v3757 = vrot.slane %v3726, 2
      %v3758 = vsel %vm793, %v3755, %v3757
      %v3759 = vrot.slane %v3727, 2
      %v3760 = vsel %vm793, %v3757, %v3759
      %v3778 = vunpack.c.l.b16 %v3171
      %v3779 = vpack.c.b16 %v3778, %v3778
      %v3781 = vshrl.u32 %v3711, 16
      %v3783 = vrot.slane %v3781, 2
      %v3784 = vshll.u32 %v3711, 16
      %v3786 = vrot.slane %v3784, 3
      %v3787 = vor.u32 %v3783, %v3786
      %v3789 = vshrl.u32 %v3712, 16
      %v3791 = vrot.slane %v3789, 2
      %v3792 = vshll.u32 %v3712, 16
      %v3794 = vrot.slane %v3792, 3
      %v3795 = vor.u32 %v3791, %v3794
      %v3796 = vsel %vm1004, %v3787, %v3795
      %v3798 = vshrl.u32 %v3713, 16
      %v3800 = vrot.slane %v3798, 2
      %v3801 = vshll.u32 %v3713, 16
      %v3803 = vrot.slane %v3801, 3
      %v3804 = vor.u32 %v3800, %v3803
      %v3805 = vsel %vm1004, %v3795, %v3804
      %v3807 = vshrl.u32 %v3714, 16
      %v3809 = vrot.slane %v3807, 2
      %v3810 = vshll.u32 %v3714, 16
      %v3812 = vrot.slane %v3810, 3
      %v3813 = vor.u32 %v3809, %v3812
      %v3814 = vsel %vm1004, %v3804, %v3813
      %v3816 = vshrl.u32 %v3715, 16
      %v3818 = vrot.slane %v3816, 2
      %v3819 = vshll.u32 %v3715, 16
      %v3821 = vrot.slane %v3819, 3
      %v3822 = vor.u32 %v3818, %v3821
      %v3823 = vsel %vm1004, %v3813, %v3822
      %v3825 = vshrl.u32 %v3716, 16
      %v3827 = vrot.slane %v3825, 2
      %v3828 = vshll.u32 %v3716, 16
      %v3830 = vrot.slane %v3828, 3
      %v3831 = vor.u32 %v3827, %v3830
      %v3832 = vsel %vm1004, %v3822, %v3831
      %v3834 = vshrl.u32 %v3717, 16
      %v3836 = vrot.slane %v3834, 2
      %v3837 = vshll.u32 %v3717, 16
      %v3839 = vrot.slane %v3837, 3
      %v3840 = vor.u32 %v3836, %v3839
      %v3841 = vsel %vm1004, %v3831, %v3840
      %v3843 = vshrl.u32 %v3718, 16
      %v3845 = vrot.slane %v3843, 2
      %v3846 = vshll.u32 %v3718, 16
      %v3848 = vrot.slane %v3846, 3
      %v3849 = vor.u32 %v3845, %v3848
      %v3850 = vsel %vm1004, %v3840, %v3849
      %v3852 = vshrl.u32 %v3719, 16
      %v3854 = vrot.slane %v3852, 2
      %v3855 = vshll.u32 %v3719, 16
      %v3857 = vrot.slane %v3855, 3
      %v3858 = vor.u32 %v3854, %v3857
      %v3859 = vsel %vm1004, %v3849, %v3858
      %v3861 = vshrl.u32 %v3720, 16
      %v3863 = vrot.slane %v3861, 2
      %v3864 = vshll.u32 %v3720, 16
      %v3866 = vrot.slane %v3864, 3
      %v3867 = vor.u32 %v3863, %v3866
      %v3868 = vsel %vm1004, %v3858, %v3867
      %v3870 = vshrl.u32 %v3721, 16
      %v3872 = vrot.slane %v3870, 2
      %v3873 = vshll.u32 %v3721, 16
      %v3875 = vrot.slane %v3873, 3
      %v3876 = vor.u32 %v3872, %v3875
      %v3877 = vsel %vm1004, %v3867, %v3876
      %v3879 = vshrl.u32 %v3722, 16
      %v3881 = vrot.slane %v3879, 2
      %v3882 = vshll.u32 %v3722, 16
      %v3884 = vrot.slane %v3882, 3
      %v3885 = vor.u32 %v3881, %v3884
      %v3886 = vsel %vm1004, %v3876, %v3885
      %v3888 = vshrl.u32 %v3723, 16
      %v3890 = vrot.slane %v3888, 2
      %v3891 = vshll.u32 %v3723, 16
      %v3893 = vrot.slane %v3891, 3
      %v3894 = vor.u32 %v3890, %v3893
      %v3895 = vsel %vm1004, %v3885, %v3894
      %v3897 = vshrl.u32 %v3724, 16
      %v3899 = vrot.slane %v3897, 2
      %v3900 = vshll.u32 %v3724, 16
      %v3902 = vrot.slane %v3900, 3
      %v3903 = vor.u32 %v3899, %v3902
      %v3904 = vsel %vm1004, %v3894, %v3903
      %v3906 = vshrl.u32 %v3725, 16
      %v3908 = vrot.slane %v3906, 2
      %v3909 = vshll.u32 %v3725, 16
      %v3911 = vrot.slane %v3909, 3
      %v3912 = vor.u32 %v3908, %v3911
      %v3913 = vsel %vm1004, %v3903, %v3912
      %v3915 = vshrl.u32 %v3726, 16
      %v3917 = vrot.slane %v3915, 2
      %v3918 = vshll.u32 %v3726, 16
      %v3920 = vrot.slane %v3918, 3
      %v3921 = vor.u32 %v3917, %v3920
      %v3922 = vsel %vm1004, %v3912, %v3921
      %v3924 = vshrl.u32 %v3779, 16
      %v3926 = vrot.slane %v3924, 2
      %v3927 = vshll.u32 %v3779, 16
      %v3929 = vrot.slane %v3927, 3
      %v3930 = vor.u32 %v3926, %v3929
      %v3931 = vsel %vm1004, %v3921, %v3930
      %v3949 = vunpack.c.l.b16 %v3172
      %v3950 = vpack.c.b16 %v3679, %v3949
      %v3951 = vrot.slane %v3950, 3
      %v3952 = vrot.slane %v3712, 3
      %v3953 = vsel %vm1197, %v3951, %v3952
      %v3954 = vrot.slane %v3713, 3
      %v3955 = vsel %vm1197, %v3952, %v3954
      %v3956 = vrot.slane %v3714, 3
      %v3957 = vsel %vm1197, %v3954, %v3956
      %v3958 = vrot.slane %v3715, 3
      %v3959 = vsel %vm1197, %v3956, %v3958
      %v3960 = vrot.slane %v3716, 3
      %v3961 = vsel %vm1197, %v3958, %v3960
      %v3962 = vrot.slane %v3717, 3
      %v3963 = vsel %vm1197, %v3960, %v3962
      %v3964 = vrot.slane %v3718, 3
      %v3965 = vsel %vm1197, %v3962, %v3964
      %v3966 = vrot.slane %v3719, 3
      %v3967 = vsel %vm1197, %v3964, %v3966
      %v3968 = vrot.slane %v3720, 3
      %v3969 = vsel %vm1197, %v3966, %v3968
      %v3970 = vrot.slane %v3721, 3
      %v3971 = vsel %vm1197, %v3968, %v3970
      %v3972 = vrot.slane %v3722, 3
      %v3973 = vsel %vm1197, %v3970, %v3972
      %v3974 = vrot.slane %v3723, 3
      %v3975 = vsel %vm1197, %v3972, %v3974
      %v3976 = vrot.slane %v3724, 3
      %v3977 = vsel %vm1197, %v3974, %v3976
      %v3978 = vrot.slane %v3725, 3
      %v3979 = vsel %vm1197, %v3976, %v3978
      %v3980 = vrot.slane %v3726, 3
      %v3981 = vsel %vm1197, %v3978, %v3980
      %v3982 = vrot.slane %v3779, 3
      %v3983 = vsel %vm1197, %v3980, %v3982
      %v4000 = vld [vmem:[%s3] sm:$0xf]
      %v4001 = vld [vmem:[%s3 + $0x4] sm:$0xf]
      %v4002 = vld [vmem:[%s3 + $0x8] sm:$0xf]
      %v4003 = vld [vmem:[%s3 + $0xc] sm:$0xf]
      %v4004 = vld [vmem:[%s3 + $0x10] sm:$0xf]
      %v4005 = vld [vmem:[%s3 + $0x14] sm:$0xf]
      %v4006 = vld [vmem:[%s3 + $0x18] sm:$0xf]
      %v4007 = vld [vmem:[%s3 + $0x1c] sm:$0xf]
      %v4008 = vld [vmem:[%s3 + $0x20] sm:$0xf]
      %v4009 = vld [vmem:[%s3 + $0x24] sm:$0xf]
      %v4010 = vld [vmem:[%s3 + $0x28] sm:$0xf]
      %v4011 = vld [vmem:[%s3 + $0x2c] sm:$0xf]
      %v4012 = vld [vmem:[%s3 + $0x30] sm:$0xf]
      %v4013 = vld [vmem:[%s3 + $0x34] sm:$0xf]
      %v4014 = vld [vmem:[%s3 + $0x38] sm:$0xf]
      %v4015 = vld [vmem:[%s3 + $0x3c] sm:$0xf]
      %v4016 = vld [vmem:[%s3 + $0x40] sm:$0xf]
      %v4017 = vld [vmem:[%s3 + $0x44] sm:$0xf]
      %v4018 = vld [vmem:[%s3 + $0x48] sm:$0xf]
      %v4019 = vld [vmem:[%s3 + $0x4c] sm:$0xf]
      %v4020 = vld [vmem:[%s3 + $0x50] sm:$0xf]
      %v4021 = vld [vmem:[%s3 + $0x54] sm:$0xf]
      %v4022 = vld [vmem:[%s3 + $0x58] sm:$0xf]
      %v4023 = vld [vmem:[%s3 + $0x5c] sm:$0xf]
      %v4024 = vld [vmem:[%s3 + $0x60] sm:$0xf]
      %v4025 = vld [vmem:[%s3 + $0x64] sm:$0xf]
      %v4026 = vld [vmem:[%s3 + $0x68] sm:$0xf]
      %v4027 = vld [vmem:[%s3 + $0x6c] sm:$0xf]
      %v4028 = vld [vmem:[%s3 + $0x70] sm:$0xf]
      %v4029 = vld [vmem:[%s3 + $0x74] sm:$0xf]
      %v4030 = vld [vmem:[%s3 + $0x78] sm:$0xf]
      %v4031 = vld [vmem:[%s3 + $0x7c] sm:$0xf]
      %v4032 = vld [vmem:[%s3 + $0x80] sm:$0xf]
      %v4033 = vld [vmem:[%s3 + $0x84] sm:$0xf]
      %v4034 = vld [vmem:[%s3 + $0x88] sm:$0xf]
      %v4035 = vld [vmem:[%s3 + $0x8c] sm:$0xf]
      %v4036 = vld [vmem:[%s3 + $0x90] sm:$0xf]
      %v4037 = vld [vmem:[%s3 + $0x94] sm:$0xf]
      %v4038 = vld [vmem:[%s3 + $0x98] sm:$0xf]
      %v4039 = vld [vmem:[%s3 + $0x9c] sm:$0xf]
      %v4040 = vld [vmem:[%s3 + $0xa0] sm:$0xf]
      %v4041 = vld [vmem:[%s3 + $0xa4] sm:$0xf]
      %v4042 = vld [vmem:[%s3 + $0xa8] sm:$0xf]
      %v4043 = vld [vmem:[%s3 + $0xac] sm:$0xf]
      %v4044 = vld [vmem:[%s3 + $0xb0] sm:$0xf]
      %v4045 = vld [vmem:[%s3 + $0xb4] sm:$0xf]
      %v4046 = vld [vmem:[%s3 + $0xb8] sm:$0xf]
      %v4047 = vld [vmem:[%s3 + $0xbc] sm:$0xf]
      %v4048 = vld [vmem:[%s3 + $0xc0] sm:$0xf]
      %v4049 = vld [vmem:[%s3 + $0xc4] sm:$0xf]
      %v4050 = vld [vmem:[%s3 + $0xc8] sm:$0xf]
      %v4051 = vld [vmem:[%s3 + $0xcc] sm:$0xf]
      %v4052 = vld [vmem:[%s3 + $0xd0] sm:$0xf]
      %v4053 = vld [vmem:[%s3 + $0xd4] sm:$0xf]
      %v4054 = vld [vmem:[%s3 + $0xd8] sm:$0xf]
      %v4055 = vld [vmem:[%s3 + $0xdc] sm:$0xf]
      %v4056 = vld [vmem:[%s3 + $0xe0] sm:$0xf]
      %v4057 = vld [vmem:[%s3 + $0xe4] sm:$0xf]
      %v4058 = vld [vmem:[%s3 + $0xe8] sm:$0xf]
      %v4059 = vld [vmem:[%s3 + $0xec] sm:$0xf]
      %v4060 = vld [vmem:[%s3 + $0xf0] sm:$0xf]
      %v4061 = vld [vmem:[%s3 + $0xf4] sm:$0xf]
      %v4062 = vld [vmem:[%s3 + $0xf8] sm:$0xf]
      %v4063 = vld [vmem:[%s3 + $0xfc] sm:$0xf]
      %v4064 = vld [vmem:[%s3 + $0x100] sm:$0xf]
      %v4065 = vld [vmem:[%s3 + $0x104] sm:$0xf]
      %v4066 = vld [vmem:[%s3 + $0x108] sm:$0xf]
      %v4067 = vld [vmem:[%s3 + $0x10c] sm:$0xf]
      %v4068 = vld [vmem:[%s3 + $0x110] sm:$0xf]
      %v4069 = vld [vmem:[%s3 + $0x114] sm:$0xf]
      %v4070 = vld [vmem:[%s3 + $0x118] sm:$0xf]
      %v4071 = vld [vmem:[%s3 + $0x11c] sm:$0xf]
      %v4072 = vld [vmem:[%s3 + $0x120] sm:$0xf]
      %v4073 = vld [vmem:[%s3 + $0x124] sm:$0xf]
      %v4074 = vld [vmem:[%s3 + $0x128] sm:$0xf]
      %v4075 = vld [vmem:[%s3 + $0x12c] sm:$0xf]
      %v4076 = vld [vmem:[%s3 + $0x130] sm:$0xf]
      %v4077 = vld [vmem:[%s3 + $0x134] sm:$0xf]
      %v4078 = vld [vmem:[%s3 + $0x138] sm:$0xf]
      %v4079 = vld [vmem:[%s3 + $0x13c] sm:$0xf]
      %v4080 = vld [vmem:[%s3 + $0x140] sm:$0xf]
      %v4081 = vld [vmem:[%s3 + $0x144] sm:$0xf]
      %v4082 = vld [vmem:[%s3 + $0x148] sm:$0xf]
      %v4083 = vld [vmem:[%s3 + $0x14c] sm:$0xf]
      %v4084 = vld [vmem:[%s3 + $0x150] sm:$0xf]
      %v4085 = vld [vmem:[%s3 + $0x154] sm:$0xf]
      %v4086 = vld [vmem:[%s3 + $0x158] sm:$0xf]
      %v4087 = vld [vmem:[%s3 + $0x15c] sm:$0xf]
      %v4088 = vld [vmem:[%s3 + $0x160] sm:$0xf]
      %v4089 = vld [vmem:[%s3 + $0x164] sm:$0xf]
      %v4090 = vld [vmem:[%s3 + $0x168] sm:$0xf]
      %v4091 = vld [vmem:[%s3 + $0x16c] sm:$0xf]
      %v4092 = vld [vmem:[%s3 + $0x170] sm:$0xf]
      %v4093 = vld [vmem:[%s3 + $0x174] sm:$0xf]
      %v4094 = vld [vmem:[%s3 + $0x178] sm:$0xf]
      %v4095 = vld [vmem:[%s3 + $0x17c] sm:$0xf]
      %v4096 = vld [vmem:[%s3 + $0x180] sm:$0xf]
      %v4097 = vld [vmem:[%s3 + $0x184] sm:$0xf]
      %v4098 = vld [vmem:[%s3 + $0x188] sm:$0xf]
      %v4099 = vld [vmem:[%s3 + $0x18c] sm:$0xf]
      %v4100 = vld [vmem:[%s3 + $0x190] sm:$0xf]
      %v4101 = vld [vmem:[%s3 + $0x194] sm:$0xf]
      %v4102 = vld [vmem:[%s3 + $0x198] sm:$0xf]
      %v4103 = vld [vmem:[%s3 + $0x19c] sm:$0xf]
      %v4104 = vld [vmem:[%s3 + $0x1a0] sm:$0xf]
      %v4105 = vld [vmem:[%s3 + $0x1a4] sm:$0xf]
      %v4106 = vld [vmem:[%s3 + $0x1a8] sm:$0xf]
      %v4107 = vld [vmem:[%s3 + $0x1ac] sm:$0xf]
      %v4108 = vld [vmem:[%s3 + $0x1b0] sm:$0xf]
      %v4109 = vld [vmem:[%s3 + $0x1b4] sm:$0xf]
      %v4110 = vld [vmem:[%s3 + $0x1b8] sm:$0xf]
      %v4111 = vld [vmem:[%s3 + $0x1bc] sm:$0xf]
      %v4112 = vld [vmem:[%s3 + $0x1c0] sm:$0xf]
      %v4113 = vld [vmem:[%s3 + $0x1c4] sm:$0xf]
      %v4114 = vld [vmem:[%s3 + $0x1c8] sm:$0xf]
      %v4115 = vld [vmem:[%s3 + $0x1cc] sm:$0xf]
      %v4116 = vld [vmem:[%s3 + $0x1d0] sm:$0xf]
      %v4117 = vld [vmem:[%s3 + $0x1d4] sm:$0xf]
      %v4118 = vld [vmem:[%s3 + $0x1d8] sm:$0xf]
      %v4119 = vld [vmem:[%s3 + $0x1dc] sm:$0xf]
      %v4120 = vld [vmem:[%s3 + $0x1e0] sm:$0xf]
      %v4121 = vld [vmem:[%s3 + $0x1e4] sm:$0xf]
      %v4122 = vld [vmem:[%s3 + $0x1e8] sm:$0xf]
      %v4123 = vld [vmem:[%s3 + $0x1ec] sm:$0xf]
      %v4124 = vld [vmem:[%s3 + $0x1f0] sm:$0xf]
      %v4125 = vld [vmem:[%s3 + $0x1f4] sm:$0xf]
      %v4126 = vld [vmem:[%s3 + $0x1f8] sm:$0xf]
      %v4127 = vld [vmem:[%s3 + $0x1fc] sm:$0xf]
      %v4128 = vld [vmem:[%s3 + $0x200] sm:$0xf]
      %v4129 = vld [vmem:[%s3 + $0x204] sm:$0xf]
      %v4130 = vld [vmem:[%s3 + $0x208] sm:$0xf]
      %v4131 = vld [vmem:[%s3 + $0x20c] sm:$0xf]
      %v4132 = vld [vmem:[%s3 + $0x210] sm:$0xf]
      %v4133 = vld [vmem:[%s3 + $0x214] sm:$0xf]
      %v4134 = vld [vmem:[%s3 + $0x218] sm:$0xf]
      %v4135 = vld [vmem:[%s3 + $0x21c] sm:$0xf]
      %v4136 = vld [vmem:[%s3 + $0x220] sm:$0xf]
      %v4137 = vld [vmem:[%s3 + $0x224] sm:$0xf]
      %v4138 = vld [vmem:[%s3 + $0x228] sm:$0xf]
      %v4139 = vld [vmem:[%s3 + $0x22c] sm:$0xf]
      %v4140 = vld [vmem:[%s3 + $0x230] sm:$0xf]
      %v4141 = vld [vmem:[%s3 + $0x234] sm:$0xf]
      %v4142 = vld [vmem:[%s3 + $0x238] sm:$0xf]
      %v4143 = vld [vmem:[%s3 + $0x23c] sm:$0xf]
      %v4144 = vld [vmem:[%s4] sm:$0x1]
      %v4146 = vperm.slane %v4144, 0
      %v4292 = vunpack.c.l.b16 %v4000
      %v4293 = vunpack.c.l.b16 %v4001
      %v4294 = vunpack.c.l.b16 %v4002
      %v4295 = vunpack.c.l.b16 %v4003
      %v4296 = vunpack.c.l.b16 %v4004
      %v4297 = vunpack.c.l.b16 %v4005
      %v4298 = vunpack.c.l.b16 %v4006
      %v4299 = vunpack.c.l.b16 %v4007
      %v4300 = vunpack.c.l.b16 %v4008
      %v4301 = vunpack.c.l.b16 %v4009
      %v4302 = vunpack.c.l.b16 %v4010
      %v4303 = vunpack.c.l.b16 %v4011
      %v4304 = vunpack.c.l.b16 %v4012
      %v4305 = vunpack.c.l.b16 %v4013
      %v4306 = vunpack.c.l.b16 %v4014
      %v4307 = vunpack.c.l.b16 %v4015
      %v4308 = vunpack.c.l.b16 %v4016
      %v4309 = vunpack.c.l.b16 %v4017
      %v4310 = vunpack.c.l.b16 %v4018
      %v4311 = vunpack.c.l.b16 %v4019
      %v4312 = vunpack.c.l.b16 %v4020
      %v4313 = vunpack.c.l.b16 %v4021
      %v4314 = vunpack.c.l.b16 %v4022
      %v4315 = vunpack.c.l.b16 %v4023
      %v4316 = vunpack.c.l.b16 %v4024
      %v4317 = vunpack.c.l.b16 %v4025
      %v4318 = vunpack.c.l.b16 %v4026
      %v4319 = vunpack.c.l.b16 %v4027
      %v4320 = vunpack.c.l.b16 %v4028
      %v4321 = vunpack.c.l.b16 %v4029
      %v4322 = vunpack.c.l.b16 %v4030
      %v4323 = vunpack.c.l.b16 %v4031
      %v4324 = vunpack.c.l.b16 %v4032
      %v4325 = vunpack.c.l.b16 %v4033
      %v4326 = vunpack.c.l.b16 %v4034
      %v4327 = vunpack.c.l.b16 %v4035
      %v4328 = vunpack.c.l.b16 %v4036
      %v4329 = vunpack.c.l.b16 %v4037
      %v4330 = vunpack.c.l.b16 %v4038
      %v4331 = vunpack.c.l.b16 %v4039
      %v4332 = vunpack.c.l.b16 %v4040
      %v4333 = vunpack.c.l.b16 %v4041
      %v4334 = vunpack.c.l.b16 %v4042
      %v4335 = vunpack.c.l.b16 %v4043
      %v4336 = vunpack.c.l.b16 %v4044
      %v4337 = vunpack.c.l.b16 %v4045
      %v4338 = vunpack.c.l.b16 %v4046
      %v4339 = vunpack.c.l.b16 %v4047
      %v4340 = vunpack.c.l.b16 %v4048
      %v4341 = vunpack.c.l.b16 %v4049
      %v4342 = vunpack.c.l.b16 %v4050
      %v4343 = vunpack.c.l.b16 %v4051
      %v4344 = vunpack.c.l.b16 %v4052
      %v4345 = vunpack.c.l.b16 %v4053
      %v4346 = vunpack.c.l.b16 %v4054
      %v4347 = vunpack.c.l.b16 %v4055
      %v4348 = vunpack.c.l.b16 %v4056
      %v4349 = vunpack.c.l.b16 %v4057
      %v4350 = vunpack.c.l.b16 %v4058
      %v4351 = vunpack.c.l.b16 %v4059
      %v4352 = vunpack.c.l.b16 %v4060
      %v4353 = vunpack.c.l.b16 %v4061
      %v4354 = vunpack.c.l.b16 %v4062
      %v4355 = vunpack.c.l.b16 %v4063
      %v4356 = vunpack.c.l.b16 %v4064
      %v4357 = vunpack.c.l.b16 %v4065
      %v4358 = vunpack.c.l.b16 %v4066
      %v4359 = vunpack.c.l.b16 %v4067
      %v4360 = vunpack.c.l.b16 %v4068
      %v4361 = vunpack.c.l.b16 %v4069
      %v4362 = vunpack.c.l.b16 %v4070
      %v4363 = vunpack.c.l.b16 %v4071
      %v4364 = vunpack.c.l.b16 %v4072
      %v4365 = vunpack.c.l.b16 %v4073
      %v4366 = vunpack.c.l.b16 %v4074
      %v4367 = vunpack.c.l.b16 %v4075
      %v4368 = vunpack.c.l.b16 %v4076
      %v4369 = vunpack.c.l.b16 %v4077
      %v4370 = vunpack.c.l.b16 %v4078
      %v4371 = vunpack.c.l.b16 %v4079
      %v4372 = vunpack.c.l.b16 %v4080
      %v4373 = vunpack.c.l.b16 %v4081
      %v4374 = vunpack.c.l.b16 %v4082
      %v4375 = vunpack.c.l.b16 %v4083
      %v4376 = vunpack.c.l.b16 %v4084
      %v4377 = vunpack.c.l.b16 %v4085
      %v4378 = vunpack.c.l.b16 %v4086
      %v4379 = vunpack.c.l.b16 %v4087
      %v4380 = vunpack.c.l.b16 %v4088
      %v4381 = vunpack.c.l.b16 %v4089
      %v4382 = vunpack.c.l.b16 %v4090
      %v4383 = vunpack.c.l.b16 %v4091
      %v4384 = vunpack.c.l.b16 %v4092
      %v4385 = vunpack.c.l.b16 %v4093
      %v4386 = vunpack.c.l.b16 %v4094
      %v4387 = vunpack.c.l.b16 %v4095
      %v4388 = vunpack.c.l.b16 %v4096
      %v4389 = vunpack.c.l.b16 %v4097
      %v4390 = vunpack.c.l.b16 %v4098
      %v4391 = vunpack.c.l.b16 %v4099
      %v4392 = vunpack.c.l.b16 %v4100
      %v4393 = vunpack.c.l.b16 %v4101
      %v4394 = vunpack.c.l.b16 %v4102
      %v4395 = vunpack.c.l.b16 %v4103
      %v4396 = vunpack.c.l.b16 %v4104
      %v4397 = vunpack.c.l.b16 %v4105
      %v4398 = vunpack.c.l.b16 %v4106
      %v4399 = vunpack.c.l.b16 %v4107
      %v4400 = vunpack.c.l.b16 %v4108
      %v4401 = vunpack.c.l.b16 %v4109
      %v4402 = vunpack.c.l.b16 %v4110
      %v4403 = vunpack.c.l.b16 %v4111
      %v4404 = vunpack.c.l.b16 %v4112
      %v4405 = vunpack.c.l.b16 %v4113
      %v4406 = vunpack.c.l.b16 %v4114
      %v4407 = vunpack.c.l.b16 %v4115
      %v4408 = vunpack.c.l.b16 %v4116
      %v4409 = vunpack.c.l.b16 %v4117
      %v4410 = vunpack.c.l.b16 %v4118
      %v4411 = vunpack.c.l.b16 %v4119
      %v4412 = vunpack.c.l.b16 %v4120
      %v4413 = vunpack.c.l.b16 %v4121
      %v4414 = vunpack.c.l.b16 %v4122
      %v4415 = vunpack.c.l.b16 %v4123
      %v4416 = vunpack.c.l.b16 %v4124
      %v4417 = vunpack.c.l.b16 %v4125
      %v4418 = vunpack.c.l.b16 %v4126
      %v4419 = vunpack.c.l.b16 %v4127
      %v4420 = vunpack.c.l.b16 %v4128
      %v4421 = vunpack.c.l.b16 %v4129
      %v4422 = vunpack.c.l.b16 %v4130
      %v4423 = vunpack.c.l.b16 %v4131
      %v4424 = vunpack.c.l.b16 %v4132
      %v4425 = vunpack.c.l.b16 %v4133
      %v4426 = vunpack.c.l.b16 %v4134
      %v4427 = vunpack.c.l.b16 %v4135
      %v4428 = vunpack.c.l.b16 %v4136
      %v4429 = vunpack.c.l.b16 %v4137
      %v4430 = vunpack.c.l.b16 %v4138
      %v4431 = vunpack.c.l.b16 %v4139
      %v4432 = vunpack.c.l.b16 %v4140
      %v4433 = vunpack.c.l.b16 %v4141
      %v4434 = vunpack.c.l.b16 %v4142
      %v4435 = vunpack.c.l.b16 %v4143
      %v4436 = vpack.c.b16 %v4293, %v4292
      %v4437 = vpack.c.b16 %v4295, %v4294
      %v4438 = vpack.c.b16 %v4297, %v4296
      %v4439 = vpack.c.b16 %v4299, %v4298
      %v4440 = vpack.c.b16 %v4301, %v4300
      %v4441 = vpack.c.b16 %v4303, %v4302
      %v4442 = vpack.c.b16 %v4305, %v4304
      %v4443 = vpack.c.b16 %v4307, %v4306
      %v4444 = vpack.c.b16 %v4309, %v4308
      %v4445 = vpack.c.b16 %v4311, %v4310
      %v4446 = vpack.c.b16 %v4313, %v4312
      %v4447 = vpack.c.b16 %v4315, %v4314
      %v4448 = vpack.c.b16 %v4317, %v4316
      %v4449 = vpack.c.b16 %v4319, %v4318
      %v4450 = vpack.c.b16 %v4321, %v4320
      %v4451 = vpack.c.b16 %v4323, %v4322
      %v4452 = vpack.c.b16 %v4325, %v4324
      %v4453 = vpack.c.b16 %v4327, %v4326
      %v4454 = vpack.c.b16 %v4329, %v4328
      %v4455 = vpack.c.b16 %v4331, %v4330
      %v4456 = vpack.c.b16 %v4333, %v4332
      %v4457 = vpack.c.b16 %v4335, %v4334
      %v4458 = vpack.c.b16 %v4337, %v4336
      %v4459 = vpack.c.b16 %v4339, %v4338
      %v4460 = vpack.c.b16 %v4341, %v4340
      %v4461 = vpack.c.b16 %v4343, %v4342
      %v4462 = vpack.c.b16 %v4345, %v4344
      %v4463 = vpack.c.b16 %v4347, %v4346
      %v4464 = vpack.c.b16 %v4349, %v4348
      %v4465 = vpack.c.b16 %v4351, %v4350
      %v4466 = vpack.c.b16 %v4353, %v4352
      %v4467 = vpack.c.b16 %v4355, %v4354
      %v4468 = vpack.c.b16 %v4357, %v4356
      %v4469 = vpack.c.b16 %v4359, %v4358
      %v4470 = vpack.c.b16 %v4361, %v4360
      %v4471 = vpack.c.b16 %v4363, %v4362
      %v4472 = vpack.c.b16 %v4365, %v4364
      %v4473 = vpack.c.b16 %v4367, %v4366
      %v4474 = vpack.c.b16 %v4369, %v4368
      %v4475 = vpack.c.b16 %v4371, %v4370
      %v4476 = vpack.c.b16 %v4373, %v4372
      %v4477 = vpack.c.b16 %v4375, %v4374
      %v4478 = vpack.c.b16 %v4377, %v4376
      %v4479 = vpack.c.b16 %v4379, %v4378
      %v4480 = vpack.c.b16 %v4381, %v4380
      %v4481 = vpack.c.b16 %v4383, %v4382
      %v4482 = vpack.c.b16 %v4385, %v4384
      %v4483 = vpack.c.b16 %v4387, %v4386
      %v4484 = vpack.c.b16 %v4389, %v4388
      %v4485 = vpack.c.b16 %v4391, %v4390
      %v4486 = vpack.c.b16 %v4393, %v4392
      %v4487 = vpack.c.b16 %v4395, %v4394
      %v4488 = vpack.c.b16 %v4397, %v4396
      %v4489 = vpack.c.b16 %v4399, %v4398
      %v4490 = vpack.c.b16 %v4401, %v4400
      %v4491 = vpack.c.b16 %v4403, %v4402
      %v4492 = vpack.c.b16 %v4405, %v4404
      %v4493 = vpack.c.b16 %v4407, %v4406
      %v4494 = vpack.c.b16 %v4409, %v4408
      %v4495 = vpack.c.b16 %v4411, %v4410
      %v4496 = vpack.c.b16 %v4413, %v4412
      %v4497 = vpack.c.b16 %v4415, %v4414
      %v4498 = vpack.c.b16 %v4417, %v4416
      %v4499 = vpack.c.b16 %v4419, %v4418
      %v4500 = vpack.c.b16 %v4421, %v4420
      %v4501 = vpack.c.b16 %v4423, %v4422
      %v4502 = vpack.c.b16 %v4425, %v4424
      %v4503 = vpack.c.b16 %v4427, %v4426
      %v4504 = vpack.c.b16 %v4429, %v4428
      %v4505 = vpack.c.b16 %v4431, %v4430
      %v4506 = vpack.c.b16 %v4433, %v4432
      %v4507 = vpack.c.b16 %v4435, %v4434
      %4580 = vmatpush.bf16.msra.mxu0 %v4443
      %4581 = vmatpush.bf16.msra.mxu0 %v4442
      %4582 = vmatpush.bf16.msra.mxu0 %v4441
      %4583 = vmatpush.bf16.msra.mxu0 %v4440
      %4584 = vmatpush.bf16.msra.mxu0 %v4439
      %4585 = vmatpush.bf16.msra.mxu0 %v4438
      %4586 = vmatpush.bf16.msra.mxu0 %v4437
      %4587 = vmatpush.bf16.msra.mxu0 %v4436
      %4588 = vmatmul.bf16.gmra.mxu0 %v3237
      %v4589 = vpop.f32.mrf.mxu0
      %v4590 = vadd.f32 %v4146, %v4589
      %v4591 = vpop.f32.mrf.mxu0
      %v4592 = vadd.f32 %v4146, %v4591
      %4593 = vmatmul.bf16.gmra.mxu0 %v3238
      %v4594 = vpop.f32.mrf.mxu0
      %v4595 = vadd.f32 %v4146, %v4594
      %v4596 = vpop.f32.mrf.mxu0
      %v4597 = vadd.f32 %v4146, %v4596
      %4598 = vmatmul.bf16.gmra.mxu0 %v3239
      %v4599 = vpop.f32.mrf.mxu0
      %v4600 = vadd.f32 %v4146, %v4599
      %v4601 = vpop.f32.mrf.mxu0
      %v4602 = vadd.f32 %v4146, %v4601
      %4603 = vmatmul.bf16.gmra.mxu0 %v3240
      %v4604 = vpop.f32.mrf.mxu0
      %v4605 = vadd.f32 %v4146, %v4604
      %v4606 = vpop.f32.mrf.mxu0
      %v4607 = vadd.f32 %v4146, %v4606
      %4608 = vmatmul.bf16.gmra.mxu0 %v3241
      %v4609 = vpop.f32.mrf.mxu0
      %v4610 = vadd.f32 %v4146, %v4609
      %v4611 = vpop.f32.mrf.mxu0
      %v4612 = vadd.f32 %v4146, %v4611
      %4613 = vmatmul.bf16.gmra.mxu0 %v3242
      %v4614 = vpop.f32.mrf.mxu0
      %v4615 = vadd.f32 %v4146, %v4614
      %v4616 = vpop.f32.mrf.mxu0
      %v4617 = vadd.f32 %v4146, %v4616
      %4618 = vmatmul.bf16.gmra.mxu0 %v3243
      %v4619 = vpop.f32.mrf.mxu0
      %v4620 = vadd.f32 %v4146, %v4619
      %v4621 = vpop.f32.mrf.mxu0
      %v4622 = vadd.f32 %v4146, %v4621
      %4623 = vmatmul.bf16.gmra.mxu0 %v3244
      %v4624 = vpop.f32.mrf.mxu0
      %v4625 = vadd.f32 %v4146, %v4624
      %v4626 = vpop.f32.mrf.mxu0
      %v4627 = vadd.f32 %v4146, %v4626
      %4628 = vmatmul.bf16.gmra.mxu0 %v3245
      %v4629 = vpop.f32.mrf.mxu0
      %v4630 = vadd.f32 %v4146, %v4629
      %v4631 = vpop.f32.mrf.mxu0
      %v4632 = vadd.f32 %v4146, %v4631
      %4633 = vmatmul.bf16.gmra.mxu0 %v3246
      %v4634 = vpop.f32.mrf.mxu0
      %v4635 = vadd.f32 %v4146, %v4634
      %v4636 = vpop.f32.mrf.mxu0
      %v4637 = vadd.f32 %v4146, %v4636
      %4638 = vmatmul.bf16.gmra.mxu0 %v3247
      %v4639 = vpop.f32.mrf.mxu0
      %v4640 = vadd.f32 %v4146, %v4639
      %v4641 = vpop.f32.mrf.mxu0
      %v4642 = vadd.f32 %v4146, %v4641
      %4643 = vmatmul.bf16.gmra.mxu0 %v3248
      %v4644 = vpop.f32.mrf.mxu0
      %v4645 = vadd.f32 %v4146, %v4644
      %v4646 = vpop.f32.mrf.mxu0
      %v4647 = vadd.f32 %v4146, %v4646
      %4648 = vmatmul.bf16.gmra.mxu0 %v3249
      %v4649 = vpop.f32.mrf.mxu0
      %v4650 = vadd.f32 %v4146, %v4649
      %v4651 = vpop.f32.mrf.mxu0
      %v4652 = vadd.f32 %v4146, %v4651
      %4653 = vmatmul.bf16.gmra.mxu0 %v3250
      %v4654 = vpop.f32.mrf.mxu0
      %v4655 = vadd.f32 %v4146, %v4654
      %v4656 = vpop.f32.mrf.mxu0
      %v4657 = vadd.f32 %v4146, %v4656
      %4658 = vmatmul.bf16.gmra.mxu0 %v3251
      %v4659 = vpop.f32.mrf.mxu0
      %v4660 = vadd.f32 %v4146, %v4659
      %v4661 = vpop.f32.mrf.mxu0
      %v4662 = vadd.f32 %v4146, %v4661
      %4663 = vmatmul.bf16.gmra.mxu0 %v3252
      %v4664 = vpop.f32.mrf.mxu0
      %v4665 = vadd.f32 %v4146, %v4664
      %v4666 = vpop.f32.mrf.mxu0
      %v4667 = vadd.f32 %v4146, %v4666
      %4668 = vdwg.mxu0
      %4669 = vmatpush.bf16.msra.mxu0 %v4451
      %4670 = vmatpush.bf16.msra.mxu0 %v4450
      %4671 = vmatpush.bf16.msra.mxu0 %v4449
      %4672 = vmatpush.bf16.msra.mxu0 %v4448
      %4673 = vmatpush.bf16.msra.mxu0 %v4447
      %4674 = vmatpush.bf16.msra.mxu0 %v4446
      %4675 = vmatpush.bf16.msra.mxu0 %v4445
      %4676 = vmatpush.bf16.msra.mxu0 %v4444
      %4677 = vmatmul.bf16.gmra.mxu0 %v3283
      %v4678 = vpop.f32.mrf.mxu0
      %v4679 = vadd.f32 %v4590, %v4678
      %v4680 = vpop.f32.mrf.mxu0
      %v4681 = vadd.f32 %v4592, %v4680
      %4682 = vmatmul.bf16.gmra.mxu0 %v3291
      %v4683 = vpop.f32.mrf.mxu0
      %v4684 = vadd.f32 %v4595, %v4683
      %v4685 = vpop.f32.mrf.mxu0
      %v4686 = vadd.f32 %v4597, %v4685
      %4687 = vmatmul.bf16.gmra.mxu0 %v3299
      %v4688 = vpop.f32.mrf.mxu0
      %v4689 = vadd.f32 %v4600, %v4688
      %v4690 = vpop.f32.mrf.mxu0
      %v4691 = vadd.f32 %v4602, %v4690
      %4692 = vmatmul.bf16.gmra.mxu0 %v3307
      %v4693 = vpop.f32.mrf.mxu0
      %v4694 = vadd.f32 %v4605, %v4693
      %v4695 = vpop.f32.mrf.mxu0
      %v4696 = vadd.f32 %v4607, %v4695
      %4697 = vmatmul.bf16.gmra.mxu0 %v3315
      %v4698 = vpop.f32.mrf.mxu0
      %v4699 = vadd.f32 %v4610, %v4698
      %v4700 = vpop.f32.mrf.mxu0
      %v4701 = vadd.f32 %v4612, %v4700
      %4702 = vmatmul.bf16.gmra.mxu0 %v3323
      %v4703 = vpop.f32.mrf.mxu0
      %v4704 = vadd.f32 %v4615, %v4703
      %v4705 = vpop.f32.mrf.mxu0
      %v4706 = vadd.f32 %v4617, %v4705
      %4707 = vmatmul.bf16.gmra.mxu0 %v3331
      %v4708 = vpop.f32.mrf.mxu0
      %v4709 = vadd.f32 %v4620, %v4708
      %v4710 = vpop.f32.mrf.mxu0
      %v4711 = vadd.f32 %v4622, %v4710
      %4712 = vmatmul.bf16.gmra.mxu0 %v3339
      %v4713 = vpop.f32.mrf.mxu0
      %v4714 = vadd.f32 %v4625, %v4713
      %v4715 = vpop.f32.mrf.mxu0
      %v4716 = vadd.f32 %v4627, %v4715
      %4717 = vmatmul.bf16.gmra.mxu0 %v3347
      %v4718 = vpop.f32.mrf.mxu0
      %v4719 = vadd.f32 %v4630, %v4718
      %v4720 = vpop.f32.mrf.mxu0
      %v4721 = vadd.f32 %v4632, %v4720
      %4722 = vmatmul.bf16.gmra.mxu0 %v3355
      %v4723 = vpop.f32.mrf.mxu0
      %v4724 = vadd.f32 %v4635, %v4723
      %v4725 = vpop.f32.mrf.mxu0
      %v4726 = vadd.f32 %v4637, %v4725
      %4727 = vmatmul.bf16.gmra.mxu0 %v3363
      %v4728 = vpop.f32.mrf.mxu0
      %v4729 = vadd.f32 %v4640, %v4728
      %v4730 = vpop.f32.mrf.mxu0
      %v4731 = vadd.f32 %v4642, %v4730
      %4732 = vmatmul.bf16.gmra.mxu0 %v3371
      %v4733 = vpop.f32.mrf.mxu0
      %v4734 = vadd.f32 %v4645, %v4733
      %v4735 = vpop.f32.mrf.mxu0
      %v4736 = vadd.f32 %v4647, %v4735
      %4737 = vmatmul.bf16.gmra.mxu0 %v3379
      %v4738 = vpop.f32.mrf.mxu0
      %v4739 = vadd.f32 %v4650, %v4738
      %v4740 = vpop.f32.mrf.mxu0
      %v4741 = vadd.f32 %v4652, %v4740
      %4742 = vmatmul.bf16.gmra.mxu0 %v3387
      %v4743 = vpop.f32.mrf.mxu0
      %v4744 = vadd.f32 %v4655, %v4743
      %v4745 = vpop.f32.mrf.mxu0
      %v4746 = vadd.f32 %v4657, %v4745
      %4747 = vmatmul.bf16.gmra.mxu0 %v3395
      %v4748 = vpop.f32.mrf.mxu0
      %v4749 = vadd.f32 %v4660, %v4748
      %v4750 = vpop.f32.mrf.mxu0
      %v4751 = vadd.f32 %v4662, %v4750
      %4752 = vmatmul.bf16.gmra.mxu0 %v3403
      %v4753 = vpop.f32.mrf.mxu0
      %v4754 = vadd.f32 %v4665, %v4753
      %v4755 = vpop.f32.mrf.mxu0
      %v4756 = vadd.f32 %v4667, %v4755
      %4757 = vdwg.mxu0
      %4758 = vmatpush.bf16.msra.mxu0 %v4459
      %4759 = vmatpush.bf16.msra.mxu0 %v4458
      %4760 = vmatpush.bf16.msra.mxu0 %v4457
      %4761 = vmatpush.bf16.msra.mxu0 %v4456
      %4762 = vmatpush.bf16.msra.mxu0 %v4455
      %4763 = vmatpush.bf16.msra.mxu0 %v4454
      %4764 = vmatpush.bf16.msra.mxu0 %v4453
      %4765 = vmatpush.bf16.msra.mxu0 %v4452
      %4766 = vmatmul.bf16.gmra.mxu0 %v3425
      %v4767 = vpop.f32.mrf.mxu0
      %v4768 = vadd.f32 %v4679, %v4767
      %v4769 = vpop.f32.mrf.mxu0
      %v4770 = vadd.f32 %v4681, %v4769
      %4771 = vmatmul.bf16.gmra.mxu0 %v3427
      %v4772 = vpop.f32.mrf.mxu0
      %v4773 = vadd.f32 %v4684, %v4772
      %v4774 = vpop.f32.mrf.mxu0
      %v4775 = vadd.f32 %v4686, %v4774
      %4776 = vmatmul.bf16.gmra.mxu0 %v3429
      %v4777 = vpop.f32.mrf.mxu0
      %v4778 = vadd.f32 %v4689, %v4777
      %v4779 = vpop.f32.mrf.mxu0
      %v4780 = vadd.f32 %v4691, %v4779
      %4781 = vmatmul.bf16.gmra.mxu0 %v3431
      %v4782 = vpop.f32.mrf.mxu0
      %v4783 = vadd.f32 %v4694, %v4782
      %v4784 = vpop.f32.mrf.mxu0
      %v4785 = vadd.f32 %v4696, %v4784
      %4786 = vmatmul.bf16.gmra.mxu0 %v3433
      %v4787 = vpop.f32.mrf.mxu0
      %v4788 = vadd.f32 %v4699, %v4787
      %v4789 = vpop.f32.mrf.mxu0
      %v4790 = vadd.f32 %v4701, %v4789
      %4791 = vmatmul.bf16.gmra.mxu0 %v3435
      %v4792 = vpop.f32.mrf.mxu0
      %v4793 = vadd.f32 %v4704, %v4792
      %v4794 = vpop.f32.mrf.mxu0
      %v4795 = vadd.f32 %v4706, %v4794
      %4796 = vmatmul.bf16.gmra.mxu0 %v3437
      %v4797 = vpop.f32.mrf.mxu0
      %v4798 = vadd.f32 %v4709, %v4797
      %v4799 = vpop.f32.mrf.mxu0
      %v4800 = vadd.f32 %v4711, %v4799
      %4801 = vmatmul.bf16.gmra.mxu0 %v3439
      %v4802 = vpop.f32.mrf.mxu0
      %v4803 = vadd.f32 %v4714, %v4802
      %v4804 = vpop.f32.mrf.mxu0
      %v4805 = vadd.f32 %v4716, %v4804
      %4806 = vmatmul.bf16.gmra.mxu0 %v3441
      %v4807 = vpop.f32.mrf.mxu0
      %v4808 = vadd.f32 %v4719, %v4807
      %v4809 = vpop.f32.mrf.mxu0
      %v4810 = vadd.f32 %v4721, %v4809
      %4811 = vmatmul.bf16.gmra.mxu0 %v3443
      %v4812 = vpop.f32.mrf.mxu0
      %v4813 = vadd.f32 %v4724, %v4812
      %v4814 = vpop.f32.mrf.mxu0
      %v4815 = vadd.f32 %v4726, %v4814
      %4816 = vmatmul.bf16.gmra.mxu0 %v3445
      %v4817 = vpop.f32.mrf.mxu0
      %v4818 = vadd.f32 %v4729, %v4817
      %v4819 = vpop.f32.mrf.mxu0
      %v4820 = vadd.f32 %v4731, %v4819
      %4821 = vmatmul.bf16.gmra.mxu0 %v3447
      %v4822 = vpop.f32.mrf.mxu0
      %v4823 = vadd.f32 %v4734, %v4822
      %v4824 = vpop.f32.mrf.mxu0
      %v4825 = vadd.f32 %v4736, %v4824
      %4826 = vmatmul.bf16.gmra.mxu0 %v3449
      %v4827 = vpop.f32.mrf.mxu0
      %v4828 = vadd.f32 %v4739, %v4827
      %v4829 = vpop.f32.mrf.mxu0
      %v4830 = vadd.f32 %v4741, %v4829
      %4831 = vmatmul.bf16.gmra.mxu0 %v3451
      %v4832 = vpop.f32.mrf.mxu0
      %v4833 = vadd.f32 %v4744, %v4832
      %v4834 = vpop.f32.mrf.mxu0
      %v4835 = vadd.f32 %v4746, %v4834
      %4836 = vmatmul.bf16.gmra.mxu0 %v3453
      %v4837 = vpop.f32.mrf.mxu0
      %v4838 = vadd.f32 %v4749, %v4837
      %v4839 = vpop.f32.mrf.mxu0
      %v4840 = vadd.f32 %v4751, %v4839
      %4841 = vmatmul.bf16.gmra.mxu0 %v3455
      %v4842 = vpop.f32.mrf.mxu0
      %v4843 = vadd.f32 %v4754, %v4842
      %v4844 = vpop.f32.mrf.mxu0
      %v4845 = vadd.f32 %v4756, %v4844
      %4846 = vdwg.mxu0
      %4847 = vmatpush.bf16.msra.mxu0 %v4467
      %4848 = vmatpush.bf16.msra.mxu0 %v4466
      %4849 = vmatpush.bf16.msra.mxu0 %v4465
      %4850 = vmatpush.bf16.msra.mxu0 %v4464
      %4851 = vmatpush.bf16.msra.mxu0 %v4463
      %4852 = vmatpush.bf16.msra.mxu0 %v4462
      %4853 = vmatpush.bf16.msra.mxu0 %v4461
      %4854 = vmatpush.bf16.msra.mxu0 %v4460
      %4855 = vmatmul.bf16.gmra.mxu0 %v3484
      %v4856 = vpop.f32.mrf.mxu0
      %v4857 = vadd.f32 %v4768, %v4856
      %v4858 = vpop.f32.mrf.mxu0
      %v4859 = vadd.f32 %v4770, %v4858
      %4860 = vmatmul.bf16.gmra.mxu0 %v3429
      %v4861 = vpop.f32.mrf.mxu0
      %v4862 = vadd.f32 %v4773, %v4861
      %v4863 = vpop.f32.mrf.mxu0
      %v4864 = vadd.f32 %v4775, %v4863
      %4865 = vmatmul.bf16.gmra.mxu0 %v3431
      %v4866 = vpop.f32.mrf.mxu0
      %v4867 = vadd.f32 %v4778, %v4866
      %v4868 = vpop.f32.mrf.mxu0
      %v4869 = vadd.f32 %v4780, %v4868
      %4870 = vmatmul.bf16.gmra.mxu0 %v3433
      %v4871 = vpop.f32.mrf.mxu0
      %v4872 = vadd.f32 %v4783, %v4871
      %v4873 = vpop.f32.mrf.mxu0
      %v4874 = vadd.f32 %v4785, %v4873
      %4875 = vmatmul.bf16.gmra.mxu0 %v3435
      %v4876 = vpop.f32.mrf.mxu0
      %v4877 = vadd.f32 %v4788, %v4876
      %v4878 = vpop.f32.mrf.mxu0
      %v4879 = vadd.f32 %v4790, %v4878
      %4880 = vmatmul.bf16.gmra.mxu0 %v3437
      %v4881 = vpop.f32.mrf.mxu0
      %v4882 = vadd.f32 %v4793, %v4881
      %v4883 = vpop.f32.mrf.mxu0
      %v4884 = vadd.f32 %v4795, %v4883
      %4885 = vmatmul.bf16.gmra.mxu0 %v3439
      %v4886 = vpop.f32.mrf.mxu0
      %v4887 = vadd.f32 %v4798, %v4886
      %v4888 = vpop.f32.mrf.mxu0
      %v4889 = vadd.f32 %v4800, %v4888
      %4890 = vmatmul.bf16.gmra.mxu0 %v3441
      %v4891 = vpop.f32.mrf.mxu0
      %v4892 = vadd.f32 %v4803, %v4891
      %v4893 = vpop.f32.mrf.mxu0
      %v4894 = vadd.f32 %v4805, %v4893
      %4895 = vmatmul.bf16.gmra.mxu0 %v3443
      %v4896 = vpop.f32.mrf.mxu0
      %v4897 = vadd.f32 %v4808, %v4896
      %v4898 = vpop.f32.mrf.mxu0
      %v4899 = vadd.f32 %v4810, %v4898
      %4900 = vmatmul.bf16.gmra.mxu0 %v3445
      %v4901 = vpop.f32.mrf.mxu0
      %v4902 = vadd.f32 %v4813, %v4901
      %v4903 = vpop.f32.mrf.mxu0
      %v4904 = vadd.f32 %v4815, %v4903
      %4905 = vmatmul.bf16.gmra.mxu0 %v3447
      %v4906 = vpop.f32.mrf.mxu0
      %v4907 = vadd.f32 %v4818, %v4906
      %v4908 = vpop.f32.mrf.mxu0
      %v4909 = vadd.f32 %v4820, %v4908
      %4910 = vmatmul.bf16.gmra.mxu0 %v3449
      %v4911 = vpop.f32.mrf.mxu0
      %v4912 = vadd.f32 %v4823, %v4911
      %v4913 = vpop.f32.mrf.mxu0
      %v4914 = vadd.f32 %v4825, %v4913
      %4915 = vmatmul.bf16.gmra.mxu0 %v3451
      %v4916 = vpop.f32.mrf.mxu0
      %v4917 = vadd.f32 %v4828, %v4916
      %v4918 = vpop.f32.mrf.mxu0
      %v4919 = vadd.f32 %v4830, %v4918
      %4920 = vmatmul.bf16.gmra.mxu0 %v3453
      %v4921 = vpop.f32.mrf.mxu0
      %v4922 = vadd.f32 %v4833, %v4921
      %v4923 = vpop.f32.mrf.mxu0
      %v4924 = vadd.f32 %v4835, %v4923
      %4925 = vmatmul.bf16.gmra.mxu0 %v3486
      %v4926 = vpop.f32.mrf.mxu0
      %v4927 = vadd.f32 %v4838, %v4926
      %v4928 = vpop.f32.mrf.mxu0
      %v4929 = vadd.f32 %v4840, %v4928
      %4930 = vmatmul.bf16.gmra.mxu0 %v3488
      %v4931 = vpop.f32.mrf.mxu0
      %v4932 = vadd.f32 %v4843, %v4931
      %v4933 = vpop.f32.mrf.mxu0
      %v4934 = vadd.f32 %v4845, %v4933
      %4935 = vdwg.mxu0
      %4936 = vmatpush.bf16.msra.mxu0 %v4475
      %4937 = vmatpush.bf16.msra.mxu0 %v4474
      %4938 = vmatpush.bf16.msra.mxu0 %v4473
      %4939 = vmatpush.bf16.msra.mxu0 %v4472
      %4940 = vmatpush.bf16.msra.mxu0 %v4471
      %4941 = vmatpush.bf16.msra.mxu0 %v4470
      %4942 = vmatpush.bf16.msra.mxu0 %v4469
      %4943 = vmatpush.bf16.msra.mxu0 %v4468
      %4944 = vmatmul.bf16.gmra.mxu0 %v3506
      %v4945 = vpop.f32.mrf.mxu0
      %v4946 = vadd.f32 %v4857, %v4945
      %v4947 = vpop.f32.mrf.mxu0
      %v4948 = vadd.f32 %v4859, %v4947
      %4949 = vmatmul.bf16.gmra.mxu0 %v3510
      %v4950 = vpop.f32.mrf.mxu0
      %v4951 = vadd.f32 %v4862, %v4950
      %v4952 = vpop.f32.mrf.mxu0
      %v4953 = vadd.f32 %v4864, %v4952
      %4954 = vmatmul.bf16.gmra.mxu0 %v3514
      %v4955 = vpop.f32.mrf.mxu0
      %v4956 = vadd.f32 %v4867, %v4955
      %v4957 = vpop.f32.mrf.mxu0
      %v4958 = vadd.f32 %v4869, %v4957
      %4959 = vmatmul.bf16.gmra.mxu0 %v3518
      %v4960 = vpop.f32.mrf.mxu0
      %v4961 = vadd.f32 %v4872, %v4960
      %v4962 = vpop.f32.mrf.mxu0
      %v4963 = vadd.f32 %v4874, %v4962
      %4964 = vmatmul.bf16.gmra.mxu0 %v3522
      %v4965 = vpop.f32.mrf.mxu0
      %v4966 = vadd.f32 %v4877, %v4965
      %v4967 = vpop.f32.mrf.mxu0
      %v4968 = vadd.f32 %v4879, %v4967
      %4969 = vmatmul.bf16.gmra.mxu0 %v3526
      %v4970 = vpop.f32.mrf.mxu0
      %v4971 = vadd.f32 %v4882, %v4970
      %v4972 = vpop.f32.mrf.mxu0
      %v4973 = vadd.f32 %v4884, %v4972
      %4974 = vmatmul.bf16.gmra.mxu0 %v3530
      %v4975 = vpop.f32.mrf.mxu0
      %v4976 = vadd.f32 %v4887, %v4975
      %v4977 = vpop.f32.mrf.mxu0
      %v4978 = vadd.f32 %v4889, %v4977
      %4979 = vmatmul.bf16.gmra.mxu0 %v3534
      %v4980 = vpop.f32.mrf.mxu0
      %v4981 = vadd.f32 %v4892, %v4980
      %v4982 = vpop.f32.mrf.mxu0
      %v4983 = vadd.f32 %v4894, %v4982
      %4984 = vmatmul.bf16.gmra.mxu0 %v3538
      %v4985 = vpop.f32.mrf.mxu0
      %v4986 = vadd.f32 %v4897, %v4985
      %v4987 = vpop.f32.mrf.mxu0
      %v4988 = vadd.f32 %v4899, %v4987
      %4989 = vmatmul.bf16.gmra.mxu0 %v3542
      %v4990 = vpop.f32.mrf.mxu0
      %v4991 = vadd.f32 %v4902, %v4990
      %v4992 = vpop.f32.mrf.mxu0
      %v4993 = vadd.f32 %v4904, %v4992
      %4994 = vmatmul.bf16.gmra.mxu0 %v3546
      %v4995 = vpop.f32.mrf.mxu0
      %v4996 = vadd.f32 %v4907, %v4995
      %v4997 = vpop.f32.mrf.mxu0
      %v4998 = vadd.f32 %v4909, %v4997
      %4999 = vmatmul.bf16.gmra.mxu0 %v3550
      %v5000 = vpop.f32.mrf.mxu0
      %v5001 = vadd.f32 %v4912, %v5000
      %v5002 = vpop.f32.mrf.mxu0
      %v5003 = vadd.f32 %v4914, %v5002
      %5004 = vmatmul.bf16.gmra.mxu0 %v3554
      %v5005 = vpop.f32.mrf.mxu0
      %v5006 = vadd.f32 %v4917, %v5005
      %v5007 = vpop.f32.mrf.mxu0
      %v5008 = vadd.f32 %v4919, %v5007
      %5009 = vmatmul.bf16.gmra.mxu0 %v3558
      %v5010 = vpop.f32.mrf.mxu0
      %v5011 = vadd.f32 %v4922, %v5010
      %v5012 = vpop.f32.mrf.mxu0
      %v5013 = vadd.f32 %v4924, %v5012
      %5014 = vmatmul.bf16.gmra.mxu0 %v3567
      %v5015 = vpop.f32.mrf.mxu0
      %v5016 = vadd.f32 %v4927, %v5015
      %v5017 = vpop.f32.mrf.mxu0
      %v5018 = vadd.f32 %v4929, %v5017
      %5019 = vmatmul.bf16.gmra.mxu0 %v3576
      %v5020 = vpop.f32.mrf.mxu0
      %v5021 = vadd.f32 %v4932, %v5020
      %v5022 = vpop.f32.mrf.mxu0
      %v5023 = vadd.f32 %v4934, %v5022
      %5024 = vdwg.mxu0
      %5025 = vmatpush.bf16.msra.mxu0 %v4483
      %5026 = vmatpush.bf16.msra.mxu0 %v4482
      %5027 = vmatpush.bf16.msra.mxu0 %v4481
      %5028 = vmatpush.bf16.msra.mxu0 %v4480
      %5029 = vmatpush.bf16.msra.mxu0 %v4479
      %5030 = vmatpush.bf16.msra.mxu0 %v4478
      %5031 = vmatpush.bf16.msra.mxu0 %v4477
      %5032 = vmatpush.bf16.msra.mxu0 %v4476
      %5033 = vmatmul.bf16.gmra.mxu0 %v3598
      %v5034 = vpop.f32.mrf.mxu0
      %v5035 = vadd.f32 %v4946, %v5034
      %v5036 = vpop.f32.mrf.mxu0
      %v5037 = vadd.f32 %v4948, %v5036
      %5038 = vmatmul.bf16.gmra.mxu0 %v3600
      %v5039 = vpop.f32.mrf.mxu0
      %v5040 = vadd.f32 %v4951, %v5039
      %v5041 = vpop.f32.mrf.mxu0
      %v5042 = vadd.f32 %v4953, %v5041
      %5043 = vmatmul.bf16.gmra.mxu0 %v3602
      %v5044 = vpop.f32.mrf.mxu0
      %v5045 = vadd.f32 %v4956, %v5044
      %v5046 = vpop.f32.mrf.mxu0
      %v5047 = vadd.f32 %v4958, %v5046
      %5048 = vmatmul.bf16.gmra.mxu0 %v3604
      %v5049 = vpop.f32.mrf.mxu0
      %v5050 = vadd.f32 %v4961, %v5049
      %v5051 = vpop.f32.mrf.mxu0
      %v5052 = vadd.f32 %v4963, %v5051
      %5053 = vmatmul.bf16.gmra.mxu0 %v3606
      %v5054 = vpop.f32.mrf.mxu0
      %v5055 = vadd.f32 %v4966, %v5054
      %v5056 = vpop.f32.mrf.mxu0
      %v5057 = vadd.f32 %v4968, %v5056
      %5058 = vmatmul.bf16.gmra.mxu0 %v3608
      %v5059 = vpop.f32.mrf.mxu0
      %v5060 = vadd.f32 %v4971, %v5059
      %v5061 = vpop.f32.mrf.mxu0
      %v5062 = vadd.f32 %v4973, %v5061
      %5063 = vmatmul.bf16.gmra.mxu0 %v3610
      %v5064 = vpop.f32.mrf.mxu0
      %v5065 = vadd.f32 %v4976, %v5064
      %v5066 = vpop.f32.mrf.mxu0
      %v5067 = vadd.f32 %v4978, %v5066
      %5068 = vmatmul.bf16.gmra.mxu0 %v3612
      %v5069 = vpop.f32.mrf.mxu0
      %v5070 = vadd.f32 %v4981, %v5069
      %v5071 = vpop.f32.mrf.mxu0
      %v5072 = vadd.f32 %v4983, %v5071
      %5073 = vmatmul.bf16.gmra.mxu0 %v3614
      %v5074 = vpop.f32.mrf.mxu0
      %v5075 = vadd.f32 %v4986, %v5074
      %v5076 = vpop.f32.mrf.mxu0
      %v5077 = vadd.f32 %v4988, %v5076
      %5078 = vmatmul.bf16.gmra.mxu0 %v3616
      %v5079 = vpop.f32.mrf.mxu0
      %v5080 = vadd.f32 %v4991, %v5079
      %v5081 = vpop.f32.mrf.mxu0
      %v5082 = vadd.f32 %v4993, %v5081
      %5083 = vmatmul.bf16.gmra.mxu0 %v3618
      %v5084 = vpop.f32.mrf.mxu0
      %v5085 = vadd.f32 %v4996, %v5084
      %v5086 = vpop.f32.mrf.mxu0
      %v5087 = vadd.f32 %v4998, %v5086
      %5088 = vmatmul.bf16.gmra.mxu0 %v3620
      %v5089 = vpop.f32.mrf.mxu0
      %v5090 = vadd.f32 %v5001, %v5089
      %v5091 = vpop.f32.mrf.mxu0
      %v5092 = vadd.f32 %v5003, %v5091
      %5093 = vmatmul.bf16.gmra.mxu0 %v3622
      %v5094 = vpop.f32.mrf.mxu0
      %v5095 = vadd.f32 %v5006, %v5094
      %v5096 = vpop.f32.mrf.mxu0
      %v5097 = vadd.f32 %v5008, %v5096
      %5098 = vmatmul.bf16.gmra.mxu0 %v3624
      %v5099 = vpop.f32.mrf.mxu0
      %v5100 = vadd.f32 %v5011, %v5099
      %v5101 = vpop.f32.mrf.mxu0
      %v5102 = vadd.f32 %v5013, %v5101
      %5103 = vmatmul.bf16.gmra.mxu0 %v3626
      %v5104 = vpop.f32.mrf.mxu0
      %v5105 = vadd.f32 %v5016, %v5104
      %v5106 = vpop.f32.mrf.mxu0
      %v5107 = vadd.f32 %v5018, %v5106
      %5108 = vmatmul.bf16.gmra.mxu0 %v3628
      %v5109 = vpop.f32.mrf.mxu0
      %v5110 = vadd.f32 %v5021, %v5109
      %v5111 = vpop.f32.mrf.mxu0
      %v5112 = vadd.f32 %v5023, %v5111
      %5113 = vdwg.mxu0
      %5114 = vmatpush.bf16.msra.mxu0 %v4491
      %5115 = vmatpush.bf16.msra.mxu0 %v4490
      %5116 = vmatpush.bf16.msra.mxu0 %v4489
      %5117 = vmatpush.bf16.msra.mxu0 %v4488
      %5118 = vmatpush.bf16.msra.mxu0 %v4487
      %5119 = vmatpush.bf16.msra.mxu0 %v4486
      %5120 = vmatpush.bf16.msra.mxu0 %v4485
      %5121 = vmatpush.bf16.msra.mxu0 %v4484
      %5122 = vmatmul.bf16.gmra.mxu0 %v3730
      %v5123 = vpop.f32.mrf.mxu0
      %v5124 = vadd.f32 %v5035, %v5123
      %v5125 = vpop.f32.mrf.mxu0
      %v5126 = vadd.f32 %v5037, %v5125
      %5127 = vmatmul.bf16.gmra.mxu0 %v3732
      %v5128 = vpop.f32.mrf.mxu0
      %v5129 = vadd.f32 %v5040, %v5128
      %v5130 = vpop.f32.mrf.mxu0
      %v5131 = vadd.f32 %v5042, %v5130
      %5132 = vmatmul.bf16.gmra.mxu0 %v3734
      %v5133 = vpop.f32.mrf.mxu0
      %v5134 = vadd.f32 %v5045, %v5133
      %v5135 = vpop.f32.mrf.mxu0
      %v5136 = vadd.f32 %v5047, %v5135
      %5137 = vmatmul.bf16.gmra.mxu0 %v3736
      %v5138 = vpop.f32.mrf.mxu0
      %v5139 = vadd.f32 %v5050, %v5138
      %v5140 = vpop.f32.mrf.mxu0
      %v5141 = vadd.f32 %v5052, %v5140
      %5142 = vmatmul.bf16.gmra.mxu0 %v3738
      %v5143 = vpop.f32.mrf.mxu0
      %v5144 = vadd.f32 %v5055, %v5143
      %v5145 = vpop.f32.mrf.mxu0
      %v5146 = vadd.f32 %v5057, %v5145
      %5147 = vmatmul.bf16.gmra.mxu0 %v3740
      %v5148 = vpop.f32.mrf.mxu0
      %v5149 = vadd.f32 %v5060, %v5148
      %v5150 = vpop.f32.mrf.mxu0
      %v5151 = vadd.f32 %v5062, %v5150
      %5152 = vmatmul.bf16.gmra.mxu0 %v3742
      %v5153 = vpop.f32.mrf.mxu0
      %v5154 = vadd.f32 %v5065, %v5153
      %v5155 = vpop.f32.mrf.mxu0
      %v5156 = vadd.f32 %v5067, %v5155
      %5157 = vmatmul.bf16.gmra.mxu0 %v3744
      %v5158 = vpop.f32.mrf.mxu0
      %v5159 = vadd.f32 %v5070, %v5158
      %v5160 = vpop.f32.mrf.mxu0
      %v5161 = vadd.f32 %v5072, %v5160
      %5162 = vmatmul.bf16.gmra.mxu0 %v3746
      %v5163 = vpop.f32.mrf.mxu0
      %v5164 = vadd.f32 %v5075, %v5163
      %v5165 = vpop.f32.mrf.mxu0
      %v5166 = vadd.f32 %v5077, %v5165
      %5167 = vmatmul.bf16.gmra.mxu0 %v3748
      %v5168 = vpop.f32.mrf.mxu0
      %v5169 = vadd.f32 %v5080, %v5168
      %v5170 = vpop.f32.mrf.mxu0
      %v5171 = vadd.f32 %v5082, %v5170
      %5172 = vmatmul.bf16.gmra.mxu0 %v3750
      %v5173 = vpop.f32.mrf.mxu0
      %v5174 = vadd.f32 %v5085, %v5173
      %v5175 = vpop.f32.mrf.mxu0
      %v5176 = vadd.f32 %v5087, %v5175
      %5177 = vmatmul.bf16.gmra.mxu0 %v3752
      %v5178 = vpop.f32.mrf.mxu0
      %v5179 = vadd.f32 %v5090, %v5178
      %v5180 = vpop.f32.mrf.mxu0
      %v5181 = vadd.f32 %v5092, %v5180
      %5182 = vmatmul.bf16.gmra.mxu0 %v3754
      %v5183 = vpop.f32.mrf.mxu0
      %v5184 = vadd.f32 %v5095, %v5183
      %v5185 = vpop.f32.mrf.mxu0
      %v5186 = vadd.f32 %v5097, %v5185
      %5187 = vmatmul.bf16.gmra.mxu0 %v3756
      %v5188 = vpop.f32.mrf.mxu0
      %v5189 = vadd.f32 %v5100, %v5188
      %v5190 = vpop.f32.mrf.mxu0
      %v5191 = vadd.f32 %v5102, %v5190
      %5192 = vmatmul.bf16.gmra.mxu0 %v3758
      %v5193 = vpop.f32.mrf.mxu0
      %v5194 = vadd.f32 %v5105, %v5193
      %v5195 = vpop.f32.mrf.mxu0
      %v5196 = vadd.f32 %v5107, %v5195
      %5197 = vmatmul.bf16.gmra.mxu0 %v3760
      %v5198 = vpop.f32.mrf.mxu0
      %v5199 = vadd.f32 %v5110, %v5198
      %v5200 = vpop.f32.mrf.mxu0
      %v5201 = vadd.f32 %v5112, %v5200
      %5202 = vdwg.mxu0
      %5203 = vmatpush.bf16.msra.mxu0 %v4499
      %5204 = vmatpush.bf16.msra.mxu0 %v4498
      %5205 = vmatpush.bf16.msra.mxu0 %v4497
      %5206 = vmatpush.bf16.msra.mxu0 %v4496
      %5207 = vmatpush.bf16.msra.mxu0 %v4495
      %5208 = vmatpush.bf16.msra.mxu0 %v4494
      %5209 = vmatpush.bf16.msra.mxu0 %v4493
      %5210 = vmatpush.bf16.msra.mxu0 %v4492
      %5211 = vmatmul.bf16.gmra.mxu0 %v3796
      %v5212 = vpop.f32.mrf.mxu0
      %v5213 = vadd.f32 %v5124, %v5212
      %v5214 = vpop.f32.mrf.mxu0
      %v5215 = vadd.f32 %v5126, %v5214
      %5216 = vmatmul.bf16.gmra.mxu0 %v3805
      %v5217 = vpop.f32.mrf.mxu0
      %v5218 = vadd.f32 %v5129, %v5217
      %v5219 = vpop.f32.mrf.mxu0
      %v5220 = vadd.f32 %v5131, %v5219
      %5221 = vmatmul.bf16.gmra.mxu0 %v3814
      %v5222 = vpop.f32.mrf.mxu0
      %v5223 = vadd.f32 %v5134, %v5222
      %v5224 = vpop.f32.mrf.mxu0
      %v5225 = vadd.f32 %v5136, %v5224
      %5226 = vmatmul.bf16.gmra.mxu0 %v3823
      %v5227 = vpop.f32.mrf.mxu0
      %v5228 = vadd.f32 %v5139, %v5227
      %v5229 = vpop.f32.mrf.mxu0
      %v5230 = vadd.f32 %v5141, %v5229
      %5231 = vmatmul.bf16.gmra.mxu0 %v3832
      %v5232 = vpop.f32.mrf.mxu0
      %v5233 = vadd.f32 %v5144, %v5232
      %v5234 = vpop.f32.mrf.mxu0
      %v5235 = vadd.f32 %v5146, %v5234
      %5236 = vmatmul.bf16.gmra.mxu0 %v3841
      %v5237 = vpop.f32.mrf.mxu0
      %v5238 = vadd.f32 %v5149, %v5237
      %v5239 = vpop.f32.mrf.mxu0
      %v5240 = vadd.f32 %v5151, %v5239
      %5241 = vmatmul.bf16.gmra.mxu0 %v3850
      %v5242 = vpop.f32.mrf.mxu0
      %v5243 = vadd.f32 %v5154, %v5242
      %v5244 = vpop.f32.mrf.mxu0
      %v5245 = vadd.f32 %v5156, %v5244
      %5246 = vmatmul.bf16.gmra.mxu0 %v3859
      %v5247 = vpop.f32.mrf.mxu0
      %v5248 = vadd.f32 %v5159, %v5247
      %v5249 = vpop.f32.mrf.mxu0
      %v5250 = vadd.f32 %v5161, %v5249
      %5251 = vmatmul.bf16.gmra.mxu0 %v3868
      %v5252 = vpop.f32.mrf.mxu0
      %v5253 = vadd.f32 %v5164, %v5252
      %v5254 = vpop.f32.mrf.mxu0
      %v5255 = vadd.f32 %v5166, %v5254
      %5256 = vmatmul.bf16.gmra.mxu0 %v3877
      %v5257 = vpop.f32.mrf.mxu0
      %v5258 = vadd.f32 %v5169, %v5257
      %v5259 = vpop.f32.mrf.mxu0
      %v5260 = vadd.f32 %v5171, %v5259
      %5261 = vmatmul.bf16.gmra.mxu0 %v3886
      %v5262 = vpop.f32.mrf.mxu0
      %v5263 = vadd.f32 %v5174, %v5262
      %v5264 = vpop.f32.mrf.mxu0
      %v5265 = vadd.f32 %v5176, %v5264
      %5266 = vmatmul.bf16.gmra.mxu0 %v3895
      %v5267 = vpop.f32.mrf.mxu0
      %v5268 = vadd.f32 %v5179, %v5267
      %v5269 = vpop.f32.mrf.mxu0
      %v5270 = vadd.f32 %v5181, %v5269
      %5271 = vmatmul.bf16.gmra.mxu0 %v3904
      %v5272 = vpop.f32.mrf.mxu0
      %v5273 = vadd.f32 %v5184, %v5272
      %v5274 = vpop.f32.mrf.mxu0
      %v5275 = vadd.f32 %v5186, %v5274
      %5276 = vmatmul.bf16.gmra.mxu0 %v3913
      %v5277 = vpop.f32.mrf.mxu0
      %v5278 = vadd.f32 %v5189, %v5277
      %v5279 = vpop.f32.mrf.mxu0
      %v5280 = vadd.f32 %v5191, %v5279
      %5281 = vmatmul.bf16.gmra.mxu0 %v3922
      %v5282 = vpop.f32.mrf.mxu0
      %v5283 = vadd.f32 %v5194, %v5282
      %v5284 = vpop.f32.mrf.mxu0
      %v5285 = vadd.f32 %v5196, %v5284
      %5286 = vmatmul.bf16.gmra.mxu0 %v3931
      %v5287 = vpop.f32.mrf.mxu0
      %v5288 = vadd.f32 %v5199, %v5287
      %v5289 = vpop.f32.mrf.mxu0
      %v5290 = vadd.f32 %v5201, %v5289
      %5291 = vdwg.mxu0
      %5292 = vmatpush.bf16.msra.mxu0 %v4507
      %5293 = vmatpush.bf16.msra.mxu0 %v4506
      %5294 = vmatpush.bf16.msra.mxu0 %v4505
      %5295 = vmatpush.bf16.msra.mxu0 %v4504
      %5296 = vmatpush.bf16.msra.mxu0 %v4503
      %5297 = vmatpush.bf16.msra.mxu0 %v4502
      %5298 = vmatpush.bf16.msra.mxu0 %v4501
      %5299 = vmatpush.bf16.msra.mxu0 %v4500
      %5300 = vmatmul.bf16.gmra.mxu0 %v3953
      %v5301 = vpop.f32.mrf.mxu0
      %v5302 = vadd.f32 %v5213, %v5301
      %v5303 = vpop.f32.mrf.mxu0
      %v5304 = vadd.f32 %v5215, %v5303
      %5305 = vmatmul.bf16.gmra.mxu0 %v3955
      %v5306 = vpop.f32.mrf.mxu0
      %v5307 = vadd.f32 %v5218, %v5306
      %v5308 = vpop.f32.mrf.mxu0
      %v5309 = vadd.f32 %v5220, %v5308
      %5310 = vmatmul.bf16.gmra.mxu0 %v3957
      %v5311 = vpop.f32.mrf.mxu0
      %v5312 = vadd.f32 %v5223, %v5311
      %v5313 = vpop.f32.mrf.mxu0
      %v5314 = vadd.f32 %v5225, %v5313
      %5315 = vmatmul.bf16.gmra.mxu0 %v3959
      %v5316 = vpop.f32.mrf.mxu0
      %v5317 = vadd.f32 %v5228, %v5316
      %v5318 = vpop.f32.mrf.mxu0
      %v5319 = vadd.f32 %v5230, %v5318
      %5320 = vmatmul.bf16.gmra.mxu0 %v3961
      %v5321 = vpop.f32.mrf.mxu0
      %v5322 = vadd.f32 %v5233, %v5321
      %v5323 = vpop.f32.mrf.mxu0
      %v5324 = vadd.f32 %v5235, %v5323
      %5325 = vmatmul.bf16.gmra.mxu0 %v3963
      %v5326 = vpop.f32.mrf.mxu0
      %v5327 = vadd.f32 %v5238, %v5326
      %v5328 = vpop.f32.mrf.mxu0
      %v5329 = vadd.f32 %v5240, %v5328
      %5330 = vmatmul.bf16.gmra.mxu0 %v3965
      %v5331 = vpop.f32.mrf.mxu0
      %v5332 = vadd.f32 %v5243, %v5331
      %v5333 = vpop.f32.mrf.mxu0
      %v5334 = vadd.f32 %v5245, %v5333
      %5335 = vmatmul.bf16.gmra.mxu0 %v3967
      %v5336 = vpop.f32.mrf.mxu0
      %v5337 = vadd.f32 %v5248, %v5336
      %v5338 = vpop.f32.mrf.mxu0
      %v5339 = vadd.f32 %v5250, %v5338
      %5340 = vmatmul.bf16.gmra.mxu0 %v3969
      %v5341 = vpop.f32.mrf.mxu0
      %v5342 = vadd.f32 %v5253, %v5341
      %v5343 = vpop.f32.mrf.mxu0
      %v5344 = vadd.f32 %v5255, %v5343
      %5345 = vmatmul.bf16.gmra.mxu0 %v3971
      %v5346 = vpop.f32.mrf.mxu0
      %v5347 = vadd.f32 %v5258, %v5346
      %v5348 = vpop.f32.mrf.mxu0
      %v5349 = vadd.f32 %v5260, %v5348
      %5350 = vmatmul.bf16.gmra.mxu0 %v3973
      %v5351 = vpop.f32.mrf.mxu0
      %v5352 = vadd.f32 %v5263, %v5351
      %v5353 = vpop.f32.mrf.mxu0
      %v5354 = vadd.f32 %v5265, %v5353
      %5355 = vmatmul.bf16.gmra.mxu0 %v3975
      %v5356 = vpop.f32.mrf.mxu0
      %v5357 = vadd.f32 %v5268, %v5356
      %v5358 = vpop.f32.mrf.mxu0
      %v5359 = vadd.f32 %v5270, %v5358
      %5360 = vmatmul.bf16.gmra.mxu0 %v3977
      %v5361 = vpop.f32.mrf.mxu0
      %v5362 = vadd.f32 %v5273, %v5361
      %v5363 = vpop.f32.mrf.mxu0
      %v5364 = vadd.f32 %v5275, %v5363
      %5365 = vmatmul.bf16.gmra.mxu0 %v3979
      %v5366 = vpop.f32.mrf.mxu0
      %v5367 = vadd.f32 %v5278, %v5366
      %v5368 = vpop.f32.mrf.mxu0
      %v5369 = vadd.f32 %v5280, %v5368
      %5370 = vmatmul.bf16.gmra.mxu0 %v3981
      %v5371 = vpop.f32.mrf.mxu0
      %v5372 = vadd.f32 %v5283, %v5371
      %v5373 = vpop.f32.mrf.mxu0
      %v5374 = vadd.f32 %v5285, %v5373
      %5375 = vmatmul.bf16.gmra.mxu0 %v3983
      %v5376 = vpop.f32.mrf.mxu0
      %v5377 = vadd.f32 %v5288, %v5376
      %v5378 = vpop.f32.mrf.mxu0
      %v5379 = vadd.f32 %v5290, %v5378
      %5380 = vdwg.mxu0
      %v5381 = vmax.f32 %v5302, 0.0
      %v5382 = vmax.f32 %v5304, 0.0
      %v5383 = vmax.f32 %v5307, 0.0
      %v5384 = vmax.f32 %v5309, 0.0
      %v5385 = vmax.f32 %v5312, 0.0
      %v5386 = vmax.f32 %v5314, 0.0
      %v5387 = vmax.f32 %v5317, 0.0
      %v5388 = vmax.f32 %v5319, 0.0
      %v5389 = vmax.f32 %v5322, 0.0
      %v5390 = vmax.f32 %v5324, 0.0
      %v5391 = vmax.f32 %v5327, 0.0
      %v5392 = vmax.f32 %v5329, 0.0
      %v5393 = vmax.f32 %v5332, 0.0
      %v5394 = vmax.f32 %v5334, 0.0
      %v5395 = vmax.f32 %v5337, 0.0
      %v5396 = vmax.f32 %v5339, 0.0
      %v5397 = vmax.f32 %v5342, 0.0
      %v5398 = vmax.f32 %v5344, 0.0
      %v5399 = vmax.f32 %v5347, 0.0
      %v5400 = vmax.f32 %v5349, 0.0
      %v5401 = vmax.f32 %v5352, 0.0
      %v5402 = vmax.f32 %v5354, 0.0
      %v5403 = vmax.f32 %v5357, 0.0
      %v5404 = vmax.f32 %v5359, 0.0
      %v5405 = vmax.f32 %v5362, 0.0
      %v5406 = vmax.f32 %v5364, 0.0
      %v5407 = vmax.f32 %v5367, 0.0
      %v5408 = vmax.f32 %v5369, 0.0
      %v5409 = vmax.f32 %v5372, 0.0
      %v5410 = vmax.f32 %v5374, 0.0
      %v5411 = vmax.f32 %v5377, 0.0
      %v5412 = vmax.f32 %v5379, 0.0
      %5413 = vst [vmem:[%s224] sm:$0xff] %v5381
      %5414 = vst [vmem:[%s224 + $0x8] sm:$0xff] %v5382
      %5415 = vst [vmem:[%s224 + $0x10] sm:$0xff] %v5383
      %5416 = vst [vmem:[%s224 + $0x18] sm:$0xff] %v5384
      %5417 = vst [vmem:[%s224 + $0x20] sm:$0xff] %v5385
      %5418 = vst [vmem:[%s224 + $0x28] sm:$0xff] %v5386
      %5419 = vst [vmem:[%s224 + $0x30] sm:$0xff] %v5387
      %5420 = vst [vmem:[%s224 + $0x38] sm:$0xff] %v5388
      %5421 = vst [vmem:[%s224 + $0x40] sm:$0xff] %v5389
      %5422 = vst [vmem:[%s224 + $0x48] sm:$0xff] %v5390
      %5423 = vst [vmem:[%s224 + $0x50] sm:$0xff] %v5391
      %5424 = vst [vmem:[%s224 + $0x58] sm:$0xff] %v5392
      %5425 = vst [vmem:[%s224 + $0x60] sm:$0xff] %v5393
      %5426 = vst [vmem:[%s224 + $0x68] sm:$0xff] %v5394
      %5427 = vst [vmem:[%s224 + $0x70] sm:$0xff] %v5395
      %5428 = vst [vmem:[%s224 + $0x78] sm:$0xff] %v5396
      %5429 = vst [vmem:[%s224 + $0x80] sm:$0xff] %v5397
      %5430 = vst [vmem:[%s224 + $0x88] sm:$0xff] %v5398
      %5431 = vst [vmem:[%s224 + $0x90] sm:$0xff] %v5399
      %5432 = vst [vmem:[%s224 + $0x98] sm:$0xff] %v5400
      %5433 = vst [vmem:[%s224 + $0xa0] sm:$0xff] %v5401
      %5434 = vst [vmem:[%s224 + $0xa8] sm:$0xff] %v5402
      %5435 = vst [vmem:[%s224 + $0xb0] sm:$0xff] %v5403
      %5436 = vst [vmem:[%s224 + $0xb8] sm:$0xff] %v5404
      %5437 = vst [vmem:[%s224 + $0xc0] sm:$0xff] %v5405
      %5438 = vst [vmem:[%s224 + $0xc8] sm:$0xff] %v5406
      %5439 = vst [vmem:[%s224 + $0xd0] sm:$0xff] %v5407
      %5440 = vst [vmem:[%s224 + $0xd8] sm:$0xff] %v5408
      %5441 = vst [vmem:[%s224 + $0xe0] sm:$0xff] %v5409
      %5442 = vst [vmem:[%s224 + $0xe8] sm:$0xff] %v5410
      %5443 = vst [vmem:[%s224 + $0xf0] sm:$0xff] %v5411
      %5444 = vst [vmem:[%s224 + $0xf8] sm:$0xff] %v5412
      %p5445 = scmp.lt.s32.totalorder %s16, 1
      %s5446 = scalar_select %p5445, %s16, 1
      %s5447 = smul.addr %s5446, 32
      %s5448 = smul.addr %s5447, 8
      %s5449 = scalar_lea.vmem %s5, %s5448
      // Predicated region
      $region41: #{cnn_conv_block.1} parent=39 // pred_check
        %p5450 = pneg %p144
      $region42: #{cnn_conv_block.1} parent=39 // pred_check_branch
        %5452 = sbr.rel (%p5450) target = $region44
      $region43: #{cnn_conv_block.1} parent=39 // pred_region
        _
      $region44: #{cnn_conv_block.1} parent=39 // pred_fallthru
        _
    $region40: #{cnn_conv_block.1} parent=5 // pred_fallthru
      _
    %p5453 = scmp.le.s32.totalorder 2, %s11
    // Predicated region
    $region45: #{cnn_conv_block.1} parent=5 // pred_check
      %p5454 = pneg %p5453
    $region46: #{cnn_conv_block.1} parent=5 // pred_check_branch
      %5456 = sbr.rel (%p5454) target = $region48
    $region47: #{cnn_conv_block.1} parent=5 // pred_region
      %s5457 = ssub.s32 %s11, 2
      // Predicated region
      $region49: #{cnn_conv_block.1} parent=47 // pred_check
        %p5458 = pneg %p150
      $region50: #{cnn_conv_block.1} parent=47 // pred_check_branch
        %5460 = sbr.rel (%p5458) target = $region52
      $region51: #{cnn_conv_block.1} parent=47 // pred_region
        %p5461 = scmp.lt.s32.totalorder %s17, 1
        %s5462 = scalar_select %p5461, %s17, 1
        %s5463 = smul.addr %s5462, 32
        %s5464 = smul.addr %s5463, 8
        %s5465 = scalar_lea.vmem %s5, %s5464
      $region52: #{cnn_conv_block.1} parent=47 // pred_fallthru
        _
    $region48: #{cnn_conv_block.1} parent=5 // pred_fallthru
      _
  $region6: #{cnn_conv_block.1} parent=0 // loop_footer
    %s15 = sadd.s32 1, %s11
  $region7: #{cnn_conv_block.1} parent=0 // loop_footer_branch
    %10 = sbr.rel target = $region3
  $region8: #{cnn_conv_block.1} parent=0 // loop_exit
    _

</llo_original>
